<compile_context>
chip_gen: v5e
topology: v5e:2x2
jax: 0.10.0
libtpu: 0.0.40
codegen_flags: <defaults>
</compile_context>

<pallas_src>
import math

import jax
import jax.numpy as jnp
from jax import lax
from jax.experimental import pallas as pl
from jax.experimental.pallas import tpu as pltpu


def _periodic_rbf_kernel(consts_ref, xa_ref, ya_ref, o_ref):
    # consts_ref: SMEM (4,) scalar-prefetch ->
    #   [2*pi/p, 1/l_p^2, -1/(2*l^2), log(sigma^2) - 1/l_p^2]
    # xa_ref : (Daug, TM) augmented X tile  rows = [-2*X ; x2 ; 1 ; 0-pad]
    # ya_ref : (Daug, TN) augmented Y tile  rows = [  Y  ; 1 ; y2 ; 0-pad]
    # o_ref  : (TM, TN) output Gram tile
    #
    # d2[i, j] = x2[i] + y2[j] - 2 * x_i . y_j  directly from the MXU.
    d2 = lax.dot_general(
        xa_ref[...], ya_ref[...],
        dimension_numbers=(((0,), (0,)), ((), ())),
        preferred_element_type=jnp.float32,
    )  # (TM, TN)
    # Clamp cancellation negatives from the MXU f32 path.
    d2 = jnp.maximum(d2, 0.0)

    two_c = consts_ref[0]      # 2*pi/p
    cos_coef = consts_ref[1]   # 1/l_p^2
    b = consts_ref[2]          # -1/(2*l^2)
    bias = consts_ref[3]       # log(sigma^2) - 1/l_p^2

    # sigma^2*exp(-2/l_p^2 * sin(pi*d2/p)^2)*exp(-d2/(2 l^2))
    #   == exp( (1/l_p^2)*cos(2*pi*d2/p) + b*d2 + bias )
    e = cos_coef * jnp.cos(two_c * d2) + b * d2 + bias
    o_ref[...] = jnp.exp(e).astype(o_ref.dtype)


def _pick_tile(n, max_tile):
    """Pad n up to a multiple of 128 and pick the largest tile (multiple of
    128, <= max_tile) that divides the padded extent."""
    n_pad = ((n + 127) // 128) * 128
    m = n_pad // 128
    t_max = max(1, min(max_tile // 128, m))
    for t in range(t_max, 0, -1):
        if m % t == 0:
            return n_pad, t * 128
    return n_pad, 128


def periodic_rbf_gram(params, X, Y=None, *, tm=1024, tn=1024,
                      out_dtype=jnp.float32):
    """Compute the periodic-RBF Gram matrix with a Pallas TPU kernel.

    params: (4,) float32  [sigma, l_p, p, l]
    X:      (D, Nx) float32, points as columns (matches the PyTorch X.T/cdist path)
    Y:      (D, Ny) float32 or None (defaults to X -> Gram of X with itself)
    returns (Nx, Ny) out_dtype Gram matrix
    """
    if Y is None:
        Y = X
    X = X.astype(jnp.float32)
    Y = Y.astype(jnp.float32)
    D, Nx = X.shape
    Dy, Ny = Y.shape
    assert D == Dy, "X and Y must share the feature dimension"

    # Tile selection + pad-to-tile (keeps lane-dense, unmasked stores).
    Nx_pad, tm = _pick_tile(Nx, tm)
    Ny_pad, tn = _pick_tile(Ny, tn)
    # v7x has 2 TensorCores: if the parallel grid collapsed to one step,
    # halve a 256-aligned tile axis so both cores get work.
    if (Nx_pad // tm) * (Ny_pad // tn) == 1:
        if tm % 256 == 0:
            tm //= 2
        elif tn % 256 == 0:
            tn //= 2

    if Nx_pad != Nx:
        X = jnp.pad(X, ((0, 0), (0, Nx_pad - Nx)))
    if Ny_pad != Ny:
        Y = jnp.pad(Y, ((0, 0), (0, Ny_pad - Ny)))

    sigma, l_p, p, l = params[0], params[1], params[2], params[3]
    # Derived scalar constants, computed once (no per-element divides in-kernel).
    # sigma == 0 gives log(0) = -inf; exp(-inf + finite) = 0, still correct.
    inv_lp2 = 1.0 / (l_p * l_p)
    consts = jnp.stack(
        [
            jnp.float32(2.0 * math.pi) / p,        # 2*pi/p
            inv_lp2,                               # cos coefficient
            -1.0 / (2.0 * l * l),                  # RBF coefficient
            jnp.log(sigma * sigma) - inv_lp2,      # fused bias
        ]
    ).astype(jnp.float32)

    # Augmented operands so d2 = x2 + y2 - 2 x.y comes straight off the MXU.
    x2 = jnp.sum(X * X, axis=0, keepdims=True)          # (1, Nx_pad)
    y2 = jnp.sum(Y * Y, axis=0, keepdims=True)          # (1, Ny_pad)
    ones_x = jnp.ones((1, Nx_pad), jnp.float32)
    ones_y = jnp.ones((1, Ny_pad), jnp.float32)
    Daug = D + 2
    Daug_pad = ((Daug + 7) // 8) * 8
    pad_rows = Daug_pad - Daug
    x_parts = [-2.0 * X, x2, ones_x]
    y_parts = [Y, ones_y, y2]
    if pad_rows:
        x_parts.append(jnp.zeros((pad_rows, Nx_pad), jnp.float32))
        y_parts.append(jnp.zeros((pad_rows, Ny_pad), jnp.float32))
    Xa = jnp.concatenate(x_parts, axis=0)                # (Daug_pad, Nx_pad)
    Ya = jnp.concatenate(y_parts, axis=0)                # (Daug_pad, Ny_pad)

    # TODO(synk): if D grows to hundreds+, add an "arbitrary" K grid axis with
    # a VMEM accumulator instead of loading the full (Daug, tile) blocks.
    grid = (Nx_pad // tm, Ny_pad // tn)
    grid_spec = pltpu.PrefetchScalarGridSpec(
        num_scalar_prefetch=1,
        grid=grid,
        in_specs=[
            pl.BlockSpec((Daug_pad, tm), lambda i, j, c: (0, i)),
            pl.BlockSpec((Daug_pad, tn), lambda i, j, c: (0, j)),
        ],
        out_specs=pl.BlockSpec((tm, tn), lambda i, j, c: (i, j)),
    )

    out = pl.pallas_call(
        _periodic_rbf_kernel,
        out_shape=jax.ShapeDtypeStruct((Nx_pad, Ny_pad), out_dtype),
        grid_spec=grid_spec,
        compiler_params=pltpu.CompilerParams(
            dimension_semantics=("parallel", "parallel"),
            # Raise above v5e's 16 MiB default; matches v6e/v7x defaults and is
            # well under v7x's 64 MiB physical at 1024x1024 tiles.
            vmem_limit_bytes=32 * 1024 * 1024,
        ),
    )(consts, Xa, Ya)

    if Nx_pad != Nx or Ny_pad != Ny:
        out = out[:Nx, :Ny]
    return out


def periodic_rbf_reference(params, X, Y=None):
    """Pure-JAX reference mirroring the PyTorch forward (exact f32 distances)."""
    if Y is None:
        Y = X
    Xp = X.T.astype(jnp.float32)  # (Nx, D)
    Yp = Y.T.astype(jnp.float32)  # (Ny, D)
    diff = Xp[:, None, :] - Yp[None, :, :]
    d2 = jnp.sum(diff * diff, axis=-1)
    sigma, l_p, p, l = params[0], params[1], params[2], params[3]
    ret1 = (sigma ** 2) * jnp.exp(
        -2.0 / (l_p ** 2) * jnp.sin(math.pi * d2 / p) ** 2
    )
    ret2 = jnp.exp(-(1.0 / (2.0 * l ** 2)) * d2)
    return ret1 * ret2


if __name__ == "__main__":
    key = jax.random.PRNGKey(0)
    kx, ky = jax.random.split(key)

    # Small, non-tile-divisible shapes to exercise pad-and-slice and the
    # megacore grid nudge.
    D, Nx, Ny = 8, 250, 200
    X = jax.random.normal(kx, (D, Nx), dtype=jnp.float32)  # points as columns
    Y = jax.random.normal(ky, (D, Ny), dtype=jnp.float32)

    # Deterministic parameters: [sigma, l_p (periodic lengthscale),
    #                            p (period), l (RBF lengthscale)]
    params = jnp.array([1.5, 2.0, 3.0, 0.7], dtype=jnp.float32)

    # Gram(X, Y)
    K_xy = jax.block_until_ready(periodic_rbf_gram(params, X, Y))
    ref_xy = periodic_rbf_reference(params, X, Y)

    # Gram(X, X) (Y=None path)
    K_xx = jax.block_until_ready(periodic_rbf_gram(params, X))
    ref_xx = periodic_rbf_reference(params, X)

    assert K_xy.shape == (Nx, Ny) and K_xy.dtype == jnp.float32
    assert K_xx.shape == (Nx, Nx) and K_xx.dtype == jnp.float32
    assert jnp.allclose(K_xy, ref_xy, atol=1e-3, rtol=1e-3)
    assert jnp.allclose(K_xx, ref_xx, atol=1e-3, rtol=1e-3)

    print("KERNEL_OK")
</pallas_src>

<mosaic_0001>
module attributes {stable_mosaic.version = 11 : i64} {
  func.func @_periodic_rbf_kernel(%arg0: i32, %arg1: i32, %arg2: memref<4xf32, #tpu.memory_space<smem>>, %arg3: memref<16x128xf32, #tpu.memory_space<vmem>>, %arg4: memref<16x256xf32, #tpu.memory_space<vmem>>, %arg5: memref<128x256xf32, #tpu.memory_space<vmem>>) attributes {dimension_semantics = [#tpu.dimension_semantics<parallel>, #tpu.dimension_semantics<parallel>], iteration_bounds = array<i64: 2, 1>, scalar_prefetch = 1 : i64, scratch_operands = 0 : i64, tpu.core_type = #tpu.core_type<tc>, window_params = [{transform_indices = @transform_0, window_bounds = array<i64: 16, 128>}, {transform_indices = @transform_1, window_bounds = array<i64: 16, 256>}, {transform_indices = @transform_2, window_bounds = array<i64: 128, 256>}]} {
    %c0 = arith.constant 0 : index
    %c0_0 = arith.constant 0 : index
    %0 = vector.load %arg3[%c0, %c0_0] : memref<16x128xf32, #tpu.memory_space<vmem>>, vector<16x128xf32>
    %c0_1 = arith.constant 0 : index
    %c0_2 = arith.constant 0 : index
    %1 = vector.load %arg4[%c0_1, %c0_2] : memref<16x256xf32, #tpu.memory_space<vmem>>, vector<16x256xf32>
    %cst = arith.constant dense<0.000000e+00> : vector<128x256xf32>
    %2 = tpu.matmul %0, %1, %cst {dimension_numbers = #tpu.dot_dimension_numbers<[0], [0], [1], [1], [0, 1, 1, 1], [], []>} : vector<16x128xf32>, vector<16x256xf32>, vector<128x256xf32> -> vector<128x256xf32>
    %cst_3 = arith.constant 0.000000e+00 : f32
    %3 = vector.broadcast %cst_3 : f32 to vector<128x256xf32>
    %4 = arith.maximumf %2, %3 : vector<128x256xf32>
    %c0_4 = arith.constant 0 : index
    %5 = memref.load %arg2[%c0_4] : memref<4xf32, #tpu.memory_space<smem>>
    %c1 = arith.constant 1 : index
    %6 = memref.load %arg2[%c1] : memref<4xf32, #tpu.memory_space<smem>>
    %c2 = arith.constant 2 : index
    %7 = memref.load %arg2[%c2] : memref<4xf32, #tpu.memory_space<smem>>
    %c3 = arith.constant 3 : index
    %8 = memref.load %arg2[%c3] : memref<4xf32, #tpu.memory_space<smem>>
    %9 = vector.broadcast %5 : f32 to vector<128x256xf32>
    %10 = arith.mulf %9, %4 : vector<128x256xf32>
    %11 = math.cos %10 : vector<128x256xf32>
    %12 = vector.broadcast %6 : f32 to vector<128x256xf32>
    %13 = arith.mulf %12, %11 : vector<128x256xf32>
    %14 = vector.broadcast %7 : f32 to vector<128x256xf32>
    %15 = arith.mulf %14, %4 : vector<128x256xf32>
    %16 = arith.addf %13, %15 : vector<128x256xf32>
    %17 = vector.broadcast %8 : f32 to vector<128x256xf32>
    %18 = arith.addf %16, %17 : vector<128x256xf32>
    %19 = math.exp %18 : vector<128x256xf32>
    %c0_5 = arith.constant 0 : index
    %c0_6 = arith.constant 0 : index
    %20 = vector.load %arg5[%c0_5, %c0_6] : memref<128x256xf32, #tpu.memory_space<vmem>>, vector<128x256xf32>
    tpu.vector_store %arg5[%c0_5, %c0_6], %19 {strides = array<i32>} : memref<128x256xf32, #tpu.memory_space<vmem>>, vector<128x256xf32>,
    return
  }
  func.func @transform_0(%arg0: i32, %arg1: i32, %arg2: memref<4xf32, #tpu.memory_space<smem>>) -> (i32, i32) {
    %c0_i32 = arith.constant 0 : i32
    %c0_i32_0 = arith.constant 0 : i32
    return %c0_i32, %arg0 : i32, i32
  }
  func.func @transform_1(%arg0: i32, %arg1: i32, %arg2: memref<4xf32, #tpu.memory_space<smem>>) -> (i32, i32) {
    %c0_i32 = arith.constant 0 : i32
    %c0_i32_0 = arith.constant 0 : i32
    return %c0_i32, %arg1 : i32, i32
  }
  func.func @transform_2(%arg0: i32, %arg1: i32, %arg2: memref<4xf32, #tpu.memory_space<smem>>) -> (i32, i32) {
    %c0_i32 = arith.constant 0 : i32
    return %arg0, %arg1 : i32, i32
  }
}

</mosaic_0001>

<llo_original>
// kernel: tpu_custom_call.1
$region0: #{tpu_custom_call.1}
  #allocation0 [shape = 'u32[]', space=smem, size = 0x4, offset = 0x4, fixed_abs, tag = 'smem constant byte address 0x4 - core index']
  #allocation1 [shape = 'u32[72,128]{1,0:T(1,128)}', space=vmem, size = 0x9000, scoped, tag = 'internal scratch']
  #allocation2 [shape = 's32[1]{0}', space=sflag, size = 0x4, scoped, tag = 'scoped memory for tpu_custom_call.1']
  #allocation3 [shape = 'u8[512]{0}', space=smem, size = 0x200, scoped, tag = 'prefetched SMEM operand 0']
  %s0 = inlined_call_operand.hbm [shape: f32[4], index: 0, kind: input, shape index: {}]
  %s1 = inlined_call_operand.hbm [shape: f32[16,256], index: 1, kind: input, shape index: {}]
  %s2 = inlined_call_operand.hbm [shape: f32[16,256], index: 2, kind: input, shape index: {}]
  %s3 = inlined_call_operand.hbm [shape: f32[256,256], index: 3, kind: output, shape index: {}]
  %s4 = sld [smem:[#allocation0]]
  $region49: #{tpu_custom_call.1} parent=0
    _
  %s6 = ssub.s32 1, %s4
  %s7 = scalar_select 0, %s6, %s4
  %s9 = sshll.u32 %s0, 4
  %s10 = int_to_ptr.hbm [resolvable:$true] %s9
  %12 = dma.hbm_to_smem %s10, 16, [#allocation3], [#allocation2]
  %14 = dma.done [#allocation2], 16
  %15 = sfence
  $region1: #{tpu_custom_call.1} parent=0
    #allocation4 [shape = 'u8[16384]{0}', space=vmem, size = 0x4000, scoped, tag = 'input window, operand 1']
    #allocation5 [shape = 's32[2]{0}', space=sflag, size = 0x8, scoped, tag = 'scoped memory for tpu_custom_call.1']
    #allocation6 [shape = 's32[2]{0}', space=sflag, size = 0x8, scoped, tag = 'scoped memory for tpu_custom_call.1']
    #allocation7 [shape = 'u8[16384]{0}', space=vmem, size = 0x4000, scoped, tag = 'input window, operand 2, single buffered']
    #allocation8 [shape = 's32[1]{0}', space=sflag, size = 0x4, scoped, tag = 'scoped memory for tpu_custom_call.1']
    #allocation9 [shape = 'u8[262144]{0}', space=vmem, size = 0x40000, scoped, tag = 'output window, operand 0']
    %16 = vsyncpa [#allocation5], 0
    %s17 = scalar_lea.sflag [#allocation5], 1
    %18 = vsyncpa %s17, 0
    %19 = vsyncpa [#allocation8], 0
    %20 = vsyncpa [#allocation6], 0
    %s21 = scalar_lea.sflag [#allocation6], 1
    %22 = vsyncpa %s21, 0
    loop: start=0, step=1, limit=4
    $region2: #{tpu_custom_call.1} parent=1 // loop_pre_header
      _
    $region3: #{tpu_custom_call.1} parent=1 // loop_header
      %s24 = sphi 0, %s28
      %p25 = scmp.ge.s32.totalorder %s24, 4
      %s31 = sphi 0, %s43
      %s32 = sphi 0, %s39
      %s33 = sphi 0, %s31
      %s34 = sphi 0, %s32
      %s35 = sphi 0, %s33
      %s36 = sphi 0, %s34
      %s46 = sphi 0, %s48
      %s49 = sphi 0, %s46
      %s50 = sphi 0, %s49
      %s66 = sphi 0, %s50
      %s72 = sphi 0, %s74
      %s75 = sphi 0, %s72
      %s76 = sphi 0, %s75
      %s92 = sphi 0, %s76
      %s100 = sphi 0, %s102
      %s103 = sphi 0, %s100
      %s104 = sphi 0, %s103
      %s120 = sphi 0, %s104
    $region4: #{tpu_custom_call.1} parent=1 // loop_header_branch
      %27 = sbr.rel (%p25) target = $region8
    $region5: #{tpu_custom_call.1} parent=1 // loop_body
      %s29 = ssub.s32 %s24, 1
      %s30 = ssub.s32 %s24, 2
      %s37 = sadd.s32 1, %s32
      %p38 = scmp.ge.s32.totalorder %s37, 1
      %s39 = scalar_select %p38, 0, %s37
      %s40 = sadd.s32 1, %s31
      %s41 = scalar_select %p38, %s40, %s31
      %p42 = scmp.ge.s32.totalorder %s41, 2
      %s43 = scalar_select %p42, 0, %s41
      %s44 = ssub.s32 %s31, %s43
      %p45 = scmp.eq.s32.totalorder %s44, 0
      %s47 = sadd.s32 %s46, 1
      %s48 = scalar_select %p45, %s46, %s47
      %p51 = pneg %p45
      %p52 = scmp.eq.s32.totalorder %s24, 1
      %p53 = por %p51, %p52
      %p54 = scmp.ne.s32.totalorder %s46, %s49
      %p55 = scmp.eq.s32.totalorder %s24, 0
      %p56 = por %p54, %p55
      %p57 = scmp.ne.s32.totalorder %s46, %s49
      %p58 = scmp.eq.s32.totalorder %s29, 1
      %p59 = por %p57, %p58
      %p60 = scmp.ne.s32.totalorder %s49, %s50
      %p61 = scmp.eq.s32.totalorder %s29, 0
      %p62 = por %p60, %p61
      %p63 = scmp.ne.s32.totalorder %s49, %s50
      %p64 = scmp.eq.s32.totalorder %s30, 1
      %p65 = por %p63, %p64
      %p67 = scmp.ne.s32.totalorder %s50, %s66
      %p68 = scmp.eq.s32.totalorder %s30, 0
      %p69 = por %p67, %p68
      %s70 = ssub.s32 %s32, %s39
      %p71 = scmp.eq.s32.totalorder %s70, 0
      %s73 = sadd.s32 %s72, 1
      %s74 = scalar_select %p71, %s72, %s73
      %p77 = pneg %p71
      %p78 = scmp.eq.s32.totalorder %s24, 1
      %p79 = por %p77, %p78
      %p80 = scmp.ne.s32.totalorder %s72, %s75
      %p81 = scmp.eq.s32.totalorder %s24, 0
      %p82 = por %p80, %p81
      %p83 = scmp.ne.s32.totalorder %s72, %s75
      %p84 = scmp.eq.s32.totalorder %s29, 1
      %p85 = por %p83, %p84
      %p86 = scmp.ne.s32.totalorder %s75, %s76
      %p87 = scmp.eq.s32.totalorder %s29, 0
      %p88 = por %p86, %p87
      %p89 = scmp.ne.s32.totalorder %s75, %s76
      %p90 = scmp.eq.s32.totalorder %s30, 1
      %p91 = por %p89, %p90
      %p93 = scmp.ne.s32.totalorder %s76, %s92
      %p94 = scmp.eq.s32.totalorder %s30, 0
      %p95 = por %p93, %p94
      %s96 = ssub.s32 %s31, %s43
      %s97 = ssub.s32 %s32, %s39
      %s98 = sor.u32 %s96, %s97
      %p99 = scmp.eq.s32.totalorder %s98, 0
      %s101 = sadd.s32 %s100, 1
      %s102 = scalar_select %p99, %s100, %s101
      %p105 = pneg %p99
      %p106 = scmp.eq.s32.totalorder %s24, 1
      %p107 = por %p105, %p106
      %p108 = scmp.ne.s32.totalorder %s100, %s103
      %p109 = scmp.eq.s32.totalorder %s24, 0
      %p110 = por %p108, %p109
      %p111 = scmp.ne.s32.totalorder %s100, %s103
      %p112 = scmp.eq.s32.totalorder %s29, 1
      %p113 = por %p111, %p112
      %p114 = scmp.ne.s32.totalorder %s103, %s104
      %p115 = scmp.eq.s32.totalorder %s29, 0
      %p116 = por %p114, %p115
      %p117 = scmp.ne.s32.totalorder %s103, %s104
      %p118 = scmp.eq.s32.totalorder %s30, 1
      %p119 = por %p117, %p118
      %p121 = scmp.ne.s32.totalorder %s104, %s120
      %p122 = scmp.eq.s32.totalorder %s30, 0
      %p123 = por %p121, %p122
      %p124 = scmp.le.s32.totalorder 1, %s24
      %p125 = scmp.lt.s32.totalorder %s24, 3
      %p126 = pnand %p124, %p125
      %p127 = pneg %p126
      // Predicated region
      $region9: #{tpu_custom_call.1} parent=5 // pred_check
        _
      $region10: #{tpu_custom_call.1} parent=5 // pred_check_branch
        %129 = sbr.rel (%p126) target = $region12
      $region11: #{tpu_custom_call.1} parent=5 // pred_region
        %s130 = ssub.s32 %s24, 1
        // Predicated region
        $region13: #{tpu_custom_call.1} parent=11 // pred_check
          %p131 = pneg %p88
        $region14: #{tpu_custom_call.1} parent=11 // pred_check_branch
          %133 = sbr.rel (%p131) target = $region16
        $region15: #{tpu_custom_call.1} parent=11 // pred_region
          %s134 = smul.u32 2, %s34
          %136 = vsyncadd [#allocation8], 0
          %s137 = smul.addr %s134, 8
          %s138 = scalar_lea.hbm %s2, %s137
          %s139 = sshll.u32 %s138, 4
          %s140 = int_to_ptr.hbm [resolvable:$true] %s139
          %s141 = sshll.u32 [#allocation7], 4
          %s142 = int_to_ptr.vmem [resolvable:$true] %s141
          %147 = dma.hbm_to_vmem [thread:$0]  %s140, 512, %s142, [#allocation8], 256, 256, 16
        $region16: #{tpu_custom_call.1} parent=11 // pred_fallthru
          _
      $region12: #{tpu_custom_call.1} parent=5 // pred_fallthru
        _
      %p148 = scmp.lt.s32.totalorder %s24, 2
      // Predicated region
      $region17: #{tpu_custom_call.1} parent=5 // pred_check
        %p149 = pneg %p148
      $region18: #{tpu_custom_call.1} parent=5 // pred_check_branch
        %151 = sbr.rel (%p149) target = $region20
      $region19: #{tpu_custom_call.1} parent=5 // pred_region
        // Predicated region
        $region21: #{tpu_custom_call.1} parent=19 // pred_check
          %p152 = pneg %p56
        $region22: #{tpu_custom_call.1} parent=19 // pred_check_branch
          %154 = sbr.rel (%p152) target = $region24
        $region23: #{tpu_custom_call.1} parent=19 // pred_region
          %s155 = sand.u32 %s46, 1
          %s156 = scalar_lea.sflag [#allocation5], %s155
          %s157 = sand.u32 %s46, 1
          %s158 = smul.addr %s157, 16
          %s159 = scalar_lea.vmem [#allocation4], %s158
          %161 = vsyncadd %s156, 0
          %s162 = smul.addr %s31, 8
          %s163 = scalar_lea.hbm %s1, %s162
          %s164 = sshll.u32 %s163, 4
          %s165 = int_to_ptr.hbm [resolvable:$true] %s164
          %s166 = sshll.u32 %s159, 4
          %s167 = int_to_ptr.vmem [resolvable:$true] %s166
          %172 = dma.hbm_to_vmem [thread:$0]  %s165, 256, %s167, %s156, 256, 128, 8
        $region24: #{tpu_custom_call.1} parent=19 // pred_fallthru
          _
      $region20: #{tpu_custom_call.1} parent=5 // pred_fallthru
        _
      %p173 = scmp.le.s32.totalorder 1, %s24
      %p174 = scmp.lt.s32.totalorder %s24, 3
      %p175 = pnand %p173, %p174
      %p176 = pneg %p175
      // Predicated region
      $region25: #{tpu_custom_call.1} parent=5 // pred_check
        _
      $region26: #{tpu_custom_call.1} parent=5 // pred_check_branch
        %178 = sbr.rel (%p175) target = $region28
      $region27: #{tpu_custom_call.1} parent=5 // pred_region
        %s179 = ssub.s32 %s24, 1
        %s180 = sand.u32 %s49, 1
        %s181 = scalar_lea.sflag [#allocation5], %s180
        %s182 = sand.u32 %s49, 1
        %s183 = smul.addr %s182, 16
        %s184 = scalar_lea.vmem [#allocation4], %s183
        // Predicated region
        $region29: #{tpu_custom_call.1} parent=27 // pred_check
          %p185 = pneg %p62
        $region30: #{tpu_custom_call.1} parent=27 // pred_check_branch
          %187 = sbr.rel (%p185) target = $region32
        $region31: #{tpu_custom_call.1} parent=27 // pred_region
          %189 = dma.done %s181, 256
        $region32: #{tpu_custom_call.1} parent=27 // pred_fallthru
          _
        // Predicated region
        $region33: #{tpu_custom_call.1} parent=27 // pred_check
          %p190 = pneg %p88
        $region34: #{tpu_custom_call.1} parent=27 // pred_check_branch
          %192 = sbr.rel (%p190) target = $region36
        $region35: #{tpu_custom_call.1} parent=27 // pred_region
          %194 = dma.done [#allocation8], 512
        $region36: #{tpu_custom_call.1} parent=27 // pred_fallthru
          _
        %s195 = sand.u32 %s49, 1
        %s196 = scalar_lea.sflag [#allocation5], %s195
        %s197 = sand.u32 %s49, 1
        %s198 = smul.addr %s197, 16
        %s199 = scalar_lea.vmem [#allocation4], %s198
        %p200 = pneg %p62
        %p201 = pneg %p59
        %p202 = pneg %p88
        %p203 = pneg %p85
        %p204 = pneg %p116
        %p205 = pneg %p113
        %s206 = sand.u32 %s103, 1
        %s207 = scalar_lea.sflag [#allocation6], %s206
        %s208 = sand.u32 %s103, 1
        %s209 = smul.addr %s208, 256
        %s210 = scalar_lea.vmem [#allocation9], %s209
        %s211 = smul.u32 2, %s34
        %s212 = smul.u32 16, %s33
        %s213 = smul.u32 2, %s34
        %v214 = vld [vmem:[%s184] sm:$0xff]
        %v215 = vld [vmem:[%s184 + $0x8] sm:$0xff]
        %v216 = vld [vmem:[#allocation7] sm:$0xff]
        %v217 = vld [vmem:[#allocation7 + $0x8] sm:$0xff]
        %v218 = vld [vmem:[#allocation7 + $0x10] sm:$0xff]
        %v219 = vld [vmem:[#allocation7 + $0x18] sm:$0xff]
        %220 = vxpose.xlu0.b32.start [1/16] %v214, 128
        %221 = vxpose.xlu0.b32.cont [2/16] %v215, 128
        %222 = vxpose.xlu0.b32.cont [3/16] 0.0, 128
        %223 = vxpose.xlu0.b32.cont [4/16] 0.0, 128
        %224 = vxpose.xlu0.b32.cont [5/16] 0.0, 128
        %225 = vxpose.xlu0.b32.cont [6/16] 0.0, 128
        %226 = vxpose.xlu0.b32.cont [7/16] 0.0, 128
        %227 = vxpose.xlu0.b32.cont [8/16] 0.0, 128
        %228 = vxpose.xlu0.b32.cont [9/16] 0.0, 128
        %229 = vxpose.xlu0.b32.cont [10/16] 0.0, 128
        %230 = vxpose.xlu0.b32.cont [11/16] 0.0, 128
        %231 = vxpose.xlu0.b32.cont [12/16] 0.0, 128
        %232 = vxpose.xlu0.b32.cont [13/16] 0.0, 128
        %233 = vxpose.xlu0.b32.cont [14/16] 0.0, 128
        %234 = vxpose.xlu0.b32.cont [15/16] 0.0, 128
        %235 = vxpose.xlu0.b32.end [16/16] 0.0, 128
        %v236 = vpop.trf.xlu0
        %v237 = vpop.trf.xlu0
        %v238 = vpop.trf.xlu0
        %v239 = vpop.trf.xlu0
        %v240 = vpop.trf.xlu0
        %v241 = vpop.trf.xlu0
        %v242 = vpop.trf.xlu0
        %v243 = vpop.trf.xlu0
        %v244 = vpop.trf.xlu0
        %v245 = vpop.trf.xlu0
        %v246 = vpop.trf.xlu0
        %v247 = vpop.trf.xlu0
        %v248 = vpop.trf.xlu0
        %v249 = vpop.trf.xlu0
        %v250 = vpop.trf.xlu0
        %v251 = vpop.trf.xlu0
        %vm252 = vcmask 130048
        %v254 = vsel %vm252, %v236, 0
        %v257 = vsel %vm252, %v237, 0
        %v260 = vsel %vm252, %v238, 0
        %v263 = vsel %vm252, %v239, 0
        %v266 = vsel %vm252, %v240, 0
        %v269 = vsel %vm252, %v241, 0
        %v272 = vsel %vm252, %v242, 0
        %v275 = vsel %vm252, %v243, 0
        %v278 = vsel %vm252, %v244, 0
        %v281 = vsel %vm252, %v245, 0
        %v284 = vsel %vm252, %v246, 0
        %v287 = vsel %vm252, %v247, 0
        %v290 = vsel %vm252, %v248, 0
        %v293 = vsel %vm252, %v249, 0
        %v296 = vsel %vm252, %v250, 0
        %v299 = vsel %vm252, %v251, 0
        %301 = vmatpush.msra.mxu0 0.0
        %302 = vmatpush.msra.mxu0 0.0
        %303 = vmatpush.msra.mxu0 0.0
        %304 = vmatpush.msra.mxu0 0.0
        %305 = vmatpush.msra.mxu0 0.0
        %306 = vmatpush.msra.mxu0 0.0
        %307 = vmatpush.msra.mxu0 0.0
        %308 = vmatpush.msra.mxu0 0.0
        %309 = vmatpush.msra.mxu0 0.0
        %310 = vmatpush.msra.mxu0 0.0
        %311 = vmatpush.msra.mxu0 0.0
        %312 = vmatpush.msra.mxu0 0.0
        %313 = vmatpush.msra.mxu0 0.0
        %314 = vmatpush.msra.mxu0 0.0
        %315 = vmatpush.msra.mxu0 %v218
        %316 = vmatpush.msra.mxu0 %v216
        %317 = vmatmul.f32.gmra.mxu0 %v254
        %v318 = vpop.f32.mrf.mxu0
        %v319 = vadd.f32 0.0, %v318
        %320 = vmatmul.f32.gmra.mxu0 %v257
        %v321 = vpop.f32.mrf.mxu0
        %v322 = vadd.f32 0.0, %v321
        %323 = vmatmul.f32.gmra.mxu0 %v260
        %v324 = vpop.f32.mrf.mxu0
        %v325 = vadd.f32 0.0, %v324
        %326 = vmatmul.f32.gmra.mxu0 %v263
        %v327 = vpop.f32.mrf.mxu0
        %v328 = vadd.f32 0.0, %v327
        %329 = vmatmul.f32.gmra.mxu0 %v266
        %v330 = vpop.f32.mrf.mxu0
        %v331 = vadd.f32 0.0, %v330
        %332 = vmatmul.f32.gmra.mxu0 %v269
        %v333 = vpop.f32.mrf.mxu0
        %v334 = vadd.f32 0.0, %v333
        %335 = vmatmul.f32.gmra.mxu0 %v272
        %v336 = vpop.f32.mrf.mxu0
        %v337 = vadd.f32 0.0, %v336
        %338 = vmatmul.f32.gmra.mxu0 %v275
        %v339 = vpop.f32.mrf.mxu0
        %v340 = vadd.f32 0.0, %v339
        %341 = vmatmul.f32.gmra.mxu0 %v278
        %v342 = vpop.f32.mrf.mxu0
        %v343 = vadd.f32 0.0, %v342
        %344 = vmatmul.f32.gmra.mxu0 %v281
        %v345 = vpop.f32.mrf.mxu0
        %v346 = vadd.f32 0.0, %v345
        %347 = vmatmul.f32.gmra.mxu0 %v284
        %v348 = vpop.f32.mrf.mxu0
        %v349 = vadd.f32 0.0, %v348
        %350 = vmatmul.f32.gmra.mxu0 %v287
        %v351 = vpop.f32.mrf.mxu0
        %v352 = vadd.f32 0.0, %v351
        %353 = vmatmul.f32.gmra.mxu0 %v290
        %v354 = vpop.f32.mrf.mxu0
        %v355 = vadd.f32 0.0, %v354
        %356 = vmatmul.f32.gmra.mxu0 %v293
        %v357 = vpop.f32.mrf.mxu0
        %v358 = vadd.f32 0.0, %v357
        %359 = vmatmul.f32.gmra.mxu0 %v296
        %v360 = vpop.f32.mrf.mxu0
        %v361 = vadd.f32 0.0, %v360
        %362 = vmatmul.f32.gmra.mxu0 %v299
        %v363 = vpop.f32.mrf.mxu0
        %v364 = vadd.f32 0.0, %v363
        %365 = vdwg.mxu0
        %366 = vmatpush.msra.mxu0 0.0
        %367 = vmatpush.msra.mxu0 0.0
        %368 = vmatpush.msra.mxu0 0.0
        %369 = vmatpush.msra.mxu0 0.0
        %370 = vmatpush.msra.mxu0 0.0
        %371 = vmatpush.msra.mxu0 0.0
        %372 = vmatpush.msra.mxu0 0.0
        %373 = vmatpush.msra.mxu0 0.0
        %374 = vmatpush.msra.mxu0 0.0
        %375 = vmatpush.msra.mxu0 0.0
        %376 = vmatpush.msra.mxu0 0.0
        %377 = vmatpush.msra.mxu0 0.0
        %378 = vmatpush.msra.mxu0 0.0
        %379 = vmatpush.msra.mxu0 0.0
        %380 = vmatpush.msra.mxu0 %v219
        %381 = vmatpush.msra.mxu0 %v217
        %382 = vmatmul.f32.gmra.mxu0 %v254
        %v383 = vpop.f32.mrf.mxu0
        %v384 = vadd.f32 0.0, %v383
        %385 = vmatmul.f32.gmra.mxu0 %v257
        %v386 = vpop.f32.mrf.mxu0
        %v387 = vadd.f32 0.0, %v386
        %388 = vmatmul.f32.gmra.mxu0 %v260
        %v389 = vpop.f32.mrf.mxu0
        %v390 = vadd.f32 0.0, %v389
        %391 = vmatmul.f32.gmra.mxu0 %v263
        %v392 = vpop.f32.mrf.mxu0
        %v393 = vadd.f32 0.0, %v392
        %394 = vmatmul.f32.gmra.mxu0 %v266
        %v395 = vpop.f32.mrf.mxu0
        %v396 = vadd.f32 0.0, %v395
        %397 = vmatmul.f32.gmra.mxu0 %v269
        %v398 = vpop.f32.mrf.mxu0
        %v399 = vadd.f32 0.0, %v398
        %400 = vmatmul.f32.gmra.mxu0 %v272
        %v401 = vpop.f32.mrf.mxu0
        %v402 = vadd.f32 0.0, %v401
        %403 = vmatmul.f32.gmra.mxu0 %v275
        %v404 = vpop.f32.mrf.mxu0
        %v405 = vadd.f32 0.0, %v404
        %406 = vmatmul.f32.gmra.mxu0 %v278
        %v407 = vpop.f32.mrf.mxu0
        %v408 = vadd.f32 0.0, %v407
        %409 = vmatmul.f32.gmra.mxu0 %v281
        %v410 = vpop.f32.mrf.mxu0
        %v411 = vadd.f32 0.0, %v410
        %412 = vmatmul.f32.gmra.mxu0 %v284
        %v413 = vpop.f32.mrf.mxu0
        %v414 = vadd.f32 0.0, %v413
        %415 = vmatmul.f32.gmra.mxu0 %v287
        %v416 = vpop.f32.mrf.mxu0
        %v417 = vadd.f32 0.0, %v416
        %418 = vmatmul.f32.gmra.mxu0 %v290
        %v419 = vpop.f32.mrf.mxu0
        %v420 = vadd.f32 0.0, %v419
        %421 = vmatmul.f32.gmra.mxu0 %v293
        %v422 = vpop.f32.mrf.mxu0
        %v423 = vadd.f32 0.0, %v422
        %424 = vmatmul.f32.gmra.mxu0 %v296
        %v425 = vpop.f32.mrf.mxu0
        %v426 = vadd.f32 0.0, %v425
        %427 = vmatmul.f32.gmra.mxu0 %v299
        %v428 = vpop.f32.mrf.mxu0
        %v429 = vadd.f32 0.0, %v428
        %430 = vdwg.mxu0
        %v431 = vmax.f32 %v319, 0.0
        %v432 = vmax.f32 %v384, 0.0
        %v433 = vmax.f32 %v322, 0.0
        %v434 = vmax.f32 %v387, 0.0
        %v435 = vmax.f32 %v325, 0.0
        %v436 = vmax.f32 %v390, 0.0
        %v437 = vmax.f32 %v328, 0.0
        %v438 = vmax.f32 %v393, 0.0
        %v439 = vmax.f32 %v331, 0.0
        %v440 = vmax.f32 %v396, 0.0
        %v441 = vmax.f32 %v334, 0.0
        %v442 = vmax.f32 %v399, 0.0
        %v443 = vmax.f32 %v337, 0.0
        %v444 = vmax.f32 %v402, 0.0
        %v445 = vmax.f32 %v340, 0.0
        %v446 = vmax.f32 %v405, 0.0
        %v447 = vmax.f32 %v343, 0.0
        %v448 = vmax.f32 %v408, 0.0
        %v449 = vmax.f32 %v346, 0.0
        %v450 = vmax.f32 %v411, 0.0
        %v451 = vmax.f32 %v349, 0.0
        %v452 = vmax.f32 %v414, 0.0
        %v453 = vmax.f32 %v352, 0.0
        %v454 = vmax.f32 %v417, 0.0
        %v455 = vmax.f32 %v355, 0.0
        %v456 = vmax.f32 %v420, 0.0
        %v457 = vmax.f32 %v358, 0.0
        %v458 = vmax.f32 %v423, 0.0
        %v459 = vmax.f32 %v361, 0.0
        %v460 = vmax.f32 %v426, 0.0
        %v461 = vmax.f32 %v364, 0.0
        %v462 = vmax.f32 %v429, 0.0
        %s463 = sld [smem:[#allocation3]]
        %s464 = sld [smem:[#allocation3 + $0x1]]
        %s465 = sld [smem:[#allocation3 + $0x2]]
        %s466 = sld [smem:[#allocation3 + $0x3]]
        %v467 = vstv %s463
        %v468 = vmul.f32 %v467, %v431
        %v469 = vmul.f32 %v467, %v432
        %v470 = vmul.f32 %v467, %v433
        %v471 = vmul.f32 %v467, %v434
        %v472 = vmul.f32 %v467, %v435
        %v473 = vmul.f32 %v467, %v436
        %v474 = vmul.f32 %v467, %v437
        %v475 = vmul.f32 %v467, %v438
        %v476 = vmul.f32 %v467, %v439
        %v477 = vmul.f32 %v467, %v440
        %v478 = vmul.f32 %v467, %v441
        %v479 = vmul.f32 %v467, %v442
        %v480 = vmul.f32 %v467, %v443
        %v481 = vmul.f32 %v467, %v444
        %v482 = vmul.f32 %v467, %v445
        %v483 = vmul.f32 %v467, %v446
        %v484 = vmul.f32 %v467, %v447
        %v485 = vmul.f32 %v467, %v448
        %v486 = vmul.f32 %v467, %v449
        %v487 = vmul.f32 %v467, %v450
        %v488 = vmul.f32 %v467, %v451
        %v489 = vmul.f32 %v467, %v452
        %v490 = vmul.f32 %v467, %v453
        %v491 = vmul.f32 %v467, %v454
        %v492 = vmul.f32 %v467, %v455
        %v493 = vmul.f32 %v467, %v456
        %v494 = vmul.f32 %v467, %v457
        %v495 = vmul.f32 %v467, %v458
        %v496 = vmul.f32 %v467, %v459
        %v497 = vmul.f32 %v467, %v460
        %v498 = vmul.f32 %v467, %v461
        %v499 = vmul.f32 %v467, %v462
        %v500 = vand.u32 2147483647, %v468
        %vm501 = vcmp.le.f32.partialorder %v500, 0.7853982
        %vm502 = vcmp.lt.s32.totalorder %v468, 0
        %v503 = vand.u32 %v468, 2139095040
        %v504 = vshrl.u32 %v503, 23
        %v505 = vsub.s32 %v504, 127
        %v506 = vand.u32 2147483647, %v468
        %v507 = vand.u32 %v506, 8388607
        %v508 = vor.u32 %v507, 8388608
        %v509 = vsub.s32 0, %v508
        %v510 = vadd.s32 %v505, 1
        %vm511 = vcmp.gt.s32.totalorder %v510, 0
        %v512 = vsel %vm511, %v510, 0
        %v513 = vshrl.u32 %v512, 5
        %v514 = vand.u32 %v512, 31
        %v515 = vsub.s32 32, %v514
        %v516 = vshrl.u32 683565275, %v515
        %v517 = vshll.u32 683565275, %v514
        %v518 = vshrl.u32 2475754826, %v515
        %v519 = vor.u32 %v517, %v518
        %v520 = vshll.u32 2475754826, %v514
        %v521 = vshrl.u32 2131351028, %v515
        %v522 = vor.u32 %v520, %v521
        %v523 = vshll.u32 2131351028, %v514
        %v524 = vshrl.u32 2102212464, %v515
        %v525 = vor.u32 %v523, %v524
        %v526 = vshll.u32 2102212464, %v514
        %v527 = vshrl.u32 920167782, %v515
        %v528 = vor.u32 %v526, %v527
        %v529 = vshll.u32 920167782, %v514
        %v530 = vshrl.u32 1326507024, %v515
        %v531 = vor.u32 %v529, %v530
        %vm532 = vcmp.lt.s32.totalorder %v513, 1
        %vm533 = vcmp.lt.s32.totalorder %v513, 2
        %vm534 = vcmp.lt.s32.totalorder %v513, 3
        %vm535 = vcmp.lt.s32.totalorder %v513, 4
        %v536 = vsel %vm532, %v516, %v519
        %v537 = vsel %vm535, %v525, 2102212464
        %v538 = vsel %vm534, %v522, %v537
        %v539 = vsel %vm533, %v536, %v538
        %v540 = vsel %vm532, %v519, %v522
        %v541 = vsel %vm535, %v528, 920167782
        %v542 = vsel %vm534, %v525, %v541
        %v543 = vsel %vm533, %v540, %v542
        %v544 = vsel %vm532, %v522, %v525
        %v545 = vsel %vm535, %v531, 1326507024
        %v546 = vsel %vm534, %v528, %v545
        %v547 = vsel %vm533, %v544, %v546
        %v548 = vshll.u32 %v508, 8
        %v549 = vand.u32 %v548, 65535
        %v550 = vshrl.u32 %v548, 16
        %v551 = vand.u32 %v547, 65535
        %v552 = vshrl.u32 %v547, 16
        %v553 = vmul.u32 %v549, %v551
        %v554 = vmul.u32 %v549, %v552
        %v555 = vmul.u32 %v550, %v551
        %v556 = vmul.u32 %v550, %v552
        %v557 = vshll.u32 %v554, 16
        %v558 = vshrl.u32 %v554, 16
        %v559 = vshll.u32 %v555, 16
        %v560 = vshrl.u32 %v555, 16
        %vm561 = vc.u32 %v553, %v557
        %v562 = vsel %vm561, 1, 0
        %v563 = vadd.s32 %v553, %v557
        %v564 = vadd.s32 %v556, %v562
        %vm565 = vc.u32 %v563, %v559
        %v566 = vsel %vm565, 1, 0
        %v567 = vadd.s32 %v563, %v559
        %v568 = vadd.s32 %v564, %v566
        %v569 = vadd.s32 %v568, %v558
        %v570 = vadd.s32 %v569, %v560
        %v571 = vand.u32 %v548, 65535
        %v572 = vshrl.u32 %v548, 16
        %v573 = vand.u32 %v543, 65535
        %v574 = vshrl.u32 %v543, 16
        %v575 = vmul.u32 %v571, %v573
        %v576 = vmul.u32 %v571, %v574
        %v577 = vmul.u32 %v572, %v573
        %v578 = vmul.u32 %v572, %v574
        %v579 = vshll.u32 %v576, 16
        %v580 = vshrl.u32 %v576, 16
        %v581 = vshll.u32 %v577, 16
        %v582 = vshrl.u32 %v577, 16
        %vm583 = vc.u32 %v575, %v579
        %v584 = vsel %vm583, 1, 0
        %v585 = vadd.s32 %v575, %v579
        %v586 = vadd.s32 %v578, %v584
        %vm587 = vc.u32 %v585, %v581
        %v588 = vsel %vm587, 1, 0
        %v589 = vadd.s32 %v585, %v581
        %v590 = vadd.s32 %v586, %v588
        %v591 = vadd.s32 %v590, %v580
        %v592 = vadd.s32 %v591, %v582
        %v593 = vmul.u32 %v548, %v539
        %v594 = vadd.s32 %v570, %v589
        %vm595 = vc.u32 %v570, %v589
        %v596 = vadd.s32 %v592, 1
        %v597 = vsel %vm595, %v596, %v592
        %v598 = vadd.s32 %v593, %v597
        %v599 = vadd.s32 %v598, 536870912
        %v600 = vshrl.u32 %v599, 30
        %v601 = vshll.u32 %v600, 30
        %v602 = vsub.s32 %v598, %v601
        %vm603 = vcmp.lt.s32.totalorder %v602, 0
        %v604 = vsub.s32 0, %v602
        %v605 = vsel %vm603, %v604, %v602
        %v606 = vclz %v605
        %v607 = vsub.s32 %v606, 2
        %vm608 = vcmp.gt.s32.totalorder 0, %v607
        %v609 = vsel %vm608, 0, %v607
        %v610 = vsub.s32 32, %v609
        %v611 = vshll.u32 %v602, %v609
        %v612 = vshrl.u32 %v594, %v610
        %v613 = vor.u32 %v611, %v612
        %v614 = vsub.s32 4294967266, %v609
        %v615 = vadd.s32 %v614, 127
        %v616 = vshll.u32 %v615, 23
        %v617 = vor.u32 4788187, %v616
        %v618 = vand.u32 2147483647, %v617
        %v620 = vcvt.s32.f32 %v613
        %v621 = vmul.f32 %v620, %v618
        %v622 = vxor.u32 %v621, 2147483648
        %v623 = vsel %vm502, %v622, %v621
        %v624 = vsub.s32 4, %v600
        %v625 = vsel %vm502, %v624, %v600
        %v626 = vsel %vm501, %v468, %v623
        %v627 = vsel %vm501, 0, %v625
        %v628 = vmul.f32 %v626, %v626
        %v629 = vmul.f32 %v628, -0.001358992
        %v630 = vadd.f32 %v629, 0.041655596
        %v631 = vmul.f32 %v628, %v630
        %v632 = vadd.f32 %v631, -0.4999988
        %v633 = vmul.f32 %v628, %v632
        %v634 = vadd.f32 1.0, %v633
        %v635 = vmul.f32 %v626, %v626
        %v636 = vmul.f32 %v635, -0.00019511016
        %v637 = vadd.f32 %v636, 0.008332121
        %v638 = vmul.f32 %v635, %v637
        %v639 = vadd.f32 %v638, -0.16666654
        %v640 = vmul.f32 %v635, %v639
        %v641 = vadd.f32 %v640, 1.0
        %v642 = vmul.f32 %v641, %v626
        %vm643 = vweird.f32 %v468
        %v644 = vand.u32 %v627, 3
        %vm645 = vcmp.lt.s32.totalorder %v644, 2
        %vm646 = vcmp.eq.s32.totalorder %v644, 0
        %v647 = vxor.u32 %v642, 2147483648
        %v648 = vsel %vm646, %v634, %v647
        %vm649 = vcmp.eq.s32.totalorder %v644, 2
        %v650 = vxor.u32 %v634, 2147483648
        %v651 = vsel %vm649, %v650, %v642
        %v652 = vsel %vm645, %v648, %v651
        %v653 = vsel %vm643, nan, %v652
        %v654 = vand.u32 2147483647, %v469
        %vm655 = vcmp.le.f32.partialorder %v654, 0.7853982
        %vm656 = vcmp.lt.s32.totalorder %v469, 0
        %v657 = vand.u32 %v469, 2139095040
        %v658 = vshrl.u32 %v657, 23
        %v659 = vsub.s32 %v658, 127
        %v660 = vand.u32 2147483647, %v469
        %v661 = vand.u32 %v660, 8388607
        %v662 = vor.u32 %v661, 8388608
        %v663 = vsub.s32 0, %v662
        %v664 = vadd.s32 %v659, 1
        %vm665 = vcmp.gt.s32.totalorder %v664, 0
        %v666 = vsel %vm665, %v664, 0
        %v667 = vshrl.u32 %v666, 5
        %v668 = vand.u32 %v666, 31
        %v669 = vsub.s32 32, %v668
        %v670 = vshrl.u32 683565275, %v669
        %v671 = vshll.u32 683565275, %v668
        %v672 = vshrl.u32 2475754826, %v669
        %v673 = vor.u32 %v671, %v672
        %v674 = vshll.u32 2475754826, %v668
        %v675 = vshrl.u32 2131351028, %v669
        %v676 = vor.u32 %v674, %v675
        %v677 = vshll.u32 2131351028, %v668
        %v678 = vshrl.u32 2102212464, %v669
        %v679 = vor.u32 %v677, %v678
        %v680 = vshll.u32 2102212464, %v668
        %v681 = vshrl.u32 920167782, %v669
        %v682 = vor.u32 %v680, %v681
        %v683 = vshll.u32 920167782, %v668
        %v684 = vshrl.u32 1326507024, %v669
        %v685 = vor.u32 %v683, %v684
        %vm686 = vcmp.lt.s32.totalorder %v667, 1
        %vm687 = vcmp.lt.s32.totalorder %v667, 2
        %vm688 = vcmp.lt.s32.totalorder %v667, 3
        %vm689 = vcmp.lt.s32.totalorder %v667, 4
        %v690 = vsel %vm686, %v670, %v673
        %v691 = vsel %vm689, %v679, 2102212464
        %v692 = vsel %vm688, %v676, %v691
        %v693 = vsel %vm687, %v690, %v692
        %v694 = vsel %vm686, %v673, %v676
        %v695 = vsel %vm689, %v682, 920167782
        %v696 = vsel %vm688, %v679, %v695
        %v697 = vsel %vm687, %v694, %v696
        %v698 = vsel %vm686, %v676, %v679
        %v699 = vsel %vm689, %v685, 1326507024
        %v700 = vsel %vm688, %v682, %v699
        %v701 = vsel %vm687, %v698, %v700
        %v702 = vshll.u32 %v662, 8
        %v703 = vand.u32 %v702, 65535
        %v704 = vshrl.u32 %v702, 16
        %v705 = vand.u32 %v701, 65535
        %v706 = vshrl.u32 %v701, 16
        %v707 = vmul.u32 %v703, %v705
        %v708 = vmul.u32 %v703, %v706
        %v709 = vmul.u32 %v704, %v705
        %v710 = vmul.u32 %v704, %v706
        %v711 = vshll.u32 %v708, 16
        %v712 = vshrl.u32 %v708, 16
        %v713 = vshll.u32 %v709, 16
        %v714 = vshrl.u32 %v709, 16
        %vm715 = vc.u32 %v707, %v711
        %v716 = vsel %vm715, 1, 0
        %v717 = vadd.s32 %v707, %v711
        %v718 = vadd.s32 %v710, %v716
        %vm719 = vc.u32 %v717, %v713
        %v720 = vsel %vm719, 1, 0
        %v721 = vadd.s32 %v717, %v713
        %v722 = vadd.s32 %v718, %v720
        %v723 = vadd.s32 %v722, %v712
        %v724 = vadd.s32 %v723, %v714
        %v725 = vand.u32 %v702, 65535
        %v726 = vshrl.u32 %v702, 16
        %v727 = vand.u32 %v697, 65535
        %v728 = vshrl.u32 %v697, 16
        %v729 = vmul.u32 %v725, %v727
        %v730 = vmul.u32 %v725, %v728
        %v731 = vmul.u32 %v726, %v727
        %v732 = vmul.u32 %v726, %v728
        %v733 = vshll.u32 %v730, 16
        %v734 = vshrl.u32 %v730, 16
        %v735 = vshll.u32 %v731, 16
        %v736 = vshrl.u32 %v731, 16
        %vm737 = vc.u32 %v729, %v733
        %v738 = vsel %vm737, 1, 0
        %v739 = vadd.s32 %v729, %v733
        %v740 = vadd.s32 %v732, %v738
        %vm741 = vc.u32 %v739, %v735
        %v742 = vsel %vm741, 1, 0
        %v743 = vadd.s32 %v739, %v735
        %v744 = vadd.s32 %v740, %v742
        %v745 = vadd.s32 %v744, %v734
        %v746 = vadd.s32 %v745, %v736
        %v747 = vmul.u32 %v702, %v693
        %v748 = vadd.s32 %v724, %v743
        %vm749 = vc.u32 %v724, %v743
        %v750 = vadd.s32 %v746, 1
        %v751 = vsel %vm749, %v750, %v746
        %v752 = vadd.s32 %v747, %v751
        %v753 = vadd.s32 %v752, 536870912
        %v754 = vshrl.u32 %v753, 30
        %v755 = vshll.u32 %v754, 30
        %v756 = vsub.s32 %v752, %v755
        %vm757 = vcmp.lt.s32.totalorder %v756, 0
        %v758 = vsub.s32 0, %v756
        %v759 = vsel %vm757, %v758, %v756
        %v760 = vclz %v759
        %v761 = vsub.s32 %v760, 2
        %vm762 = vcmp.gt.s32.totalorder 0, %v761
        %v763 = vsel %vm762, 0, %v761
        %v764 = vsub.s32 32, %v763
        %v765 = vshll.u32 %v756, %v763
        %v766 = vshrl.u32 %v748, %v764
        %v767 = vor.u32 %v765, %v766
        %v768 = vsub.s32 4294967266, %v763
        %v769 = vadd.s32 %v768, 127
        %v770 = vshll.u32 %v769, 23
        %v771 = vor.u32 4788187, %v770
        %v772 = vand.u32 2147483647, %v771
        %v774 = vcvt.s32.f32 %v767
        %v775 = vmul.f32 %v774, %v772
        %v776 = vxor.u32 %v775, 2147483648
        %v777 = vsel %vm656, %v776, %v775
        %v778 = vsub.s32 4, %v754
        %v779 = vsel %vm656, %v778, %v754
        %v780 = vsel %vm655, %v469, %v777
        %v781 = vsel %vm655, 0, %v779
        %v782 = vmul.f32 %v780, %v780
        %v783 = vmul.f32 %v782, -0.001358992
        %v784 = vadd.f32 %v783, 0.041655596
        %v785 = vmul.f32 %v782, %v784
        %v786 = vadd.f32 %v785, -0.4999988
        %v787 = vmul.f32 %v782, %v786
        %v788 = vadd.f32 1.0, %v787
        %v789 = vmul.f32 %v780, %v780
        %v790 = vmul.f32 %v789, -0.00019511016
        %v791 = vadd.f32 %v790, 0.008332121
        %v792 = vmul.f32 %v789, %v791
        %v793 = vadd.f32 %v792, -0.16666654
        %v794 = vmul.f32 %v789, %v793
        %v795 = vadd.f32 %v794, 1.0
        %v796 = vmul.f32 %v795, %v780
        %vm797 = vweird.f32 %v469
        %v798 = vand.u32 %v781, 3
        %vm799 = vcmp.lt.s32.totalorder %v798, 2
        %vm800 = vcmp.eq.s32.totalorder %v798, 0
        %v801 = vxor.u32 %v796, 2147483648
        %v802 = vsel %vm800, %v788, %v801
        %vm803 = vcmp.eq.s32.totalorder %v798, 2
        %v804 = vxor.u32 %v788, 2147483648
        %v805 = vsel %vm803, %v804, %v796
        %v806 = vsel %vm799, %v802, %v805
        %v807 = vsel %vm797, nan, %v806
        %v808 = vand.u32 2147483647, %v470
        %vm809 = vcmp.le.f32.partialorder %v808, 0.7853982
        %vm810 = vcmp.lt.s32.totalorder %v470, 0
        %v811 = vand.u32 %v470, 2139095040
        %v812 = vshrl.u32 %v811, 23
        %v813 = vsub.s32 %v812, 127
        %v814 = vand.u32 2147483647, %v470
        %v815 = vand.u32 %v814, 8388607
        %v816 = vor.u32 %v815, 8388608
        %v817 = vsub.s32 0, %v816
        %v818 = vadd.s32 %v813, 1
        %vm819 = vcmp.gt.s32.totalorder %v818, 0
        %v820 = vsel %vm819, %v818, 0
        %v821 = vshrl.u32 %v820, 5
        %v822 = vand.u32 %v820, 31
        %v823 = vsub.s32 32, %v822
        %v824 = vshrl.u32 683565275, %v823
        %v825 = vshll.u32 683565275, %v822
        %v826 = vshrl.u32 2475754826, %v823
        %v827 = vor.u32 %v825, %v826
        %v828 = vshll.u32 2475754826, %v822
        %v829 = vshrl.u32 2131351028, %v823
        %v830 = vor.u32 %v828, %v829
        %v831 = vshll.u32 2131351028, %v822
        %v832 = vshrl.u32 2102212464, %v823
        %v833 = vor.u32 %v831, %v832
        %v834 = vshll.u32 2102212464, %v822
        %v835 = vshrl.u32 920167782, %v823
        %v836 = vor.u32 %v834, %v835
        %v837 = vshll.u32 920167782, %v822
        %v838 = vshrl.u32 1326507024, %v823
        %v839 = vor.u32 %v837, %v838
        %vm840 = vcmp.lt.s32.totalorder %v821, 1
        %vm841 = vcmp.lt.s32.totalorder %v821, 2
        %vm842 = vcmp.lt.s32.totalorder %v821, 3
        %vm843 = vcmp.lt.s32.totalorder %v821, 4
        %v844 = vsel %vm840, %v824, %v827
        %v845 = vsel %vm843, %v833, 2102212464
        %v846 = vsel %vm842, %v830, %v845
        %v847 = vsel %vm841, %v844, %v846
        %v848 = vsel %vm840, %v827, %v830
        %v849 = vsel %vm843, %v836, 920167782
        %v850 = vsel %vm842, %v833, %v849
        %v851 = vsel %vm841, %v848, %v850
        %v852 = vsel %vm840, %v830, %v833
        %v853 = vsel %vm843, %v839, 1326507024
        %v854 = vsel %vm842, %v836, %v853
        %v855 = vsel %vm841, %v852, %v854
        %v856 = vshll.u32 %v816, 8
        %v857 = vand.u32 %v856, 65535
        %v858 = vshrl.u32 %v856, 16
        %v859 = vand.u32 %v855, 65535
        %v860 = vshrl.u32 %v855, 16
        %v861 = vmul.u32 %v857, %v859
        %v862 = vmul.u32 %v857, %v860
        %v863 = vmul.u32 %v858, %v859
        %v864 = vmul.u32 %v858, %v860
        %v865 = vshll.u32 %v862, 16
        %v866 = vshrl.u32 %v862, 16
        %v867 = vshll.u32 %v863, 16
        %v868 = vshrl.u32 %v863, 16
        %vm869 = vc.u32 %v861, %v865
        %v870 = vsel %vm869, 1, 0
        %v871 = vadd.s32 %v861, %v865
        %v872 = vadd.s32 %v864, %v870
        %vm873 = vc.u32 %v871, %v867
        %v874 = vsel %vm873, 1, 0
        %v875 = vadd.s32 %v871, %v867
        %v876 = vadd.s32 %v872, %v874
        %v877 = vadd.s32 %v876, %v866
        %v878 = vadd.s32 %v877, %v868
        %v879 = vand.u32 %v856, 65535
        %v880 = vshrl.u32 %v856, 16
        %v881 = vand.u32 %v851, 65535
        %v882 = vshrl.u32 %v851, 16
        %v883 = vmul.u32 %v879, %v881
        %v884 = vmul.u32 %v879, %v882
        %v885 = vmul.u32 %v880, %v881
        %v886 = vmul.u32 %v880, %v882
        %v887 = vshll.u32 %v884, 16
        %v888 = vshrl.u32 %v884, 16
        %v889 = vshll.u32 %v885, 16
        %v890 = vshrl.u32 %v885, 16
        %vm891 = vc.u32 %v883, %v887
        %v892 = vsel %vm891, 1, 0
        %v893 = vadd.s32 %v883, %v887
        %v894 = vadd.s32 %v886, %v892
        %vm895 = vc.u32 %v893, %v889
        %v896 = vsel %vm895, 1, 0
        %v897 = vadd.s32 %v893, %v889
        %v898 = vadd.s32 %v894, %v896
        %v899 = vadd.s32 %v898, %v888
        %v900 = vadd.s32 %v899, %v890
        %v901 = vmul.u32 %v856, %v847
        %v902 = vadd.s32 %v878, %v897
        %vm903 = vc.u32 %v878, %v897
        %v904 = vadd.s32 %v900, 1
        %v905 = vsel %vm903, %v904, %v900
        %v906 = vadd.s32 %v901, %v905
        %v907 = vadd.s32 %v906, 536870912
        %v908 = vshrl.u32 %v907, 30
        %v909 = vshll.u32 %v908, 30
        %v910 = vsub.s32 %v906, %v909
        %vm911 = vcmp.lt.s32.totalorder %v910, 0
        %v912 = vsub.s32 0, %v910
        %v913 = vsel %vm911, %v912, %v910
        %v914 = vclz %v913
        %v915 = vsub.s32 %v914, 2
        %vm916 = vcmp.gt.s32.totalorder 0, %v915
        %v917 = vsel %vm916, 0, %v915
        %v918 = vsub.s32 32, %v917
        %v919 = vshll.u32 %v910, %v917
        %v920 = vshrl.u32 %v902, %v918
        %v921 = vor.u32 %v919, %v920
        %v922 = vsub.s32 4294967266, %v917
        %v923 = vadd.s32 %v922, 127
        %v924 = vshll.u32 %v923, 23
        %v925 = vor.u32 4788187, %v924
        %v926 = vand.u32 2147483647, %v925
        %v928 = vcvt.s32.f32 %v921
        %v929 = vmul.f32 %v928, %v926
        %v930 = vxor.u32 %v929, 2147483648
        %v931 = vsel %vm810, %v930, %v929
        %v932 = vsub.s32 4, %v908
        %v933 = vsel %vm810, %v932, %v908
        %v934 = vsel %vm809, %v470, %v931
        %v935 = vsel %vm809, 0, %v933
        %v936 = vmul.f32 %v934, %v934
        %v937 = vmul.f32 %v936, -0.001358992
        %v938 = vadd.f32 %v937, 0.041655596
        %v939 = vmul.f32 %v936, %v938
        %v940 = vadd.f32 %v939, -0.4999988
        %v941 = vmul.f32 %v936, %v940
        %v942 = vadd.f32 1.0, %v941
        %v943 = vmul.f32 %v934, %v934
        %v944 = vmul.f32 %v943, -0.00019511016
        %v945 = vadd.f32 %v944, 0.008332121
        %v946 = vmul.f32 %v943, %v945
        %v947 = vadd.f32 %v946, -0.16666654
        %v948 = vmul.f32 %v943, %v947
        %v949 = vadd.f32 %v948, 1.0
        %v950 = vmul.f32 %v949, %v934
        %vm951 = vweird.f32 %v470
        %v952 = vand.u32 %v935, 3
        %vm953 = vcmp.lt.s32.totalorder %v952, 2
        %vm954 = vcmp.eq.s32.totalorder %v952, 0
        %v955 = vxor.u32 %v950, 2147483648
        %v956 = vsel %vm954, %v942, %v955
        %vm957 = vcmp.eq.s32.totalorder %v952, 2
        %v958 = vxor.u32 %v942, 2147483648
        %v959 = vsel %vm957, %v958, %v950
        %v960 = vsel %vm953, %v956, %v959
        %v961 = vsel %vm951, nan, %v960
        %v962 = vand.u32 2147483647, %v471
        %vm963 = vcmp.le.f32.partialorder %v962, 0.7853982
        %vm964 = vcmp.lt.s32.totalorder %v471, 0
        %v965 = vand.u32 %v471, 2139095040
        %v966 = vshrl.u32 %v965, 23
        %v967 = vsub.s32 %v966, 127
        %v968 = vand.u32 2147483647, %v471
        %v969 = vand.u32 %v968, 8388607
        %v970 = vor.u32 %v969, 8388608
        %v971 = vsub.s32 0, %v970
        %v972 = vadd.s32 %v967, 1
        %vm973 = vcmp.gt.s32.totalorder %v972, 0
        %v974 = vsel %vm973, %v972, 0
        %v975 = vshrl.u32 %v974, 5
        %v976 = vand.u32 %v974, 31
        %v977 = vsub.s32 32, %v976
        %v978 = vshrl.u32 683565275, %v977
        %v979 = vshll.u32 683565275, %v976
        %v980 = vshrl.u32 2475754826, %v977
        %v981 = vor.u32 %v979, %v980
        %v982 = vshll.u32 2475754826, %v976
        %v983 = vshrl.u32 2131351028, %v977
        %v984 = vor.u32 %v982, %v983
        %v985 = vshll.u32 2131351028, %v976
        %v986 = vshrl.u32 2102212464, %v977
        %v987 = vor.u32 %v985, %v986
        %v988 = vshll.u32 2102212464, %v976
        %v989 = vshrl.u32 920167782, %v977
        %v990 = vor.u32 %v988, %v989
        %v991 = vshll.u32 920167782, %v976
        %v992 = vshrl.u32 1326507024, %v977
        %v993 = vor.u32 %v991, %v992
        %vm994 = vcmp.lt.s32.totalorder %v975, 1
        %vm995 = vcmp.lt.s32.totalorder %v975, 2
        %vm996 = vcmp.lt.s32.totalorder %v975, 3
        %vm997 = vcmp.lt.s32.totalorder %v975, 4
        %v998 = vsel %vm994, %v978, %v981
        %v999 = vsel %vm997, %v987, 2102212464
        %v1000 = vsel %vm996, %v984, %v999
        %v1001 = vsel %vm995, %v998, %v1000
        %v1002 = vsel %vm994, %v981, %v984
        %v1003 = vsel %vm997, %v990, 920167782
        %v1004 = vsel %vm996, %v987, %v1003
        %v1005 = vsel %vm995, %v1002, %v1004
        %v1006 = vsel %vm994, %v984, %v987
        %v1007 = vsel %vm997, %v993, 1326507024
        %v1008 = vsel %vm996, %v990, %v1007
        %v1009 = vsel %vm995, %v1006, %v1008
        %v1010 = vshll.u32 %v970, 8
        %v1011 = vand.u32 %v1010, 65535
        %v1012 = vshrl.u32 %v1010, 16
        %v1013 = vand.u32 %v1009, 65535
        %v1014 = vshrl.u32 %v1009, 16
        %v1015 = vmul.u32 %v1011, %v1013
        %v1016 = vmul.u32 %v1011, %v1014
        %v1017 = vmul.u32 %v1012, %v1013
        %v1018 = vmul.u32 %v1012, %v1014
        %v1019 = vshll.u32 %v1016, 16
        %v1020 = vshrl.u32 %v1016, 16
        %v1021 = vshll.u32 %v1017, 16
        %v1022 = vshrl.u32 %v1017, 16
        %vm1023 = vc.u32 %v1015, %v1019
        %v1024 = vsel %vm1023, 1, 0
        %v1025 = vadd.s32 %v1015, %v1019
        %v1026 = vadd.s32 %v1018, %v1024
        %vm1027 = vc.u32 %v1025, %v1021
        %v1028 = vsel %vm1027, 1, 0
        %v1029 = vadd.s32 %v1025, %v1021
        %v1030 = vadd.s32 %v1026, %v1028
        %v1031 = vadd.s32 %v1030, %v1020
        %v1032 = vadd.s32 %v1031, %v1022
        %v1033 = vand.u32 %v1010, 65535
        %v1034 = vshrl.u32 %v1010, 16
        %v1035 = vand.u32 %v1005, 65535
        %v1036 = vshrl.u32 %v1005, 16
        %v1037 = vmul.u32 %v1033, %v1035
        %v1038 = vmul.u32 %v1033, %v1036
        %v1039 = vmul.u32 %v1034, %v1035
        %v1040 = vmul.u32 %v1034, %v1036
        %v1041 = vshll.u32 %v1038, 16
        %v1042 = vshrl.u32 %v1038, 16
        %v1043 = vshll.u32 %v1039, 16
        %v1044 = vshrl.u32 %v1039, 16
        %vm1045 = vc.u32 %v1037, %v1041
        %v1046 = vsel %vm1045, 1, 0
        %v1047 = vadd.s32 %v1037, %v1041
        %v1048 = vadd.s32 %v1040, %v1046
        %vm1049 = vc.u32 %v1047, %v1043
        %v1050 = vsel %vm1049, 1, 0
        %v1051 = vadd.s32 %v1047, %v1043
        %v1052 = vadd.s32 %v1048, %v1050
        %v1053 = vadd.s32 %v1052, %v1042
        %v1054 = vadd.s32 %v1053, %v1044
        %v1055 = vmul.u32 %v1010, %v1001
        %v1056 = vadd.s32 %v1032, %v1051
        %vm1057 = vc.u32 %v1032, %v1051
        %v1058 = vadd.s32 %v1054, 1
        %v1059 = vsel %vm1057, %v1058, %v1054
        %v1060 = vadd.s32 %v1055, %v1059
        %v1061 = vadd.s32 %v1060, 536870912
        %v1062 = vshrl.u32 %v1061, 30
        %v1063 = vshll.u32 %v1062, 30
        %v1064 = vsub.s32 %v1060, %v1063
        %vm1065 = vcmp.lt.s32.totalorder %v1064, 0
        %v1066 = vsub.s32 0, %v1064
        %v1067 = vsel %vm1065, %v1066, %v1064
        %v1068 = vclz %v1067
        %v1069 = vsub.s32 %v1068, 2
        %vm1070 = vcmp.gt.s32.totalorder 0, %v1069
        %v1071 = vsel %vm1070, 0, %v1069
        %v1072 = vsub.s32 32, %v1071
        %v1073 = vshll.u32 %v1064, %v1071
        %v1074 = vshrl.u32 %v1056, %v1072
        %v1075 = vor.u32 %v1073, %v1074
        %v1076 = vsub.s32 4294967266, %v1071
        %v1077 = vadd.s32 %v1076, 127
        %v1078 = vshll.u32 %v1077, 23
        %v1079 = vor.u32 4788187, %v1078
        %v1080 = vand.u32 2147483647, %v1079
        %v1082 = vcvt.s32.f32 %v1075
        %v1083 = vmul.f32 %v1082, %v1080
        %v1084 = vxor.u32 %v1083, 2147483648
        %v1085 = vsel %vm964, %v1084, %v1083
        %v1086 = vsub.s32 4, %v1062
        %v1087 = vsel %vm964, %v1086, %v1062
        %v1088 = vsel %vm963, %v471, %v1085
        %v1089 = vsel %vm963, 0, %v1087
        %v1090 = vmul.f32 %v1088, %v1088
        %v1091 = vmul.f32 %v1090, -0.001358992
        %v1092 = vadd.f32 %v1091, 0.041655596
        %v1093 = vmul.f32 %v1090, %v1092
        %v1094 = vadd.f32 %v1093, -0.4999988
        %v1095 = vmul.f32 %v1090, %v1094
        %v1096 = vadd.f32 1.0, %v1095
        %v1097 = vmul.f32 %v1088, %v1088
        %v1098 = vmul.f32 %v1097, -0.00019511016
        %v1099 = vadd.f32 %v1098, 0.008332121
        %v1100 = vmul.f32 %v1097, %v1099
        %v1101 = vadd.f32 %v1100, -0.16666654
        %v1102 = vmul.f32 %v1097, %v1101
        %v1103 = vadd.f32 %v1102, 1.0
        %v1104 = vmul.f32 %v1103, %v1088
        %vm1105 = vweird.f32 %v471
        %v1106 = vand.u32 %v1089, 3
        %vm1107 = vcmp.lt.s32.totalorder %v1106, 2
        %vm1108 = vcmp.eq.s32.totalorder %v1106, 0
        %v1109 = vxor.u32 %v1104, 2147483648
        %v1110 = vsel %vm1108, %v1096, %v1109
        %vm1111 = vcmp.eq.s32.totalorder %v1106, 2
        %v1112 = vxor.u32 %v1096, 2147483648
        %v1113 = vsel %vm1111, %v1112, %v1104
        %v1114 = vsel %vm1107, %v1110, %v1113
        %v1115 = vsel %vm1105, nan, %v1114
        %v1116 = vand.u32 2147483647, %v472
        %vm1117 = vcmp.le.f32.partialorder %v1116, 0.7853982
        %vm1118 = vcmp.lt.s32.totalorder %v472, 0
        %v1119 = vand.u32 %v472, 2139095040
        %v1120 = vshrl.u32 %v1119, 23
        %v1121 = vsub.s32 %v1120, 127
        %v1122 = vand.u32 2147483647, %v472
        %v1123 = vand.u32 %v1122, 8388607
        %v1124 = vor.u32 %v1123, 8388608
        %v1125 = vsub.s32 0, %v1124
        %v1126 = vadd.s32 %v1121, 1
        %vm1127 = vcmp.gt.s32.totalorder %v1126, 0
        %v1128 = vsel %vm1127, %v1126, 0
        %v1129 = vshrl.u32 %v1128, 5
        %v1130 = vand.u32 %v1128, 31
        %v1131 = vsub.s32 32, %v1130
        %v1132 = vshrl.u32 683565275, %v1131
        %v1133 = vshll.u32 683565275, %v1130
        %v1134 = vshrl.u32 2475754826, %v1131
        %v1135 = vor.u32 %v1133, %v1134
        %v1136 = vshll.u32 2475754826, %v1130
        %v1137 = vshrl.u32 2131351028, %v1131
        %v1138 = vor.u32 %v1136, %v1137
        %v1139 = vshll.u32 2131351028, %v1130
        %v1140 = vshrl.u32 2102212464, %v1131
        %v1141 = vor.u32 %v1139, %v1140
        %v1142 = vshll.u32 2102212464, %v1130
        %v1143 = vshrl.u32 920167782, %v1131
        %v1144 = vor.u32 %v1142, %v1143
        %v1145 = vshll.u32 920167782, %v1130
        %v1146 = vshrl.u32 1326507024, %v1131
        %v1147 = vor.u32 %v1145, %v1146
        %vm1148 = vcmp.lt.s32.totalorder %v1129, 1
        %vm1149 = vcmp.lt.s32.totalorder %v1129, 2
        %vm1150 = vcmp.lt.s32.totalorder %v1129, 3
        %vm1151 = vcmp.lt.s32.totalorder %v1129, 4
        %v1152 = vsel %vm1148, %v1132, %v1135
        %v1153 = vsel %vm1151, %v1141, 2102212464
        %v1154 = vsel %vm1150, %v1138, %v1153
        %v1155 = vsel %vm1149, %v1152, %v1154
        %v1156 = vsel %vm1148, %v1135, %v1138
        %v1157 = vsel %vm1151, %v1144, 920167782
        %v1158 = vsel %vm1150, %v1141, %v1157
        %v1159 = vsel %vm1149, %v1156, %v1158
        %v1160 = vsel %vm1148, %v1138, %v1141
        %v1161 = vsel %vm1151, %v1147, 1326507024
        %v1162 = vsel %vm1150, %v1144, %v1161
        %v1163 = vsel %vm1149, %v1160, %v1162
        %v1164 = vshll.u32 %v1124, 8
        %v1165 = vand.u32 %v1164, 65535
        %v1166 = vshrl.u32 %v1164, 16
        %v1167 = vand.u32 %v1163, 65535
        %v1168 = vshrl.u32 %v1163, 16
        %v1169 = vmul.u32 %v1165, %v1167
        %v1170 = vmul.u32 %v1165, %v1168
        %v1171 = vmul.u32 %v1166, %v1167
        %v1172 = vmul.u32 %v1166, %v1168
        %v1173 = vshll.u32 %v1170, 16
        %v1174 = vshrl.u32 %v1170, 16
        %v1175 = vshll.u32 %v1171, 16
        %v1176 = vshrl.u32 %v1171, 16
        %vm1177 = vc.u32 %v1169, %v1173
        %v1178 = vsel %vm1177, 1, 0
        %v1179 = vadd.s32 %v1169, %v1173
        %v1180 = vadd.s32 %v1172, %v1178
        %vm1181 = vc.u32 %v1179, %v1175
        %v1182 = vsel %vm1181, 1, 0
        %v1183 = vadd.s32 %v1179, %v1175
        %v1184 = vadd.s32 %v1180, %v1182
        %v1185 = vadd.s32 %v1184, %v1174
        %v1186 = vadd.s32 %v1185, %v1176
        %v1187 = vand.u32 %v1164, 65535
        %v1188 = vshrl.u32 %v1164, 16
        %v1189 = vand.u32 %v1159, 65535
        %v1190 = vshrl.u32 %v1159, 16
        %v1191 = vmul.u32 %v1187, %v1189
        %v1192 = vmul.u32 %v1187, %v1190
        %v1193 = vmul.u32 %v1188, %v1189
        %v1194 = vmul.u32 %v1188, %v1190
        %v1195 = vshll.u32 %v1192, 16
        %v1196 = vshrl.u32 %v1192, 16
        %v1197 = vshll.u32 %v1193, 16
        %v1198 = vshrl.u32 %v1193, 16
        %vm1199 = vc.u32 %v1191, %v1195
        %v1200 = vsel %vm1199, 1, 0
        %v1201 = vadd.s32 %v1191, %v1195
        %v1202 = vadd.s32 %v1194, %v1200
        %vm1203 = vc.u32 %v1201, %v1197
        %v1204 = vsel %vm1203, 1, 0
        %v1205 = vadd.s32 %v1201, %v1197
        %v1206 = vadd.s32 %v1202, %v1204
        %v1207 = vadd.s32 %v1206, %v1196
        %v1208 = vadd.s32 %v1207, %v1198
        %v1209 = vmul.u32 %v1164, %v1155
        %v1210 = vadd.s32 %v1186, %v1205
        %vm1211 = vc.u32 %v1186, %v1205
        %v1212 = vadd.s32 %v1208, 1
        %v1213 = vsel %vm1211, %v1212, %v1208
        %v1214 = vadd.s32 %v1209, %v1213
        %v1215 = vadd.s32 %v1214, 536870912
        %v1216 = vshrl.u32 %v1215, 30
        %v1217 = vshll.u32 %v1216, 30
        %v1218 = vsub.s32 %v1214, %v1217
        %vm1219 = vcmp.lt.s32.totalorder %v1218, 0
        %v1220 = vsub.s32 0, %v1218
        %v1221 = vsel %vm1219, %v1220, %v1218
        %v1222 = vclz %v1221
        %v1223 = vsub.s32 %v1222, 2
        %vm1224 = vcmp.gt.s32.totalorder 0, %v1223
        %v1225 = vsel %vm1224, 0, %v1223
        %v1226 = vsub.s32 32, %v1225
        %v1227 = vshll.u32 %v1218, %v1225
        %v1228 = vshrl.u32 %v1210, %v1226
        %v1229 = vor.u32 %v1227, %v1228
        %v1230 = vsub.s32 4294967266, %v1225
        %v1231 = vadd.s32 %v1230, 127
        %v1232 = vshll.u32 %v1231, 23
        %v1233 = vor.u32 4788187, %v1232
        %v1234 = vand.u32 2147483647, %v1233
        %v1236 = vcvt.s32.f32 %v1229
        %v1237 = vmul.f32 %v1236, %v1234
        %v1238 = vxor.u32 %v1237, 2147483648
        %v1239 = vsel %vm1118, %v1238, %v1237
        %v1240 = vsub.s32 4, %v1216
        %v1241 = vsel %vm1118, %v1240, %v1216
        %v1242 = vsel %vm1117, %v472, %v1239
        %v1243 = vsel %vm1117, 0, %v1241
        %v1244 = vmul.f32 %v1242, %v1242
        %v1245 = vmul.f32 %v1244, -0.001358992
        %v1246 = vadd.f32 %v1245, 0.041655596
        %v1247 = vmul.f32 %v1244, %v1246
        %v1248 = vadd.f32 %v1247, -0.4999988
        %v1249 = vmul.f32 %v1244, %v1248
        %v1250 = vadd.f32 1.0, %v1249
        %v1251 = vmul.f32 %v1242, %v1242
        %v1252 = vmul.f32 %v1251, -0.00019511016
        %v1253 = vadd.f32 %v1252, 0.008332121
        %v1254 = vmul.f32 %v1251, %v1253
        %v1255 = vadd.f32 %v1254, -0.16666654
        %v1256 = vmul.f32 %v1251, %v1255
        %v1257 = vadd.f32 %v1256, 1.0
        %v1258 = vmul.f32 %v1257, %v1242
        %vm1259 = vweird.f32 %v472
        %v1260 = vand.u32 %v1243, 3
        %vm1261 = vcmp.lt.s32.totalorder %v1260, 2
        %vm1262 = vcmp.eq.s32.totalorder %v1260, 0
        %v1263 = vxor.u32 %v1258, 2147483648
        %v1264 = vsel %vm1262, %v1250, %v1263
        %vm1265 = vcmp.eq.s32.totalorder %v1260, 2
        %v1266 = vxor.u32 %v1250, 2147483648
        %v1267 = vsel %vm1265, %v1266, %v1258
        %v1268 = vsel %vm1261, %v1264, %v1267
        %v1269 = vsel %vm1259, nan, %v1268
        %v1270 = vand.u32 2147483647, %v473
        %vm1271 = vcmp.le.f32.partialorder %v1270, 0.7853982
        %vm1272 = vcmp.lt.s32.totalorder %v473, 0
        %v1273 = vand.u32 %v473, 2139095040
        %v1274 = vshrl.u32 %v1273, 23
        %v1275 = vsub.s32 %v1274, 127
        %v1276 = vand.u32 2147483647, %v473
        %v1277 = vand.u32 %v1276, 8388607
        %v1278 = vor.u32 %v1277, 8388608
        %v1279 = vsub.s32 0, %v1278
        %v1280 = vadd.s32 %v1275, 1
        %vm1281 = vcmp.gt.s32.totalorder %v1280, 0
        %v1282 = vsel %vm1281, %v1280, 0
        %v1283 = vshrl.u32 %v1282, 5
        %v1284 = vand.u32 %v1282, 31
        %v1285 = vsub.s32 32, %v1284
        %v1286 = vshrl.u32 683565275, %v1285
        %v1287 = vshll.u32 683565275, %v1284
        %v1288 = vshrl.u32 2475754826, %v1285
        %v1289 = vor.u32 %v1287, %v1288
        %v1290 = vshll.u32 2475754826, %v1284
        %v1291 = vshrl.u32 2131351028, %v1285
        %v1292 = vor.u32 %v1290, %v1291
        %v1293 = vshll.u32 2131351028, %v1284
        %v1294 = vshrl.u32 2102212464, %v1285
        %v1295 = vor.u32 %v1293, %v1294
        %v1296 = vshll.u32 2102212464, %v1284
        %v1297 = vshrl.u32 920167782, %v1285
        %v1298 = vor.u32 %v1296, %v1297
        %v1299 = vshll.u32 920167782, %v1284
        %v1300 = vshrl.u32 1326507024, %v1285
        %v1301 = vor.u32 %v1299, %v1300
        %vm1302 = vcmp.lt.s32.totalorder %v1283, 1
        %vm1303 = vcmp.lt.s32.totalorder %v1283, 2
        %vm1304 = vcmp.lt.s32.totalorder %v1283, 3
        %vm1305 = vcmp.lt.s32.totalorder %v1283, 4
        %v1306 = vsel %vm1302, %v1286, %v1289
        %v1307 = vsel %vm1305, %v1295, 2102212464
        %v1308 = vsel %vm1304, %v1292, %v1307
        %v1309 = vsel %vm1303, %v1306, %v1308
        %v1310 = vsel %vm1302, %v1289, %v1292
        %v1311 = vsel %vm1305, %v1298, 920167782
        %v1312 = vsel %vm1304, %v1295, %v1311
        %v1313 = vsel %vm1303, %v1310, %v1312
        %v1314 = vsel %vm1302, %v1292, %v1295
        %v1315 = vsel %vm1305, %v1301, 1326507024
        %v1316 = vsel %vm1304, %v1298, %v1315
        %v1317 = vsel %vm1303, %v1314, %v1316
        %v1318 = vshll.u32 %v1278, 8
        %v1319 = vand.u32 %v1318, 65535
        %v1320 = vshrl.u32 %v1318, 16
        %v1321 = vand.u32 %v1317, 65535
        %v1322 = vshrl.u32 %v1317, 16
        %v1323 = vmul.u32 %v1319, %v1321
        %v1324 = vmul.u32 %v1319, %v1322
        %v1325 = vmul.u32 %v1320, %v1321
        %v1326 = vmul.u32 %v1320, %v1322
        %v1327 = vshll.u32 %v1324, 16
        %v1328 = vshrl.u32 %v1324, 16
        %v1329 = vshll.u32 %v1325, 16
        %v1330 = vshrl.u32 %v1325, 16
        %vm1331 = vc.u32 %v1323, %v1327
        %v1332 = vsel %vm1331, 1, 0
        %v1333 = vadd.s32 %v1323, %v1327
        %v1334 = vadd.s32 %v1326, %v1332
        %vm1335 = vc.u32 %v1333, %v1329
        %v1336 = vsel %vm1335, 1, 0
        %v1337 = vadd.s32 %v1333, %v1329
        %v1338 = vadd.s32 %v1334, %v1336
        %v1339 = vadd.s32 %v1338, %v1328
        %v1340 = vadd.s32 %v1339, %v1330
        %v1341 = vand.u32 %v1318, 65535
        %v1342 = vshrl.u32 %v1318, 16
        %v1343 = vand.u32 %v1313, 65535
        %v1344 = vshrl.u32 %v1313, 16
        %v1345 = vmul.u32 %v1341, %v1343
        %v1346 = vmul.u32 %v1341, %v1344
        %v1347 = vmul.u32 %v1342, %v1343
        %v1348 = vmul.u32 %v1342, %v1344
        %v1349 = vshll.u32 %v1346, 16
        %v1350 = vshrl.u32 %v1346, 16
        %v1351 = vshll.u32 %v1347, 16
        %v1352 = vshrl.u32 %v1347, 16
        %vm1353 = vc.u32 %v1345, %v1349
        %v1354 = vsel %vm1353, 1, 0
        %v1355 = vadd.s32 %v1345, %v1349
        %v1356 = vadd.s32 %v1348, %v1354
        %vm1357 = vc.u32 %v1355, %v1351
        %v1358 = vsel %vm1357, 1, 0
        %v1359 = vadd.s32 %v1355, %v1351
        %v1360 = vadd.s32 %v1356, %v1358
        %v1361 = vadd.s32 %v1360, %v1350
        %v1362 = vadd.s32 %v1361, %v1352
        %v1363 = vmul.u32 %v1318, %v1309
        %v1364 = vadd.s32 %v1340, %v1359
        %vm1365 = vc.u32 %v1340, %v1359
        %v1366 = vadd.s32 %v1362, 1
        %v1367 = vsel %vm1365, %v1366, %v1362
        %v1368 = vadd.s32 %v1363, %v1367
        %v1369 = vadd.s32 %v1368, 536870912
        %v1370 = vshrl.u32 %v1369, 30
        %v1371 = vshll.u32 %v1370, 30
        %v1372 = vsub.s32 %v1368, %v1371
        %vm1373 = vcmp.lt.s32.totalorder %v1372, 0
        %v1374 = vsub.s32 0, %v1372
        %v1375 = vsel %vm1373, %v1374, %v1372
        %v1376 = vclz %v1375
        %v1377 = vsub.s32 %v1376, 2
        %vm1378 = vcmp.gt.s32.totalorder 0, %v1377
        %v1379 = vsel %vm1378, 0, %v1377
        %v1380 = vsub.s32 32, %v1379
        %v1381 = vshll.u32 %v1372, %v1379
        %v1382 = vshrl.u32 %v1364, %v1380
        %v1383 = vor.u32 %v1381, %v1382
        %v1384 = vsub.s32 4294967266, %v1379
        %v1385 = vadd.s32 %v1384, 127
        %v1386 = vshll.u32 %v1385, 23
        %v1387 = vor.u32 4788187, %v1386
        %v1388 = vand.u32 2147483647, %v1387
        %v1390 = vcvt.s32.f32 %v1383
        %v1391 = vmul.f32 %v1390, %v1388
        %v1392 = vxor.u32 %v1391, 2147483648
        %v1393 = vsel %vm1272, %v1392, %v1391
        %v1394 = vsub.s32 4, %v1370
        %v1395 = vsel %vm1272, %v1394, %v1370
        %v1396 = vsel %vm1271, %v473, %v1393
        %v1397 = vsel %vm1271, 0, %v1395
        %v1398 = vmul.f32 %v1396, %v1396
        %v1399 = vmul.f32 %v1398, -0.001358992
        %v1400 = vadd.f32 %v1399, 0.041655596
        %v1401 = vmul.f32 %v1398, %v1400
        %v1402 = vadd.f32 %v1401, -0.4999988
        %v1403 = vmul.f32 %v1398, %v1402
        %v1404 = vadd.f32 1.0, %v1403
        %v1405 = vmul.f32 %v1396, %v1396
        %v1406 = vmul.f32 %v1405, -0.00019511016
        %v1407 = vadd.f32 %v1406, 0.008332121
        %v1408 = vmul.f32 %v1405, %v1407
        %v1409 = vadd.f32 %v1408, -0.16666654
        %v1410 = vmul.f32 %v1405, %v1409
        %v1411 = vadd.f32 %v1410, 1.0
        %v1412 = vmul.f32 %v1411, %v1396
        %vm1413 = vweird.f32 %v473
        %v1414 = vand.u32 %v1397, 3
        %vm1415 = vcmp.lt.s32.totalorder %v1414, 2
        %vm1416 = vcmp.eq.s32.totalorder %v1414, 0
        %v1417 = vxor.u32 %v1412, 2147483648
        %v1418 = vsel %vm1416, %v1404, %v1417
        %vm1419 = vcmp.eq.s32.totalorder %v1414, 2
        %v1420 = vxor.u32 %v1404, 2147483648
        %v1421 = vsel %vm1419, %v1420, %v1412
        %v1422 = vsel %vm1415, %v1418, %v1421
        %v1423 = vsel %vm1413, nan, %v1422
        %v1424 = vand.u32 2147483647, %v474
        %vm1425 = vcmp.le.f32.partialorder %v1424, 0.7853982
        %vm1426 = vcmp.lt.s32.totalorder %v474, 0
        %v1427 = vand.u32 %v474, 2139095040
        %v1428 = vshrl.u32 %v1427, 23
        %v1429 = vsub.s32 %v1428, 127
        %v1430 = vand.u32 2147483647, %v474
        %v1431 = vand.u32 %v1430, 8388607
        %v1432 = vor.u32 %v1431, 8388608
        %v1433 = vsub.s32 0, %v1432
        %v1434 = vadd.s32 %v1429, 1
        %vm1435 = vcmp.gt.s32.totalorder %v1434, 0
        %v1436 = vsel %vm1435, %v1434, 0
        %v1437 = vshrl.u32 %v1436, 5
        %v1438 = vand.u32 %v1436, 31
        %v1439 = vsub.s32 32, %v1438
        %v1440 = vshrl.u32 683565275, %v1439
        %v1441 = vshll.u32 683565275, %v1438
        %v1442 = vshrl.u32 2475754826, %v1439
        %v1443 = vor.u32 %v1441, %v1442
        %v1444 = vshll.u32 2475754826, %v1438
        %v1445 = vshrl.u32 2131351028, %v1439
        %v1446 = vor.u32 %v1444, %v1445
        %v1447 = vshll.u32 2131351028, %v1438
        %v1448 = vshrl.u32 2102212464, %v1439
        %v1449 = vor.u32 %v1447, %v1448
        %v1450 = vshll.u32 2102212464, %v1438
        %v1451 = vshrl.u32 920167782, %v1439
        %v1452 = vor.u32 %v1450, %v1451
        %v1453 = vshll.u32 920167782, %v1438
        %v1454 = vshrl.u32 1326507024, %v1439
        %v1455 = vor.u32 %v1453, %v1454
        %vm1456 = vcmp.lt.s32.totalorder %v1437, 1
        %vm1457 = vcmp.lt.s32.totalorder %v1437, 2
        %vm1458 = vcmp.lt.s32.totalorder %v1437, 3
        %vm1459 = vcmp.lt.s32.totalorder %v1437, 4
        %v1460 = vsel %vm1456, %v1440, %v1443
        %v1461 = vsel %vm1459, %v1449, 2102212464
        %v1462 = vsel %vm1458, %v1446, %v1461
        %v1463 = vsel %vm1457, %v1460, %v1462
        %v1464 = vsel %vm1456, %v1443, %v1446
        %v1465 = vsel %vm1459, %v1452, 920167782
        %v1466 = vsel %vm1458, %v1449, %v1465
        %v1467 = vsel %vm1457, %v1464, %v1466
        %v1468 = vsel %vm1456, %v1446, %v1449
        %v1469 = vsel %vm1459, %v1455, 1326507024
        %v1470 = vsel %vm1458, %v1452, %v1469
        %v1471 = vsel %vm1457, %v1468, %v1470
        %v1472 = vshll.u32 %v1432, 8
        %v1473 = vand.u32 %v1472, 65535
        %v1474 = vshrl.u32 %v1472, 16
        %v1475 = vand.u32 %v1471, 65535
        %v1476 = vshrl.u32 %v1471, 16
        %v1477 = vmul.u32 %v1473, %v1475
        %v1478 = vmul.u32 %v1473, %v1476
        %v1479 = vmul.u32 %v1474, %v1475
        %v1480 = vmul.u32 %v1474, %v1476
        %v1481 = vshll.u32 %v1478, 16
        %v1482 = vshrl.u32 %v1478, 16
        %v1483 = vshll.u32 %v1479, 16
        %v1484 = vshrl.u32 %v1479, 16
        %vm1485 = vc.u32 %v1477, %v1481
        %v1486 = vsel %vm1485, 1, 0
        %v1487 = vadd.s32 %v1477, %v1481
        %v1488 = vadd.s32 %v1480, %v1486
        %vm1489 = vc.u32 %v1487, %v1483
        %v1490 = vsel %vm1489, 1, 0
        %v1491 = vadd.s32 %v1487, %v1483
        %v1492 = vadd.s32 %v1488, %v1490
        %v1493 = vadd.s32 %v1492, %v1482
        %v1494 = vadd.s32 %v1493, %v1484
        %v1495 = vand.u32 %v1472, 65535
        %v1496 = vshrl.u32 %v1472, 16
        %v1497 = vand.u32 %v1467, 65535
        %v1498 = vshrl.u32 %v1467, 16
        %v1499 = vmul.u32 %v1495, %v1497
        %v1500 = vmul.u32 %v1495, %v1498
        %v1501 = vmul.u32 %v1496, %v1497
        %v1502 = vmul.u32 %v1496, %v1498
        %v1503 = vshll.u32 %v1500, 16
        %v1504 = vshrl.u32 %v1500, 16
        %v1505 = vshll.u32 %v1501, 16
        %v1506 = vshrl.u32 %v1501, 16
        %vm1507 = vc.u32 %v1499, %v1503
        %v1508 = vsel %vm1507, 1, 0
        %v1509 = vadd.s32 %v1499, %v1503
        %v1510 = vadd.s32 %v1502, %v1508
        %vm1511 = vc.u32 %v1509, %v1505
        %v1512 = vsel %vm1511, 1, 0
        %v1513 = vadd.s32 %v1509, %v1505
        %v1514 = vadd.s32 %v1510, %v1512
        %v1515 = vadd.s32 %v1514, %v1504
        %v1516 = vadd.s32 %v1515, %v1506
        %v1517 = vmul.u32 %v1472, %v1463
        %v1518 = vadd.s32 %v1494, %v1513
        %vm1519 = vc.u32 %v1494, %v1513
        %v1520 = vadd.s32 %v1516, 1
        %v1521 = vsel %vm1519, %v1520, %v1516
        %v1522 = vadd.s32 %v1517, %v1521
        %v1523 = vadd.s32 %v1522, 536870912
        %v1524 = vshrl.u32 %v1523, 30
        %v1525 = vshll.u32 %v1524, 30
        %v1526 = vsub.s32 %v1522, %v1525
        %vm1527 = vcmp.lt.s32.totalorder %v1526, 0
        %v1528 = vsub.s32 0, %v1526
        %v1529 = vsel %vm1527, %v1528, %v1526
        %v1530 = vclz %v1529
        %v1531 = vsub.s32 %v1530, 2
        %vm1532 = vcmp.gt.s32.totalorder 0, %v1531
        %v1533 = vsel %vm1532, 0, %v1531
        %v1534 = vsub.s32 32, %v1533
        %v1535 = vshll.u32 %v1526, %v1533
        %v1536 = vshrl.u32 %v1518, %v1534
        %v1537 = vor.u32 %v1535, %v1536
        %v1538 = vsub.s32 4294967266, %v1533
        %v1539 = vadd.s32 %v1538, 127
        %v1540 = vshll.u32 %v1539, 23
        %v1541 = vor.u32 4788187, %v1540
        %v1542 = vand.u32 2147483647, %v1541
        %v1544 = vcvt.s32.f32 %v1537
        %v1545 = vmul.f32 %v1544, %v1542
        %v1546 = vxor.u32 %v1545, 2147483648
        %v1547 = vsel %vm1426, %v1546, %v1545
        %v1548 = vsub.s32 4, %v1524
        %v1549 = vsel %vm1426, %v1548, %v1524
        %v1550 = vsel %vm1425, %v474, %v1547
        %v1551 = vsel %vm1425, 0, %v1549
        %v1552 = vmul.f32 %v1550, %v1550
        %v1553 = vmul.f32 %v1552, -0.001358992
        %v1554 = vadd.f32 %v1553, 0.041655596
        %v1555 = vmul.f32 %v1552, %v1554
        %v1556 = vadd.f32 %v1555, -0.4999988
        %v1557 = vmul.f32 %v1552, %v1556
        %v1558 = vadd.f32 1.0, %v1557
        %v1559 = vmul.f32 %v1550, %v1550
        %v1560 = vmul.f32 %v1559, -0.00019511016
        %v1561 = vadd.f32 %v1560, 0.008332121
        %v1562 = vmul.f32 %v1559, %v1561
        %v1563 = vadd.f32 %v1562, -0.16666654
        %v1564 = vmul.f32 %v1559, %v1563
        %v1565 = vadd.f32 %v1564, 1.0
        %v1566 = vmul.f32 %v1565, %v1550
        %vm1567 = vweird.f32 %v474
        %v1568 = vand.u32 %v1551, 3
        %vm1569 = vcmp.lt.s32.totalorder %v1568, 2
        %vm1570 = vcmp.eq.s32.totalorder %v1568, 0
        %v1571 = vxor.u32 %v1566, 2147483648
        %v1572 = vsel %vm1570, %v1558, %v1571
        %vm1573 = vcmp.eq.s32.totalorder %v1568, 2
        %v1574 = vxor.u32 %v1558, 2147483648
        %v1575 = vsel %vm1573, %v1574, %v1566
        %v1576 = vsel %vm1569, %v1572, %v1575
        %v1577 = vsel %vm1567, nan, %v1576
        %v1578 = vand.u32 2147483647, %v475
        %vm1579 = vcmp.le.f32.partialorder %v1578, 0.7853982
        %vm1580 = vcmp.lt.s32.totalorder %v475, 0
        %v1581 = vand.u32 %v475, 2139095040
        %v1582 = vshrl.u32 %v1581, 23
        %v1583 = vsub.s32 %v1582, 127
        %v1584 = vand.u32 2147483647, %v475
        %v1585 = vand.u32 %v1584, 8388607
        %v1586 = vor.u32 %v1585, 8388608
        %v1587 = vsub.s32 0, %v1586
        %v1588 = vadd.s32 %v1583, 1
        %vm1589 = vcmp.gt.s32.totalorder %v1588, 0
        %v1590 = vsel %vm1589, %v1588, 0
        %v1591 = vshrl.u32 %v1590, 5
        %v1592 = vand.u32 %v1590, 31
        %v1593 = vsub.s32 32, %v1592
        %v1594 = vshrl.u32 683565275, %v1593
        %v1595 = vshll.u32 683565275, %v1592
        %v1596 = vshrl.u32 2475754826, %v1593
        %v1597 = vor.u32 %v1595, %v1596
        %v1598 = vshll.u32 2475754826, %v1592
        %v1599 = vshrl.u32 2131351028, %v1593
        %v1600 = vor.u32 %v1598, %v1599
        %v1601 = vshll.u32 2131351028, %v1592
        %v1602 = vshrl.u32 2102212464, %v1593
        %v1603 = vor.u32 %v1601, %v1602
        %v1604 = vshll.u32 2102212464, %v1592
        %v1605 = vshrl.u32 920167782, %v1593
        %v1606 = vor.u32 %v1604, %v1605
        %v1607 = vshll.u32 920167782, %v1592
        %v1608 = vshrl.u32 1326507024, %v1593
        %v1609 = vor.u32 %v1607, %v1608
        %vm1610 = vcmp.lt.s32.totalorder %v1591, 1
        %vm1611 = vcmp.lt.s32.totalorder %v1591, 2
        %vm1612 = vcmp.lt.s32.totalorder %v1591, 3
        %vm1613 = vcmp.lt.s32.totalorder %v1591, 4
        %v1614 = vsel %vm1610, %v1594, %v1597
        %v1615 = vsel %vm1613, %v1603, 2102212464
        %v1616 = vsel %vm1612, %v1600, %v1615
        %v1617 = vsel %vm1611, %v1614, %v1616
        %v1618 = vsel %vm1610, %v1597, %v1600
        %v1619 = vsel %vm1613, %v1606, 920167782
        %v1620 = vsel %vm1612, %v1603, %v1619
        %v1621 = vsel %vm1611, %v1618, %v1620
        %v1622 = vsel %vm1610, %v1600, %v1603
        %v1623 = vsel %vm1613, %v1609, 1326507024
        %v1624 = vsel %vm1612, %v1606, %v1623
        %v1625 = vsel %vm1611, %v1622, %v1624
        %v1626 = vshll.u32 %v1586, 8
        %v1627 = vand.u32 %v1626, 65535
        %v1628 = vshrl.u32 %v1626, 16
        %v1629 = vand.u32 %v1625, 65535
        %v1630 = vshrl.u32 %v1625, 16
        %v1631 = vmul.u32 %v1627, %v1629
        %v1632 = vmul.u32 %v1627, %v1630
        %v1633 = vmul.u32 %v1628, %v1629
        %v1634 = vmul.u32 %v1628, %v1630
        %v1635 = vshll.u32 %v1632, 16
        %v1636 = vshrl.u32 %v1632, 16
        %v1637 = vshll.u32 %v1633, 16
        %v1638 = vshrl.u32 %v1633, 16
        %vm1639 = vc.u32 %v1631, %v1635
        %v1640 = vsel %vm1639, 1, 0
        %v1641 = vadd.s32 %v1631, %v1635
        %v1642 = vadd.s32 %v1634, %v1640
        %vm1643 = vc.u32 %v1641, %v1637
        %v1644 = vsel %vm1643, 1, 0
        %v1645 = vadd.s32 %v1641, %v1637
        %v1646 = vadd.s32 %v1642, %v1644
        %v1647 = vadd.s32 %v1646, %v1636
        %v1648 = vadd.s32 %v1647, %v1638
        %v1649 = vand.u32 %v1626, 65535
        %v1650 = vshrl.u32 %v1626, 16
        %v1651 = vand.u32 %v1621, 65535
        %v1652 = vshrl.u32 %v1621, 16
        %v1653 = vmul.u32 %v1649, %v1651
        %v1654 = vmul.u32 %v1649, %v1652
        %v1655 = vmul.u32 %v1650, %v1651
        %v1656 = vmul.u32 %v1650, %v1652
        %v1657 = vshll.u32 %v1654, 16
        %v1658 = vshrl.u32 %v1654, 16
        %v1659 = vshll.u32 %v1655, 16
        %v1660 = vshrl.u32 %v1655, 16
        %vm1661 = vc.u32 %v1653, %v1657
        %v1662 = vsel %vm1661, 1, 0
        %v1663 = vadd.s32 %v1653, %v1657
        %v1664 = vadd.s32 %v1656, %v1662
        %vm1665 = vc.u32 %v1663, %v1659
        %v1666 = vsel %vm1665, 1, 0
        %v1667 = vadd.s32 %v1663, %v1659
        %v1668 = vadd.s32 %v1664, %v1666
        %v1669 = vadd.s32 %v1668, %v1658
        %v1670 = vadd.s32 %v1669, %v1660
        %v1671 = vmul.u32 %v1626, %v1617
        %v1672 = vadd.s32 %v1648, %v1667
        %vm1673 = vc.u32 %v1648, %v1667
        %v1674 = vadd.s32 %v1670, 1
        %v1675 = vsel %vm1673, %v1674, %v1670
        %v1676 = vadd.s32 %v1671, %v1675
        %v1677 = vadd.s32 %v1676, 536870912
        %v1678 = vshrl.u32 %v1677, 30
        %v1679 = vshll.u32 %v1678, 30
        %v1680 = vsub.s32 %v1676, %v1679
        %vm1681 = vcmp.lt.s32.totalorder %v1680, 0
        %v1682 = vsub.s32 0, %v1680
        %v1683 = vsel %vm1681, %v1682, %v1680
        %v1684 = vclz %v1683
        %v1685 = vsub.s32 %v1684, 2
        %vm1686 = vcmp.gt.s32.totalorder 0, %v1685
        %v1687 = vsel %vm1686, 0, %v1685
        %v1688 = vsub.s32 32, %v1687
        %v1689 = vshll.u32 %v1680, %v1687
        %v1690 = vshrl.u32 %v1672, %v1688
        %v1691 = vor.u32 %v1689, %v1690
        %v1692 = vsub.s32 4294967266, %v1687
        %v1693 = vadd.s32 %v1692, 127
        %v1694 = vshll.u32 %v1693, 23
        %v1695 = vor.u32 4788187, %v1694
        %v1696 = vand.u32 2147483647, %v1695
        %v1698 = vcvt.s32.f32 %v1691
        %v1699 = vmul.f32 %v1698, %v1696
        %v1700 = vxor.u32 %v1699, 2147483648
        %v1701 = vsel %vm1580, %v1700, %v1699
        %v1702 = vsub.s32 4, %v1678
        %v1703 = vsel %vm1580, %v1702, %v1678
        %v1704 = vsel %vm1579, %v475, %v1701
        %v1705 = vsel %vm1579, 0, %v1703
        %v1706 = vmul.f32 %v1704, %v1704
        %v1707 = vmul.f32 %v1706, -0.001358992
        %v1708 = vadd.f32 %v1707, 0.041655596
        %v1709 = vmul.f32 %v1706, %v1708
        %v1710 = vadd.f32 %v1709, -0.4999988
        %v1711 = vmul.f32 %v1706, %v1710
        %v1712 = vadd.f32 1.0, %v1711
        %v1713 = vmul.f32 %v1704, %v1704
        %v1714 = vmul.f32 %v1713, -0.00019511016
        %v1715 = vadd.f32 %v1714, 0.008332121
        %v1716 = vmul.f32 %v1713, %v1715
        %v1717 = vadd.f32 %v1716, -0.16666654
        %v1718 = vmul.f32 %v1713, %v1717
        %v1719 = vadd.f32 %v1718, 1.0
        %v1720 = vmul.f32 %v1719, %v1704
        %vm1721 = vweird.f32 %v475
        %v1722 = vand.u32 %v1705, 3
        %vm1723 = vcmp.lt.s32.totalorder %v1722, 2
        %vm1724 = vcmp.eq.s32.totalorder %v1722, 0
        %v1725 = vxor.u32 %v1720, 2147483648
        %v1726 = vsel %vm1724, %v1712, %v1725
        %vm1727 = vcmp.eq.s32.totalorder %v1722, 2
        %v1728 = vxor.u32 %v1712, 2147483648
        %v1729 = vsel %vm1727, %v1728, %v1720
        %v1730 = vsel %vm1723, %v1726, %v1729
        %v1731 = vsel %vm1721, nan, %v1730
        %v1732 = vand.u32 2147483647, %v476
        %vm1733 = vcmp.le.f32.partialorder %v1732, 0.7853982
        %vm1734 = vcmp.lt.s32.totalorder %v476, 0
        %v1735 = vand.u32 %v476, 2139095040
        %v1736 = vshrl.u32 %v1735, 23
        %v1737 = vsub.s32 %v1736, 127
        %v1738 = vand.u32 2147483647, %v476
        %v1739 = vand.u32 %v1738, 8388607
        %v1740 = vor.u32 %v1739, 8388608
        %v1741 = vsub.s32 0, %v1740
        %v1742 = vadd.s32 %v1737, 1
        %vm1743 = vcmp.gt.s32.totalorder %v1742, 0
        %v1744 = vsel %vm1743, %v1742, 0
        %v1745 = vshrl.u32 %v1744, 5
        %v1746 = vand.u32 %v1744, 31
        %v1747 = vsub.s32 32, %v1746
        %v1748 = vshrl.u32 683565275, %v1747
        %v1749 = vshll.u32 683565275, %v1746
        %v1750 = vshrl.u32 2475754826, %v1747
        %v1751 = vor.u32 %v1749, %v1750
        %v1752 = vshll.u32 2475754826, %v1746
        %v1753 = vshrl.u32 2131351028, %v1747
        %v1754 = vor.u32 %v1752, %v1753
        %v1755 = vshll.u32 2131351028, %v1746
        %v1756 = vshrl.u32 2102212464, %v1747
        %v1757 = vor.u32 %v1755, %v1756
        %v1758 = vshll.u32 2102212464, %v1746
        %v1759 = vshrl.u32 920167782, %v1747
        %v1760 = vor.u32 %v1758, %v1759
        %v1761 = vshll.u32 920167782, %v1746
        %v1762 = vshrl.u32 1326507024, %v1747
        %v1763 = vor.u32 %v1761, %v1762
        %vm1764 = vcmp.lt.s32.totalorder %v1745, 1
        %vm1765 = vcmp.lt.s32.totalorder %v1745, 2
        %vm1766 = vcmp.lt.s32.totalorder %v1745, 3
        %vm1767 = vcmp.lt.s32.totalorder %v1745, 4
        %v1768 = vsel %vm1764, %v1748, %v1751
        %v1769 = vsel %vm1767, %v1757, 2102212464
        %v1770 = vsel %vm1766, %v1754, %v1769
        %v1771 = vsel %vm1765, %v1768, %v1770
        %v1772 = vsel %vm1764, %v1751, %v1754
        %v1773 = vsel %vm1767, %v1760, 920167782
        %v1774 = vsel %vm1766, %v1757, %v1773
        %v1775 = vsel %vm1765, %v1772, %v1774
        %v1776 = vsel %vm1764, %v1754, %v1757
        %v1777 = vsel %vm1767, %v1763, 1326507024
        %v1778 = vsel %vm1766, %v1760, %v1777
        %v1779 = vsel %vm1765, %v1776, %v1778
        %v1780 = vshll.u32 %v1740, 8
        %v1781 = vand.u32 %v1780, 65535
        %v1782 = vshrl.u32 %v1780, 16
        %v1783 = vand.u32 %v1779, 65535
        %v1784 = vshrl.u32 %v1779, 16
        %v1785 = vmul.u32 %v1781, %v1783
        %v1786 = vmul.u32 %v1781, %v1784
        %v1787 = vmul.u32 %v1782, %v1783
        %v1788 = vmul.u32 %v1782, %v1784
        %v1789 = vshll.u32 %v1786, 16
        %v1790 = vshrl.u32 %v1786, 16
        %v1791 = vshll.u32 %v1787, 16
        %v1792 = vshrl.u32 %v1787, 16
        %vm1793 = vc.u32 %v1785, %v1789
        %v1794 = vsel %vm1793, 1, 0
        %v1795 = vadd.s32 %v1785, %v1789
        %v1796 = vadd.s32 %v1788, %v1794
        %vm1797 = vc.u32 %v1795, %v1791
        %v1798 = vsel %vm1797, 1, 0
        %v1799 = vadd.s32 %v1795, %v1791
        %v1800 = vadd.s32 %v1796, %v1798
        %v1801 = vadd.s32 %v1800, %v1790
        %v1802 = vadd.s32 %v1801, %v1792
        %v1803 = vand.u32 %v1780, 65535
        %v1804 = vshrl.u32 %v1780, 16
        %v1805 = vand.u32 %v1775, 65535
        %v1806 = vshrl.u32 %v1775, 16
        %v1807 = vmul.u32 %v1803, %v1805
        %v1808 = vmul.u32 %v1803, %v1806
        %v1809 = vmul.u32 %v1804, %v1805
        %v1810 = vmul.u32 %v1804, %v1806
        %v1811 = vshll.u32 %v1808, 16
        %v1812 = vshrl.u32 %v1808, 16
        %v1813 = vshll.u32 %v1809, 16
        %v1814 = vshrl.u32 %v1809, 16
        %vm1815 = vc.u32 %v1807, %v1811
        %v1816 = vsel %vm1815, 1, 0
        %v1817 = vadd.s32 %v1807, %v1811
        %v1818 = vadd.s32 %v1810, %v1816
        %vm1819 = vc.u32 %v1817, %v1813
        %v1820 = vsel %vm1819, 1, 0
        %v1821 = vadd.s32 %v1817, %v1813
        %v1822 = vadd.s32 %v1818, %v1820
        %v1823 = vadd.s32 %v1822, %v1812
        %v1824 = vadd.s32 %v1823, %v1814
        %v1825 = vmul.u32 %v1780, %v1771
        %v1826 = vadd.s32 %v1802, %v1821
        %vm1827 = vc.u32 %v1802, %v1821
        %v1828 = vadd.s32 %v1824, 1
        %v1829 = vsel %vm1827, %v1828, %v1824
        %v1830 = vadd.s32 %v1825, %v1829
        %v1831 = vadd.s32 %v1830, 536870912
        %v1832 = vshrl.u32 %v1831, 30
        %v1833 = vshll.u32 %v1832, 30
        %v1834 = vsub.s32 %v1830, %v1833
        %vm1835 = vcmp.lt.s32.totalorder %v1834, 0
        %v1836 = vsub.s32 0, %v1834
        %v1837 = vsel %vm1835, %v1836, %v1834
        %v1838 = vclz %v1837
        %v1839 = vsub.s32 %v1838, 2
        %vm1840 = vcmp.gt.s32.totalorder 0, %v1839
        %v1841 = vsel %vm1840, 0, %v1839
        %v1842 = vsub.s32 32, %v1841
        %v1843 = vshll.u32 %v1834, %v1841
        %v1844 = vshrl.u32 %v1826, %v1842
        %v1845 = vor.u32 %v1843, %v1844
        %v1846 = vsub.s32 4294967266, %v1841
        %v1847 = vadd.s32 %v1846, 127
        %v1848 = vshll.u32 %v1847, 23
        %v1849 = vor.u32 4788187, %v1848
        %v1850 = vand.u32 2147483647, %v1849
        %v1852 = vcvt.s32.f32 %v1845
        %v1853 = vmul.f32 %v1852, %v1850
        %v1854 = vxor.u32 %v1853, 2147483648
        %v1855 = vsel %vm1734, %v1854, %v1853
        %v1856 = vsub.s32 4, %v1832
        %v1857 = vsel %vm1734, %v1856, %v1832
        %v1858 = vsel %vm1733, %v476, %v1855
        %v1859 = vsel %vm1733, 0, %v1857
        %v1860 = vmul.f32 %v1858, %v1858
        %v1861 = vmul.f32 %v1860, -0.001358992
        %v1862 = vadd.f32 %v1861, 0.041655596
        %v1863 = vmul.f32 %v1860, %v1862
        %v1864 = vadd.f32 %v1863, -0.4999988
        %v1865 = vmul.f32 %v1860, %v1864
        %v1866 = vadd.f32 1.0, %v1865
        %v1867 = vmul.f32 %v1858, %v1858
        %v1868 = vmul.f32 %v1867, -0.00019511016
        %v1869 = vadd.f32 %v1868, 0.008332121
        %v1870 = vmul.f32 %v1867, %v1869
        %v1871 = vadd.f32 %v1870, -0.16666654
        %v1872 = vmul.f32 %v1867, %v1871
        %v1873 = vadd.f32 %v1872, 1.0
        %v1874 = vmul.f32 %v1873, %v1858
        %vm1875 = vweird.f32 %v476
        %v1876 = vand.u32 %v1859, 3
        %vm1877 = vcmp.lt.s32.totalorder %v1876, 2
        %vm1878 = vcmp.eq.s32.totalorder %v1876, 0
        %v1879 = vxor.u32 %v1874, 2147483648
        %v1880 = vsel %vm1878, %v1866, %v1879
        %vm1881 = vcmp.eq.s32.totalorder %v1876, 2
        %v1882 = vxor.u32 %v1866, 2147483648
        %v1883 = vsel %vm1881, %v1882, %v1874
        %v1884 = vsel %vm1877, %v1880, %v1883
        %v1885 = vsel %vm1875, nan, %v1884
        %v1886 = vand.u32 2147483647, %v477
        %vm1887 = vcmp.le.f32.partialorder %v1886, 0.7853982
        %vm1888 = vcmp.lt.s32.totalorder %v477, 0
        %v1889 = vand.u32 %v477, 2139095040
        %v1890 = vshrl.u32 %v1889, 23
        %v1891 = vsub.s32 %v1890, 127
        %v1892 = vand.u32 2147483647, %v477
        %v1893 = vand.u32 %v1892, 8388607
        %v1894 = vor.u32 %v1893, 8388608
        %v1895 = vsub.s32 0, %v1894
        %v1896 = vadd.s32 %v1891, 1
        %vm1897 = vcmp.gt.s32.totalorder %v1896, 0
        %v1898 = vsel %vm1897, %v1896, 0
        %v1899 = vshrl.u32 %v1898, 5
        %v1900 = vand.u32 %v1898, 31
        %v1901 = vsub.s32 32, %v1900
        %v1902 = vshrl.u32 683565275, %v1901
        %v1903 = vshll.u32 683565275, %v1900
        %v1904 = vshrl.u32 2475754826, %v1901
        %v1905 = vor.u32 %v1903, %v1904
        %v1906 = vshll.u32 2475754826, %v1900
        %v1907 = vshrl.u32 2131351028, %v1901
        %v1908 = vor.u32 %v1906, %v1907
        %v1909 = vshll.u32 2131351028, %v1900
        %v1910 = vshrl.u32 2102212464, %v1901
        %v1911 = vor.u32 %v1909, %v1910
        %v1912 = vshll.u32 2102212464, %v1900
        %v1913 = vshrl.u32 920167782, %v1901
        %v1914 = vor.u32 %v1912, %v1913
        %v1915 = vshll.u32 920167782, %v1900
        %v1916 = vshrl.u32 1326507024, %v1901
        %v1917 = vor.u32 %v1915, %v1916
        %vm1918 = vcmp.lt.s32.totalorder %v1899, 1
        %vm1919 = vcmp.lt.s32.totalorder %v1899, 2
        %vm1920 = vcmp.lt.s32.totalorder %v1899, 3
        %vm1921 = vcmp.lt.s32.totalorder %v1899, 4
        %v1922 = vsel %vm1918, %v1902, %v1905
        %v1923 = vsel %vm1921, %v1911, 2102212464
        %v1924 = vsel %vm1920, %v1908, %v1923
        %v1925 = vsel %vm1919, %v1922, %v1924
        %v1926 = vsel %vm1918, %v1905, %v1908
        %v1927 = vsel %vm1921, %v1914, 920167782
        %v1928 = vsel %vm1920, %v1911, %v1927
        %v1929 = vsel %vm1919, %v1926, %v1928
        %v1930 = vsel %vm1918, %v1908, %v1911
        %v1931 = vsel %vm1921, %v1917, 1326507024
        %v1932 = vsel %vm1920, %v1914, %v1931
        %v1933 = vsel %vm1919, %v1930, %v1932
        %v1934 = vshll.u32 %v1894, 8
        %v1935 = vand.u32 %v1934, 65535
        %v1936 = vshrl.u32 %v1934, 16
        %v1937 = vand.u32 %v1933, 65535
        %v1938 = vshrl.u32 %v1933, 16
        %v1939 = vmul.u32 %v1935, %v1937
        %v1940 = vmul.u32 %v1935, %v1938
        %v1941 = vmul.u32 %v1936, %v1937
        %v1942 = vmul.u32 %v1936, %v1938
        %v1943 = vshll.u32 %v1940, 16
        %v1944 = vshrl.u32 %v1940, 16
        %v1945 = vshll.u32 %v1941, 16
        %v1946 = vshrl.u32 %v1941, 16
        %vm1947 = vc.u32 %v1939, %v1943
        %v1948 = vsel %vm1947, 1, 0
        %v1949 = vadd.s32 %v1939, %v1943
        %v1950 = vadd.s32 %v1942, %v1948
        %vm1951 = vc.u32 %v1949, %v1945
        %v1952 = vsel %vm1951, 1, 0
        %v1953 = vadd.s32 %v1949, %v1945
        %v1954 = vadd.s32 %v1950, %v1952
        %v1955 = vadd.s32 %v1954, %v1944
        %v1956 = vadd.s32 %v1955, %v1946
        %v1957 = vand.u32 %v1934, 65535
        %v1958 = vshrl.u32 %v1934, 16
        %v1959 = vand.u32 %v1929, 65535
        %v1960 = vshrl.u32 %v1929, 16
        %v1961 = vmul.u32 %v1957, %v1959
        %v1962 = vmul.u32 %v1957, %v1960
        %v1963 = vmul.u32 %v1958, %v1959
        %v1964 = vmul.u32 %v1958, %v1960
        %v1965 = vshll.u32 %v1962, 16
        %v1966 = vshrl.u32 %v1962, 16
        %v1967 = vshll.u32 %v1963, 16
        %v1968 = vshrl.u32 %v1963, 16
        %vm1969 = vc.u32 %v1961, %v1965
        %v1970 = vsel %vm1969, 1, 0
        %v1971 = vadd.s32 %v1961, %v1965
        %v1972 = vadd.s32 %v1964, %v1970
        %vm1973 = vc.u32 %v1971, %v1967
        %v1974 = vsel %vm1973, 1, 0
        %v1975 = vadd.s32 %v1971, %v1967
        %v1976 = vadd.s32 %v1972, %v1974
        %v1977 = vadd.s32 %v1976, %v1966
        %v1978 = vadd.s32 %v1977, %v1968
        %v1979 = vmul.u32 %v1934, %v1925
        %v1980 = vadd.s32 %v1956, %v1975
        %vm1981 = vc.u32 %v1956, %v1975
        %v1982 = vadd.s32 %v1978, 1
        %v1983 = vsel %vm1981, %v1982, %v1978
        %v1984 = vadd.s32 %v1979, %v1983
        %v1985 = vadd.s32 %v1984, 536870912
        %v1986 = vshrl.u32 %v1985, 30
        %v1987 = vshll.u32 %v1986, 30
        %v1988 = vsub.s32 %v1984, %v1987
        %vm1989 = vcmp.lt.s32.totalorder %v1988, 0
        %v1990 = vsub.s32 0, %v1988
        %v1991 = vsel %vm1989, %v1990, %v1988
        %v1992 = vclz %v1991
        %v1993 = vsub.s32 %v1992, 2
        %vm1994 = vcmp.gt.s32.totalorder 0, %v1993
        %v1995 = vsel %vm1994, 0, %v1993
        %v1996 = vsub.s32 32, %v1995
        %v1997 = vshll.u32 %v1988, %v1995
        %v1998 = vshrl.u32 %v1980, %v1996
        %v1999 = vor.u32 %v1997, %v1998
        %v2000 = vsub.s32 4294967266, %v1995
        %v2001 = vadd.s32 %v2000, 127
        %v2002 = vshll.u32 %v2001, 23
        %v2003 = vor.u32 4788187, %v2002
        %v2004 = vand.u32 2147483647, %v2003
        %v2006 = vcvt.s32.f32 %v1999
        %v2007 = vmul.f32 %v2006, %v2004
        %v2008 = vxor.u32 %v2007, 2147483648
        %v2009 = vsel %vm1888, %v2008, %v2007
        %v2010 = vsub.s32 4, %v1986
        %v2011 = vsel %vm1888, %v2010, %v1986
        %v2012 = vsel %vm1887, %v477, %v2009
        %v2013 = vsel %vm1887, 0, %v2011
        %v2014 = vmul.f32 %v2012, %v2012
        %v2015 = vmul.f32 %v2014, -0.001358992
        %v2016 = vadd.f32 %v2015, 0.041655596
        %v2017 = vmul.f32 %v2014, %v2016
        %v2018 = vadd.f32 %v2017, -0.4999988
        %v2019 = vmul.f32 %v2014, %v2018
        %v2020 = vadd.f32 1.0, %v2019
        %v2021 = vmul.f32 %v2012, %v2012
        %v2022 = vmul.f32 %v2021, -0.00019511016
        %v2023 = vadd.f32 %v2022, 0.008332121
        %v2024 = vmul.f32 %v2021, %v2023
        %v2025 = vadd.f32 %v2024, -0.16666654
        %v2026 = vmul.f32 %v2021, %v2025
        %v2027 = vadd.f32 %v2026, 1.0
        %v2028 = vmul.f32 %v2027, %v2012
        %vm2029 = vweird.f32 %v477
        %v2030 = vand.u32 %v2013, 3
        %vm2031 = vcmp.lt.s32.totalorder %v2030, 2
        %vm2032 = vcmp.eq.s32.totalorder %v2030, 0
        %v2033 = vxor.u32 %v2028, 2147483648
        %v2034 = vsel %vm2032, %v2020, %v2033
        %vm2035 = vcmp.eq.s32.totalorder %v2030, 2
        %v2036 = vxor.u32 %v2020, 2147483648
        %v2037 = vsel %vm2035, %v2036, %v2028
        %v2038 = vsel %vm2031, %v2034, %v2037
        %v2039 = vsel %vm2029, nan, %v2038
        %v2040 = vand.u32 2147483647, %v478
        %vm2041 = vcmp.le.f32.partialorder %v2040, 0.7853982
        %vm2042 = vcmp.lt.s32.totalorder %v478, 0
        %v2043 = vand.u32 %v478, 2139095040
        %v2044 = vshrl.u32 %v2043, 23
        %v2045 = vsub.s32 %v2044, 127
        %v2046 = vand.u32 2147483647, %v478
        %v2047 = vand.u32 %v2046, 8388607
        %v2048 = vor.u32 %v2047, 8388608
        %v2049 = vsub.s32 0, %v2048
        %v2050 = vadd.s32 %v2045, 1
        %vm2051 = vcmp.gt.s32.totalorder %v2050, 0
        %v2052 = vsel %vm2051, %v2050, 0
        %v2053 = vshrl.u32 %v2052, 5
        %v2054 = vand.u32 %v2052, 31
        %v2055 = vsub.s32 32, %v2054
        %v2056 = vshrl.u32 683565275, %v2055
        %v2057 = vshll.u32 683565275, %v2054
        %v2058 = vshrl.u32 2475754826, %v2055
        %v2059 = vor.u32 %v2057, %v2058
        %v2060 = vshll.u32 2475754826, %v2054
        %v2061 = vshrl.u32 2131351028, %v2055
        %v2062 = vor.u32 %v2060, %v2061
        %v2063 = vshll.u32 2131351028, %v2054
        %v2064 = vshrl.u32 2102212464, %v2055
        %v2065 = vor.u32 %v2063, %v2064
        %v2066 = vshll.u32 2102212464, %v2054
        %v2067 = vshrl.u32 920167782, %v2055
        %v2068 = vor.u32 %v2066, %v2067
        %v2069 = vshll.u32 920167782, %v2054
        %v2070 = vshrl.u32 1326507024, %v2055
        %v2071 = vor.u32 %v2069, %v2070
        %vm2072 = vcmp.lt.s32.totalorder %v2053, 1
        %vm2073 = vcmp.lt.s32.totalorder %v2053, 2
        %vm2074 = vcmp.lt.s32.totalorder %v2053, 3
        %vm2075 = vcmp.lt.s32.totalorder %v2053, 4
        %v2076 = vsel %vm2072, %v2056, %v2059
        %v2077 = vsel %vm2075, %v2065, 2102212464
        %v2078 = vsel %vm2074, %v2062, %v2077
        %v2079 = vsel %vm2073, %v2076, %v2078
        %v2080 = vsel %vm2072, %v2059, %v2062
        %v2081 = vsel %vm2075, %v2068, 920167782
        %v2082 = vsel %vm2074, %v2065, %v2081
        %v2083 = vsel %vm2073, %v2080, %v2082
        %v2084 = vsel %vm2072, %v2062, %v2065
        %v2085 = vsel %vm2075, %v2071, 1326507024
        %v2086 = vsel %vm2074, %v2068, %v2085
        %v2087 = vsel %vm2073, %v2084, %v2086
        %v2088 = vshll.u32 %v2048, 8
        %v2089 = vand.u32 %v2088, 65535
        %v2090 = vshrl.u32 %v2088, 16
        %v2091 = vand.u32 %v2087, 65535
        %v2092 = vshrl.u32 %v2087, 16
        %v2093 = vmul.u32 %v2089, %v2091
        %v2094 = vmul.u32 %v2089, %v2092
        %v2095 = vmul.u32 %v2090, %v2091
        %v2096 = vmul.u32 %v2090, %v2092
        %v2097 = vshll.u32 %v2094, 16
        %v2098 = vshrl.u32 %v2094, 16
        %v2099 = vshll.u32 %v2095, 16
        %v2100 = vshrl.u32 %v2095, 16
        %vm2101 = vc.u32 %v2093, %v2097
        %v2102 = vsel %vm2101, 1, 0
        %v2103 = vadd.s32 %v2093, %v2097
        %v2104 = vadd.s32 %v2096, %v2102
        %vm2105 = vc.u32 %v2103, %v2099
        %v2106 = vsel %vm2105, 1, 0
        %v2107 = vadd.s32 %v2103, %v2099
        %v2108 = vadd.s32 %v2104, %v2106
        %v2109 = vadd.s32 %v2108, %v2098
        %v2110 = vadd.s32 %v2109, %v2100
        %v2111 = vand.u32 %v2088, 65535
        %v2112 = vshrl.u32 %v2088, 16
        %v2113 = vand.u32 %v2083, 65535
        %v2114 = vshrl.u32 %v2083, 16
        %v2115 = vmul.u32 %v2111, %v2113
        %v2116 = vmul.u32 %v2111, %v2114
        %v2117 = vmul.u32 %v2112, %v2113
        %v2118 = vmul.u32 %v2112, %v2114
        %v2119 = vshll.u32 %v2116, 16
        %v2120 = vshrl.u32 %v2116, 16
        %v2121 = vshll.u32 %v2117, 16
        %v2122 = vshrl.u32 %v2117, 16
        %vm2123 = vc.u32 %v2115, %v2119
        %v2124 = vsel %vm2123, 1, 0
        %v2125 = vadd.s32 %v2115, %v2119
        %v2126 = vadd.s32 %v2118, %v2124
        %vm2127 = vc.u32 %v2125, %v2121
        %v2128 = vsel %vm2127, 1, 0
        %v2129 = vadd.s32 %v2125, %v2121
        %v2130 = vadd.s32 %v2126, %v2128
        %v2131 = vadd.s32 %v2130, %v2120
        %v2132 = vadd.s32 %v2131, %v2122
        %v2133 = vmul.u32 %v2088, %v2079
        %v2134 = vadd.s32 %v2110, %v2129
        %vm2135 = vc.u32 %v2110, %v2129
        %v2136 = vadd.s32 %v2132, 1
        %v2137 = vsel %vm2135, %v2136, %v2132
        %v2138 = vadd.s32 %v2133, %v2137
        %v2139 = vadd.s32 %v2138, 536870912
        %v2140 = vshrl.u32 %v2139, 30
        %v2141 = vshll.u32 %v2140, 30
        %v2142 = vsub.s32 %v2138, %v2141
        %vm2143 = vcmp.lt.s32.totalorder %v2142, 0
        %v2144 = vsub.s32 0, %v2142
        %v2145 = vsel %vm2143, %v2144, %v2142
        %v2146 = vclz %v2145
        %v2147 = vsub.s32 %v2146, 2
        %vm2148 = vcmp.gt.s32.totalorder 0, %v2147
        %v2149 = vsel %vm2148, 0, %v2147
        %v2150 = vsub.s32 32, %v2149
        %v2151 = vshll.u32 %v2142, %v2149
        %v2152 = vshrl.u32 %v2134, %v2150
        %v2153 = vor.u32 %v2151, %v2152
        %v2154 = vsub.s32 4294967266, %v2149
        %v2155 = vadd.s32 %v2154, 127
        %v2156 = vshll.u32 %v2155, 23
        %v2157 = vor.u32 4788187, %v2156
        %v2158 = vand.u32 2147483647, %v2157
        %v2160 = vcvt.s32.f32 %v2153
        %v2161 = vmul.f32 %v2160, %v2158
        %v2162 = vxor.u32 %v2161, 2147483648
        %v2163 = vsel %vm2042, %v2162, %v2161
        %v2164 = vsub.s32 4, %v2140
        %v2165 = vsel %vm2042, %v2164, %v2140
        %v2166 = vsel %vm2041, %v478, %v2163
        %v2167 = vsel %vm2041, 0, %v2165
        %v2168 = vmul.f32 %v2166, %v2166
        %v2169 = vmul.f32 %v2168, -0.001358992
        %v2170 = vadd.f32 %v2169, 0.041655596
        %v2171 = vmul.f32 %v2168, %v2170
        %v2172 = vadd.f32 %v2171, -0.4999988
        %v2173 = vmul.f32 %v2168, %v2172
        %v2174 = vadd.f32 1.0, %v2173
        %v2175 = vmul.f32 %v2166, %v2166
        %v2176 = vmul.f32 %v2175, -0.00019511016
        %v2177 = vadd.f32 %v2176, 0.008332121
        %v2178 = vmul.f32 %v2175, %v2177
        %v2179 = vadd.f32 %v2178, -0.16666654
        %v2180 = vmul.f32 %v2175, %v2179
        %v2181 = vadd.f32 %v2180, 1.0
        %v2182 = vmul.f32 %v2181, %v2166
        %vm2183 = vweird.f32 %v478
        %v2184 = vand.u32 %v2167, 3
        %vm2185 = vcmp.lt.s32.totalorder %v2184, 2
        %vm2186 = vcmp.eq.s32.totalorder %v2184, 0
        %v2187 = vxor.u32 %v2182, 2147483648
        %v2188 = vsel %vm2186, %v2174, %v2187
        %vm2189 = vcmp.eq.s32.totalorder %v2184, 2
        %v2190 = vxor.u32 %v2174, 2147483648
        %v2191 = vsel %vm2189, %v2190, %v2182
        %v2192 = vsel %vm2185, %v2188, %v2191
        %v2193 = vsel %vm2183, nan, %v2192
        %v2194 = vand.u32 2147483647, %v479
        %vm2195 = vcmp.le.f32.partialorder %v2194, 0.7853982
        %vm2196 = vcmp.lt.s32.totalorder %v479, 0
        %v2197 = vand.u32 %v479, 2139095040
        %v2198 = vshrl.u32 %v2197, 23
        %v2199 = vsub.s32 %v2198, 127
        %v2200 = vand.u32 2147483647, %v479
        %v2201 = vand.u32 %v2200, 8388607
        %v2202 = vor.u32 %v2201, 8388608
        %v2203 = vsub.s32 0, %v2202
        %v2204 = vadd.s32 %v2199, 1
        %vm2205 = vcmp.gt.s32.totalorder %v2204, 0
        %v2206 = vsel %vm2205, %v2204, 0
        %v2207 = vshrl.u32 %v2206, 5
        %v2208 = vand.u32 %v2206, 31
        %v2209 = vsub.s32 32, %v2208
        %v2210 = vshrl.u32 683565275, %v2209
        %v2211 = vshll.u32 683565275, %v2208
        %v2212 = vshrl.u32 2475754826, %v2209
        %v2213 = vor.u32 %v2211, %v2212
        %v2214 = vshll.u32 2475754826, %v2208
        %v2215 = vshrl.u32 2131351028, %v2209
        %v2216 = vor.u32 %v2214, %v2215
        %v2217 = vshll.u32 2131351028, %v2208
        %v2218 = vshrl.u32 2102212464, %v2209
        %v2219 = vor.u32 %v2217, %v2218
        %v2220 = vshll.u32 2102212464, %v2208
        %v2221 = vshrl.u32 920167782, %v2209
        %v2222 = vor.u32 %v2220, %v2221
        %v2223 = vshll.u32 920167782, %v2208
        %v2224 = vshrl.u32 1326507024, %v2209
        %v2225 = vor.u32 %v2223, %v2224
        %vm2226 = vcmp.lt.s32.totalorder %v2207, 1
        %vm2227 = vcmp.lt.s32.totalorder %v2207, 2
        %vm2228 = vcmp.lt.s32.totalorder %v2207, 3
        %vm2229 = vcmp.lt.s32.totalorder %v2207, 4
        %v2230 = vsel %vm2226, %v2210, %v2213
        %v2231 = vsel %vm2229, %v2219, 2102212464
        %v2232 = vsel %vm2228, %v2216, %v2231
        %v2233 = vsel %vm2227, %v2230, %v2232
        %v2234 = vsel %vm2226, %v2213, %v2216
        %v2235 = vsel %vm2229, %v2222, 920167782
        %v2236 = vsel %vm2228, %v2219, %v2235
        %v2237 = vsel %vm2227, %v2234, %v2236
        %v2238 = vsel %vm2226, %v2216, %v2219
        %v2239 = vsel %vm2229, %v2225, 1326507024
        %v2240 = vsel %vm2228, %v2222, %v2239
        %v2241 = vsel %vm2227, %v2238, %v2240
        %v2242 = vshll.u32 %v2202, 8
        %v2243 = vand.u32 %v2242, 65535
        %v2244 = vshrl.u32 %v2242, 16
        %v2245 = vand.u32 %v2241, 65535
        %v2246 = vshrl.u32 %v2241, 16
        %v2247 = vmul.u32 %v2243, %v2245
        %v2248 = vmul.u32 %v2243, %v2246
        %v2249 = vmul.u32 %v2244, %v2245
        %v2250 = vmul.u32 %v2244, %v2246
        %v2251 = vshll.u32 %v2248, 16
        %v2252 = vshrl.u32 %v2248, 16
        %v2253 = vshll.u32 %v2249, 16
        %v2254 = vshrl.u32 %v2249, 16
        %vm2255 = vc.u32 %v2247, %v2251
        %v2256 = vsel %vm2255, 1, 0
        %v2257 = vadd.s32 %v2247, %v2251
        %v2258 = vadd.s32 %v2250, %v2256
        %vm2259 = vc.u32 %v2257, %v2253
        %v2260 = vsel %vm2259, 1, 0
        %v2261 = vadd.s32 %v2257, %v2253
        %v2262 = vadd.s32 %v2258, %v2260
        %v2263 = vadd.s32 %v2262, %v2252
        %v2264 = vadd.s32 %v2263, %v2254
        %v2265 = vand.u32 %v2242, 65535
        %v2266 = vshrl.u32 %v2242, 16
        %v2267 = vand.u32 %v2237, 65535
        %v2268 = vshrl.u32 %v2237, 16
        %v2269 = vmul.u32 %v2265, %v2267
        %v2270 = vmul.u32 %v2265, %v2268
        %v2271 = vmul.u32 %v2266, %v2267
        %v2272 = vmul.u32 %v2266, %v2268
        %v2273 = vshll.u32 %v2270, 16
        %v2274 = vshrl.u32 %v2270, 16
        %v2275 = vshll.u32 %v2271, 16
        %v2276 = vshrl.u32 %v2271, 16
        %vm2277 = vc.u32 %v2269, %v2273
        %v2278 = vsel %vm2277, 1, 0
        %v2279 = vadd.s32 %v2269, %v2273
        %v2280 = vadd.s32 %v2272, %v2278
        %vm2281 = vc.u32 %v2279, %v2275
        %v2282 = vsel %vm2281, 1, 0
        %v2283 = vadd.s32 %v2279, %v2275
        %v2284 = vadd.s32 %v2280, %v2282
        %v2285 = vadd.s32 %v2284, %v2274
        %v2286 = vadd.s32 %v2285, %v2276
        %v2287 = vmul.u32 %v2242, %v2233
        %v2288 = vadd.s32 %v2264, %v2283
        %vm2289 = vc.u32 %v2264, %v2283
        %v2290 = vadd.s32 %v2286, 1
        %v2291 = vsel %vm2289, %v2290, %v2286
        %v2292 = vadd.s32 %v2287, %v2291
        %v2293 = vadd.s32 %v2292, 536870912
        %v2294 = vshrl.u32 %v2293, 30
        %v2295 = vshll.u32 %v2294, 30
        %v2296 = vsub.s32 %v2292, %v2295
        %vm2297 = vcmp.lt.s32.totalorder %v2296, 0
        %v2298 = vsub.s32 0, %v2296
        %v2299 = vsel %vm2297, %v2298, %v2296
        %v2300 = vclz %v2299
        %v2301 = vsub.s32 %v2300, 2
        %vm2302 = vcmp.gt.s32.totalorder 0, %v2301
        %v2303 = vsel %vm2302, 0, %v2301
        %v2304 = vsub.s32 32, %v2303
        %v2305 = vshll.u32 %v2296, %v2303
        %v2306 = vshrl.u32 %v2288, %v2304
        %v2307 = vor.u32 %v2305, %v2306
        %v2308 = vsub.s32 4294967266, %v2303
        %v2309 = vadd.s32 %v2308, 127
        %v2310 = vshll.u32 %v2309, 23
        %v2311 = vor.u32 4788187, %v2310
        %v2312 = vand.u32 2147483647, %v2311
        %v2314 = vcvt.s32.f32 %v2307
        %v2315 = vmul.f32 %v2314, %v2312
        %v2316 = vxor.u32 %v2315, 2147483648
        %v2317 = vsel %vm2196, %v2316, %v2315
        %v2318 = vsub.s32 4, %v2294
        %v2319 = vsel %vm2196, %v2318, %v2294
        %v2320 = vsel %vm2195, %v479, %v2317
        %v2321 = vsel %vm2195, 0, %v2319
        %v2322 = vmul.f32 %v2320, %v2320
        %v2323 = vmul.f32 %v2322, -0.001358992
        %v2324 = vadd.f32 %v2323, 0.041655596
        %v2325 = vmul.f32 %v2322, %v2324
        %v2326 = vadd.f32 %v2325, -0.4999988
        %v2327 = vmul.f32 %v2322, %v2326
        %v2328 = vadd.f32 1.0, %v2327
        %v2329 = vmul.f32 %v2320, %v2320
        %v2330 = vmul.f32 %v2329, -0.00019511016
        %v2331 = vadd.f32 %v2330, 0.008332121
        %v2332 = vmul.f32 %v2329, %v2331
        %v2333 = vadd.f32 %v2332, -0.16666654
        %v2334 = vmul.f32 %v2329, %v2333
        %v2335 = vadd.f32 %v2334, 1.0
        %v2336 = vmul.f32 %v2335, %v2320
        %vm2337 = vweird.f32 %v479
        %v2338 = vand.u32 %v2321, 3
        %vm2339 = vcmp.lt.s32.totalorder %v2338, 2
        %vm2340 = vcmp.eq.s32.totalorder %v2338, 0
        %v2341 = vxor.u32 %v2336, 2147483648
        %v2342 = vsel %vm2340, %v2328, %v2341
        %vm2343 = vcmp.eq.s32.totalorder %v2338, 2
        %v2344 = vxor.u32 %v2328, 2147483648
        %v2345 = vsel %vm2343, %v2344, %v2336
        %v2346 = vsel %vm2339, %v2342, %v2345
        %v2347 = vsel %vm2337, nan, %v2346
        %v2348 = vand.u32 2147483647, %v480
        %vm2349 = vcmp.le.f32.partialorder %v2348, 0.7853982
        %vm2350 = vcmp.lt.s32.totalorder %v480, 0
        %v2351 = vand.u32 %v480, 2139095040
        %v2352 = vshrl.u32 %v2351, 23
        %v2353 = vsub.s32 %v2352, 127
        %v2354 = vand.u32 2147483647, %v480
        %v2355 = vand.u32 %v2354, 8388607
        %v2356 = vor.u32 %v2355, 8388608
        %v2357 = vsub.s32 0, %v2356
        %v2358 = vadd.s32 %v2353, 1
        %vm2359 = vcmp.gt.s32.totalorder %v2358, 0
        %v2360 = vsel %vm2359, %v2358, 0
        %v2361 = vshrl.u32 %v2360, 5
        %v2362 = vand.u32 %v2360, 31
        %v2363 = vsub.s32 32, %v2362
        %v2364 = vshrl.u32 683565275, %v2363
        %v2365 = vshll.u32 683565275, %v2362
        %v2366 = vshrl.u32 2475754826, %v2363
        %v2367 = vor.u32 %v2365, %v2366
        %v2368 = vshll.u32 2475754826, %v2362
        %v2369 = vshrl.u32 2131351028, %v2363
        %v2370 = vor.u32 %v2368, %v2369
        %v2371 = vshll.u32 2131351028, %v2362
        %v2372 = vshrl.u32 2102212464, %v2363
        %v2373 = vor.u32 %v2371, %v2372
        %v2374 = vshll.u32 2102212464, %v2362
        %v2375 = vshrl.u32 920167782, %v2363
        %v2376 = vor.u32 %v2374, %v2375
        %v2377 = vshll.u32 920167782, %v2362
        %v2378 = vshrl.u32 1326507024, %v2363
        %v2379 = vor.u32 %v2377, %v2378
        %vm2380 = vcmp.lt.s32.totalorder %v2361, 1
        %vm2381 = vcmp.lt.s32.totalorder %v2361, 2
        %vm2382 = vcmp.lt.s32.totalorder %v2361, 3
        %vm2383 = vcmp.lt.s32.totalorder %v2361, 4
        %v2384 = vsel %vm2380, %v2364, %v2367
        %v2385 = vsel %vm2383, %v2373, 2102212464
        %v2386 = vsel %vm2382, %v2370, %v2385
        %v2387 = vsel %vm2381, %v2384, %v2386
        %v2388 = vsel %vm2380, %v2367, %v2370
        %v2389 = vsel %vm2383, %v2376, 920167782
        %v2390 = vsel %vm2382, %v2373, %v2389
        %v2391 = vsel %vm2381, %v2388, %v2390
        %v2392 = vsel %vm2380, %v2370, %v2373
        %v2393 = vsel %vm2383, %v2379, 1326507024
        %v2394 = vsel %vm2382, %v2376, %v2393
        %v2395 = vsel %vm2381, %v2392, %v2394
        %v2396 = vshll.u32 %v2356, 8
        %v2397 = vand.u32 %v2396, 65535
        %v2398 = vshrl.u32 %v2396, 16
        %v2399 = vand.u32 %v2395, 65535
        %v2400 = vshrl.u32 %v2395, 16
        %v2401 = vmul.u32 %v2397, %v2399
        %v2402 = vmul.u32 %v2397, %v2400
        %v2403 = vmul.u32 %v2398, %v2399
        %v2404 = vmul.u32 %v2398, %v2400
        %v2405 = vshll.u32 %v2402, 16
        %v2406 = vshrl.u32 %v2402, 16
        %v2407 = vshll.u32 %v2403, 16
        %v2408 = vshrl.u32 %v2403, 16
        %vm2409 = vc.u32 %v2401, %v2405
        %v2410 = vsel %vm2409, 1, 0
        %v2411 = vadd.s32 %v2401, %v2405
        %v2412 = vadd.s32 %v2404, %v2410
        %vm2413 = vc.u32 %v2411, %v2407
        %v2414 = vsel %vm2413, 1, 0
        %v2415 = vadd.s32 %v2411, %v2407
        %v2416 = vadd.s32 %v2412, %v2414
        %v2417 = vadd.s32 %v2416, %v2406
        %v2418 = vadd.s32 %v2417, %v2408
        %v2419 = vand.u32 %v2396, 65535
        %v2420 = vshrl.u32 %v2396, 16
        %v2421 = vand.u32 %v2391, 65535
        %v2422 = vshrl.u32 %v2391, 16
        %v2423 = vmul.u32 %v2419, %v2421
        %v2424 = vmul.u32 %v2419, %v2422
        %v2425 = vmul.u32 %v2420, %v2421
        %v2426 = vmul.u32 %v2420, %v2422
        %v2427 = vshll.u32 %v2424, 16
        %v2428 = vshrl.u32 %v2424, 16
        %v2429 = vshll.u32 %v2425, 16
        %v2430 = vshrl.u32 %v2425, 16
        %vm2431 = vc.u32 %v2423, %v2427
        %v2432 = vsel %vm2431, 1, 0
        %v2433 = vadd.s32 %v2423, %v2427
        %v2434 = vadd.s32 %v2426, %v2432
        %vm2435 = vc.u32 %v2433, %v2429
        %v2436 = vsel %vm2435, 1, 0
        %v2437 = vadd.s32 %v2433, %v2429
        %v2438 = vadd.s32 %v2434, %v2436
        %v2439 = vadd.s32 %v2438, %v2428
        %v2440 = vadd.s32 %v2439, %v2430
        %v2441 = vmul.u32 %v2396, %v2387
        %v2442 = vadd.s32 %v2418, %v2437
        %vm2443 = vc.u32 %v2418, %v2437
        %v2444 = vadd.s32 %v2440, 1
        %v2445 = vsel %vm2443, %v2444, %v2440
        %v2446 = vadd.s32 %v2441, %v2445
        %v2447 = vadd.s32 %v2446, 536870912
        %v2448 = vshrl.u32 %v2447, 30
        %v2449 = vshll.u32 %v2448, 30
        %v2450 = vsub.s32 %v2446, %v2449
        %vm2451 = vcmp.lt.s32.totalorder %v2450, 0
        %v2452 = vsub.s32 0, %v2450
        %v2453 = vsel %vm2451, %v2452, %v2450
        %v2454 = vclz %v2453
        %v2455 = vsub.s32 %v2454, 2
        %vm2456 = vcmp.gt.s32.totalorder 0, %v2455
        %v2457 = vsel %vm2456, 0, %v2455
        %v2458 = vsub.s32 32, %v2457
        %v2459 = vshll.u32 %v2450, %v2457
        %v2460 = vshrl.u32 %v2442, %v2458
        %v2461 = vor.u32 %v2459, %v2460
        %v2462 = vsub.s32 4294967266, %v2457
        %v2463 = vadd.s32 %v2462, 127
        %v2464 = vshll.u32 %v2463, 23
        %v2465 = vor.u32 4788187, %v2464
        %v2466 = vand.u32 2147483647, %v2465
        %v2468 = vcvt.s32.f32 %v2461
        %v2469 = vmul.f32 %v2468, %v2466
        %v2470 = vxor.u32 %v2469, 2147483648
        %v2471 = vsel %vm2350, %v2470, %v2469
        %v2472 = vsub.s32 4, %v2448
        %v2473 = vsel %vm2350, %v2472, %v2448
        %v2474 = vsel %vm2349, %v480, %v2471
        %v2475 = vsel %vm2349, 0, %v2473
        %v2476 = vmul.f32 %v2474, %v2474
        %v2477 = vmul.f32 %v2476, -0.001358992
        %v2478 = vadd.f32 %v2477, 0.041655596
        %v2479 = vmul.f32 %v2476, %v2478
        %v2480 = vadd.f32 %v2479, -0.4999988
        %v2481 = vmul.f32 %v2476, %v2480
        %v2482 = vadd.f32 1.0, %v2481
        %v2483 = vmul.f32 %v2474, %v2474
        %v2484 = vmul.f32 %v2483, -0.00019511016
        %v2485 = vadd.f32 %v2484, 0.008332121
        %v2486 = vmul.f32 %v2483, %v2485
        %v2487 = vadd.f32 %v2486, -0.16666654
        %v2488 = vmul.f32 %v2483, %v2487
        %v2489 = vadd.f32 %v2488, 1.0
        %v2490 = vmul.f32 %v2489, %v2474
        %vm2491 = vweird.f32 %v480
        %v2492 = vand.u32 %v2475, 3
        %vm2493 = vcmp.lt.s32.totalorder %v2492, 2
        %vm2494 = vcmp.eq.s32.totalorder %v2492, 0
        %v2495 = vxor.u32 %v2490, 2147483648
        %v2496 = vsel %vm2494, %v2482, %v2495
        %vm2497 = vcmp.eq.s32.totalorder %v2492, 2
        %v2498 = vxor.u32 %v2482, 2147483648
        %v2499 = vsel %vm2497, %v2498, %v2490
        %v2500 = vsel %vm2493, %v2496, %v2499
        %v2501 = vsel %vm2491, nan, %v2500
        %v2502 = vand.u32 2147483647, %v481
        %vm2503 = vcmp.le.f32.partialorder %v2502, 0.7853982
        %vm2504 = vcmp.lt.s32.totalorder %v481, 0
        %v2505 = vand.u32 %v481, 2139095040
        %v2506 = vshrl.u32 %v2505, 23
        %v2507 = vsub.s32 %v2506, 127
        %v2508 = vand.u32 2147483647, %v481
        %v2509 = vand.u32 %v2508, 8388607
        %v2510 = vor.u32 %v2509, 8388608
        %v2511 = vsub.s32 0, %v2510
        %v2512 = vadd.s32 %v2507, 1
        %vm2513 = vcmp.gt.s32.totalorder %v2512, 0
        %v2514 = vsel %vm2513, %v2512, 0
        %v2515 = vshrl.u32 %v2514, 5
        %v2516 = vand.u32 %v2514, 31
        %v2517 = vsub.s32 32, %v2516
        %v2518 = vshrl.u32 683565275, %v2517
        %v2519 = vshll.u32 683565275, %v2516
        %v2520 = vshrl.u32 2475754826, %v2517
        %v2521 = vor.u32 %v2519, %v2520
        %v2522 = vshll.u32 2475754826, %v2516
        %v2523 = vshrl.u32 2131351028, %v2517
        %v2524 = vor.u32 %v2522, %v2523
        %v2525 = vshll.u32 2131351028, %v2516
        %v2526 = vshrl.u32 2102212464, %v2517
        %v2527 = vor.u32 %v2525, %v2526
        %v2528 = vshll.u32 2102212464, %v2516
        %v2529 = vshrl.u32 920167782, %v2517
        %v2530 = vor.u32 %v2528, %v2529
        %v2531 = vshll.u32 920167782, %v2516
        %v2532 = vshrl.u32 1326507024, %v2517
        %v2533 = vor.u32 %v2531, %v2532
        %vm2534 = vcmp.lt.s32.totalorder %v2515, 1
        %vm2535 = vcmp.lt.s32.totalorder %v2515, 2
        %vm2536 = vcmp.lt.s32.totalorder %v2515, 3
        %vm2537 = vcmp.lt.s32.totalorder %v2515, 4
        %v2538 = vsel %vm2534, %v2518, %v2521
        %v2539 = vsel %vm2537, %v2527, 2102212464
        %v2540 = vsel %vm2536, %v2524, %v2539
        %v2541 = vsel %vm2535, %v2538, %v2540
        %v2542 = vsel %vm2534, %v2521, %v2524
        %v2543 = vsel %vm2537, %v2530, 920167782
        %v2544 = vsel %vm2536, %v2527, %v2543
        %v2545 = vsel %vm2535, %v2542, %v2544
        %v2546 = vsel %vm2534, %v2524, %v2527
        %v2547 = vsel %vm2537, %v2533, 1326507024
        %v2548 = vsel %vm2536, %v2530, %v2547
        %v2549 = vsel %vm2535, %v2546, %v2548
        %v2550 = vshll.u32 %v2510, 8
        %v2551 = vand.u32 %v2550, 65535
        %v2552 = vshrl.u32 %v2550, 16
        %v2553 = vand.u32 %v2549, 65535
        %v2554 = vshrl.u32 %v2549, 16
        %v2555 = vmul.u32 %v2551, %v2553
        %v2556 = vmul.u32 %v2551, %v2554
        %v2557 = vmul.u32 %v2552, %v2553
        %v2558 = vmul.u32 %v2552, %v2554
        %v2559 = vshll.u32 %v2556, 16
        %v2560 = vshrl.u32 %v2556, 16
        %v2561 = vshll.u32 %v2557, 16
        %v2562 = vshrl.u32 %v2557, 16
        %vm2563 = vc.u32 %v2555, %v2559
        %v2564 = vsel %vm2563, 1, 0
        %v2565 = vadd.s32 %v2555, %v2559
        %v2566 = vadd.s32 %v2558, %v2564
        %vm2567 = vc.u32 %v2565, %v2561
        %v2568 = vsel %vm2567, 1, 0
        %v2569 = vadd.s32 %v2565, %v2561
        %v2570 = vadd.s32 %v2566, %v2568
        %v2571 = vadd.s32 %v2570, %v2560
        %v2572 = vadd.s32 %v2571, %v2562
        %v2573 = vand.u32 %v2550, 65535
        %v2574 = vshrl.u32 %v2550, 16
        %v2575 = vand.u32 %v2545, 65535
        %v2576 = vshrl.u32 %v2545, 16
        %v2577 = vmul.u32 %v2573, %v2575
        %v2578 = vmul.u32 %v2573, %v2576
        %v2579 = vmul.u32 %v2574, %v2575
        %v2580 = vmul.u32 %v2574, %v2576
        %v2581 = vshll.u32 %v2578, 16
        %v2582 = vshrl.u32 %v2578, 16
        %v2583 = vshll.u32 %v2579, 16
        %v2584 = vshrl.u32 %v2579, 16
        %vm2585 = vc.u32 %v2577, %v2581
        %v2586 = vsel %vm2585, 1, 0
        %v2587 = vadd.s32 %v2577, %v2581
        %v2588 = vadd.s32 %v2580, %v2586
        %vm2589 = vc.u32 %v2587, %v2583
        %v2590 = vsel %vm2589, 1, 0
        %v2591 = vadd.s32 %v2587, %v2583
        %v2592 = vadd.s32 %v2588, %v2590
        %v2593 = vadd.s32 %v2592, %v2582
        %v2594 = vadd.s32 %v2593, %v2584
        %v2595 = vmul.u32 %v2550, %v2541
        %v2596 = vadd.s32 %v2572, %v2591
        %vm2597 = vc.u32 %v2572, %v2591
        %v2598 = vadd.s32 %v2594, 1
        %v2599 = vsel %vm2597, %v2598, %v2594
        %v2600 = vadd.s32 %v2595, %v2599
        %v2601 = vadd.s32 %v2600, 536870912
        %v2602 = vshrl.u32 %v2601, 30
        %v2603 = vshll.u32 %v2602, 30
        %v2604 = vsub.s32 %v2600, %v2603
        %vm2605 = vcmp.lt.s32.totalorder %v2604, 0
        %v2606 = vsub.s32 0, %v2604
        %v2607 = vsel %vm2605, %v2606, %v2604
        %v2608 = vclz %v2607
        %v2609 = vsub.s32 %v2608, 2
        %vm2610 = vcmp.gt.s32.totalorder 0, %v2609
        %v2611 = vsel %vm2610, 0, %v2609
        %v2612 = vsub.s32 32, %v2611
        %v2613 = vshll.u32 %v2604, %v2611
        %v2614 = vshrl.u32 %v2596, %v2612
        %v2615 = vor.u32 %v2613, %v2614
        %v2616 = vsub.s32 4294967266, %v2611
        %v2617 = vadd.s32 %v2616, 127
        %v2618 = vshll.u32 %v2617, 23
        %v2619 = vor.u32 4788187, %v2618
        %v2620 = vand.u32 2147483647, %v2619
        %v2622 = vcvt.s32.f32 %v2615
        %v2623 = vmul.f32 %v2622, %v2620
        %v2624 = vxor.u32 %v2623, 2147483648
        %v2625 = vsel %vm2504, %v2624, %v2623
        %v2626 = vsub.s32 4, %v2602
        %v2627 = vsel %vm2504, %v2626, %v2602
        %v2628 = vsel %vm2503, %v481, %v2625
        %v2629 = vsel %vm2503, 0, %v2627
        %v2630 = vmul.f32 %v2628, %v2628
        %v2631 = vmul.f32 %v2630, -0.001358992
        %v2632 = vadd.f32 %v2631, 0.041655596
        %v2633 = vmul.f32 %v2630, %v2632
        %v2634 = vadd.f32 %v2633, -0.4999988
        %v2635 = vmul.f32 %v2630, %v2634
        %v2636 = vadd.f32 1.0, %v2635
        %v2637 = vmul.f32 %v2628, %v2628
        %v2638 = vmul.f32 %v2637, -0.00019511016
        %v2639 = vadd.f32 %v2638, 0.008332121
        %v2640 = vmul.f32 %v2637, %v2639
        %v2641 = vadd.f32 %v2640, -0.16666654
        %v2642 = vmul.f32 %v2637, %v2641
        %v2643 = vadd.f32 %v2642, 1.0
        %v2644 = vmul.f32 %v2643, %v2628
        %vm2645 = vweird.f32 %v481
        %v2646 = vand.u32 %v2629, 3
        %vm2647 = vcmp.lt.s32.totalorder %v2646, 2
        %vm2648 = vcmp.eq.s32.totalorder %v2646, 0
        %v2649 = vxor.u32 %v2644, 2147483648
        %v2650 = vsel %vm2648, %v2636, %v2649
        %vm2651 = vcmp.eq.s32.totalorder %v2646, 2
        %v2652 = vxor.u32 %v2636, 2147483648
        %v2653 = vsel %vm2651, %v2652, %v2644
        %v2654 = vsel %vm2647, %v2650, %v2653
        %v2655 = vsel %vm2645, nan, %v2654
        %v2656 = vand.u32 2147483647, %v482
        %vm2657 = vcmp.le.f32.partialorder %v2656, 0.7853982
        %vm2658 = vcmp.lt.s32.totalorder %v482, 0
        %v2659 = vand.u32 %v482, 2139095040
        %v2660 = vshrl.u32 %v2659, 23
        %v2661 = vsub.s32 %v2660, 127
        %v2662 = vand.u32 2147483647, %v482
        %v2663 = vand.u32 %v2662, 8388607
        %v2664 = vor.u32 %v2663, 8388608
        %v2665 = vsub.s32 0, %v2664
        %v2666 = vadd.s32 %v2661, 1
        %vm2667 = vcmp.gt.s32.totalorder %v2666, 0
        %v2668 = vsel %vm2667, %v2666, 0
        %v2669 = vshrl.u32 %v2668, 5
        %v2670 = vand.u32 %v2668, 31
        %v2671 = vsub.s32 32, %v2670
        %v2672 = vshrl.u32 683565275, %v2671
        %v2673 = vshll.u32 683565275, %v2670
        %v2674 = vshrl.u32 2475754826, %v2671
        %v2675 = vor.u32 %v2673, %v2674
        %v2676 = vshll.u32 2475754826, %v2670
        %v2677 = vshrl.u32 2131351028, %v2671
        %v2678 = vor.u32 %v2676, %v2677
        %v2679 = vshll.u32 2131351028, %v2670
        %v2680 = vshrl.u32 2102212464, %v2671
        %v2681 = vor.u32 %v2679, %v2680
        %v2682 = vshll.u32 2102212464, %v2670
        %v2683 = vshrl.u32 920167782, %v2671
        %v2684 = vor.u32 %v2682, %v2683
        %v2685 = vshll.u32 920167782, %v2670
        %v2686 = vshrl.u32 1326507024, %v2671
        %v2687 = vor.u32 %v2685, %v2686
        %vm2688 = vcmp.lt.s32.totalorder %v2669, 1
        %vm2689 = vcmp.lt.s32.totalorder %v2669, 2
        %vm2690 = vcmp.lt.s32.totalorder %v2669, 3
        %vm2691 = vcmp.lt.s32.totalorder %v2669, 4
        %v2692 = vsel %vm2688, %v2672, %v2675
        %v2693 = vsel %vm2691, %v2681, 2102212464
        %v2694 = vsel %vm2690, %v2678, %v2693
        %v2695 = vsel %vm2689, %v2692, %v2694
        %v2696 = vsel %vm2688, %v2675, %v2678
        %v2697 = vsel %vm2691, %v2684, 920167782
        %v2698 = vsel %vm2690, %v2681, %v2697
        %v2699 = vsel %vm2689, %v2696, %v2698
        %v2700 = vsel %vm2688, %v2678, %v2681
        %v2701 = vsel %vm2691, %v2687, 1326507024
        %v2702 = vsel %vm2690, %v2684, %v2701
        %v2703 = vsel %vm2689, %v2700, %v2702
        %v2704 = vshll.u32 %v2664, 8
        %v2705 = vand.u32 %v2704, 65535
        %v2706 = vshrl.u32 %v2704, 16
        %v2707 = vand.u32 %v2703, 65535
        %v2708 = vshrl.u32 %v2703, 16
        %v2709 = vmul.u32 %v2705, %v2707
        %v2710 = vmul.u32 %v2705, %v2708
        %v2711 = vmul.u32 %v2706, %v2707
        %v2712 = vmul.u32 %v2706, %v2708
        %v2713 = vshll.u32 %v2710, 16
        %v2714 = vshrl.u32 %v2710, 16
        %v2715 = vshll.u32 %v2711, 16
        %v2716 = vshrl.u32 %v2711, 16
        %vm2717 = vc.u32 %v2709, %v2713
        %v2718 = vsel %vm2717, 1, 0
        %v2719 = vadd.s32 %v2709, %v2713
        %v2720 = vadd.s32 %v2712, %v2718
        %vm2721 = vc.u32 %v2719, %v2715
        %v2722 = vsel %vm2721, 1, 0
        %v2723 = vadd.s32 %v2719, %v2715
        %v2724 = vadd.s32 %v2720, %v2722
        %v2725 = vadd.s32 %v2724, %v2714
        %v2726 = vadd.s32 %v2725, %v2716
        %v2727 = vand.u32 %v2704, 65535
        %v2728 = vshrl.u32 %v2704, 16
        %v2729 = vand.u32 %v2699, 65535
        %v2730 = vshrl.u32 %v2699, 16
        %v2731 = vmul.u32 %v2727, %v2729
        %v2732 = vmul.u32 %v2727, %v2730
        %v2733 = vmul.u32 %v2728, %v2729
        %v2734 = vmul.u32 %v2728, %v2730
        %v2735 = vshll.u32 %v2732, 16
        %v2736 = vshrl.u32 %v2732, 16
        %v2737 = vshll.u32 %v2733, 16
        %v2738 = vshrl.u32 %v2733, 16
        %vm2739 = vc.u32 %v2731, %v2735
        %v2740 = vsel %vm2739, 1, 0
        %v2741 = vadd.s32 %v2731, %v2735
        %v2742 = vadd.s32 %v2734, %v2740
        %vm2743 = vc.u32 %v2741, %v2737
        %v2744 = vsel %vm2743, 1, 0
        %v2745 = vadd.s32 %v2741, %v2737
        %v2746 = vadd.s32 %v2742, %v2744
        %v2747 = vadd.s32 %v2746, %v2736
        %v2748 = vadd.s32 %v2747, %v2738
        %v2749 = vmul.u32 %v2704, %v2695
        %v2750 = vadd.s32 %v2726, %v2745
        %vm2751 = vc.u32 %v2726, %v2745
        %v2752 = vadd.s32 %v2748, 1
        %v2753 = vsel %vm2751, %v2752, %v2748
        %v2754 = vadd.s32 %v2749, %v2753
        %v2755 = vadd.s32 %v2754, 536870912
        %v2756 = vshrl.u32 %v2755, 30
        %v2757 = vshll.u32 %v2756, 30
        %v2758 = vsub.s32 %v2754, %v2757
        %vm2759 = vcmp.lt.s32.totalorder %v2758, 0
        %v2760 = vsub.s32 0, %v2758
        %v2761 = vsel %vm2759, %v2760, %v2758
        %v2762 = vclz %v2761
        %v2763 = vsub.s32 %v2762, 2
        %vm2764 = vcmp.gt.s32.totalorder 0, %v2763
        %v2765 = vsel %vm2764, 0, %v2763
        %v2766 = vsub.s32 32, %v2765
        %v2767 = vshll.u32 %v2758, %v2765
        %v2768 = vshrl.u32 %v2750, %v2766
        %v2769 = vor.u32 %v2767, %v2768
        %v2770 = vsub.s32 4294967266, %v2765
        %v2771 = vadd.s32 %v2770, 127
        %v2772 = vshll.u32 %v2771, 23
        %v2773 = vor.u32 4788187, %v2772
        %v2774 = vand.u32 2147483647, %v2773
        %v2776 = vcvt.s32.f32 %v2769
        %v2777 = vmul.f32 %v2776, %v2774
        %v2778 = vxor.u32 %v2777, 2147483648
        %v2779 = vsel %vm2658, %v2778, %v2777
        %v2780 = vsub.s32 4, %v2756
        %v2781 = vsel %vm2658, %v2780, %v2756
        %v2782 = vsel %vm2657, %v482, %v2779
        %v2783 = vsel %vm2657, 0, %v2781
        %v2784 = vmul.f32 %v2782, %v2782
        %v2785 = vmul.f32 %v2784, -0.001358992
        %v2786 = vadd.f32 %v2785, 0.041655596
        %v2787 = vmul.f32 %v2784, %v2786
        %v2788 = vadd.f32 %v2787, -0.4999988
        %v2789 = vmul.f32 %v2784, %v2788
        %v2790 = vadd.f32 1.0, %v2789
        %v2791 = vmul.f32 %v2782, %v2782
        %v2792 = vmul.f32 %v2791, -0.00019511016
        %v2793 = vadd.f32 %v2792, 0.008332121
        %v2794 = vmul.f32 %v2791, %v2793
        %v2795 = vadd.f32 %v2794, -0.16666654
        %v2796 = vmul.f32 %v2791, %v2795
        %v2797 = vadd.f32 %v2796, 1.0
        %v2798 = vmul.f32 %v2797, %v2782
        %vm2799 = vweird.f32 %v482
        %v2800 = vand.u32 %v2783, 3
        %vm2801 = vcmp.lt.s32.totalorder %v2800, 2
        %vm2802 = vcmp.eq.s32.totalorder %v2800, 0
        %v2803 = vxor.u32 %v2798, 2147483648
        %v2804 = vsel %vm2802, %v2790, %v2803
        %vm2805 = vcmp.eq.s32.totalorder %v2800, 2
        %v2806 = vxor.u32 %v2790, 2147483648
        %v2807 = vsel %vm2805, %v2806, %v2798
        %v2808 = vsel %vm2801, %v2804, %v2807
        %v2809 = vsel %vm2799, nan, %v2808
        %v2810 = vand.u32 2147483647, %v483
        %vm2811 = vcmp.le.f32.partialorder %v2810, 0.7853982
        %vm2812 = vcmp.lt.s32.totalorder %v483, 0
        %v2813 = vand.u32 %v483, 2139095040
        %v2814 = vshrl.u32 %v2813, 23
        %v2815 = vsub.s32 %v2814, 127
        %v2816 = vand.u32 2147483647, %v483
        %v2817 = vand.u32 %v2816, 8388607
        %v2818 = vor.u32 %v2817, 8388608
        %v2819 = vsub.s32 0, %v2818
        %v2820 = vadd.s32 %v2815, 1
        %vm2821 = vcmp.gt.s32.totalorder %v2820, 0
        %v2822 = vsel %vm2821, %v2820, 0
        %v2823 = vshrl.u32 %v2822, 5
        %v2824 = vand.u32 %v2822, 31
        %v2825 = vsub.s32 32, %v2824
        %v2826 = vshrl.u32 683565275, %v2825
        %v2827 = vshll.u32 683565275, %v2824
        %v2828 = vshrl.u32 2475754826, %v2825
        %v2829 = vor.u32 %v2827, %v2828
        %v2830 = vshll.u32 2475754826, %v2824
        %v2831 = vshrl.u32 2131351028, %v2825
        %v2832 = vor.u32 %v2830, %v2831
        %v2833 = vshll.u32 2131351028, %v2824
        %v2834 = vshrl.u32 2102212464, %v2825
        %v2835 = vor.u32 %v2833, %v2834
        %v2836 = vshll.u32 2102212464, %v2824
        %v2837 = vshrl.u32 920167782, %v2825
        %v2838 = vor.u32 %v2836, %v2837
        %v2839 = vshll.u32 920167782, %v2824
        %v2840 = vshrl.u32 1326507024, %v2825
        %v2841 = vor.u32 %v2839, %v2840
        %vm2842 = vcmp.lt.s32.totalorder %v2823, 1
        %vm2843 = vcmp.lt.s32.totalorder %v2823, 2
        %vm2844 = vcmp.lt.s32.totalorder %v2823, 3
        %vm2845 = vcmp.lt.s32.totalorder %v2823, 4
        %v2846 = vsel %vm2842, %v2826, %v2829
        %v2847 = vsel %vm2845, %v2835, 2102212464
        %v2848 = vsel %vm2844, %v2832, %v2847
        %v2849 = vsel %vm2843, %v2846, %v2848
        %v2850 = vsel %vm2842, %v2829, %v2832
        %v2851 = vsel %vm2845, %v2838, 920167782
        %v2852 = vsel %vm2844, %v2835, %v2851
        %v2853 = vsel %vm2843, %v2850, %v2852
        %v2854 = vsel %vm2842, %v2832, %v2835
        %v2855 = vsel %vm2845, %v2841, 1326507024
        %v2856 = vsel %vm2844, %v2838, %v2855
        %v2857 = vsel %vm2843, %v2854, %v2856
        %v2858 = vshll.u32 %v2818, 8
        %v2859 = vand.u32 %v2858, 65535
        %v2860 = vshrl.u32 %v2858, 16
        %v2861 = vand.u32 %v2857, 65535
        %v2862 = vshrl.u32 %v2857, 16
        %v2863 = vmul.u32 %v2859, %v2861
        %v2864 = vmul.u32 %v2859, %v2862
        %v2865 = vmul.u32 %v2860, %v2861
        %v2866 = vmul.u32 %v2860, %v2862
        %v2867 = vshll.u32 %v2864, 16
        %v2868 = vshrl.u32 %v2864, 16
        %v2869 = vshll.u32 %v2865, 16
        %v2870 = vshrl.u32 %v2865, 16
        %vm2871 = vc.u32 %v2863, %v2867
        %v2872 = vsel %vm2871, 1, 0
        %v2873 = vadd.s32 %v2863, %v2867
        %v2874 = vadd.s32 %v2866, %v2872
        %vm2875 = vc.u32 %v2873, %v2869
        %v2876 = vsel %vm2875, 1, 0
        %v2877 = vadd.s32 %v2873, %v2869
        %v2878 = vadd.s32 %v2874, %v2876
        %v2879 = vadd.s32 %v2878, %v2868
        %v2880 = vadd.s32 %v2879, %v2870
        %v2881 = vand.u32 %v2858, 65535
        %v2882 = vshrl.u32 %v2858, 16
        %v2883 = vand.u32 %v2853, 65535
        %v2884 = vshrl.u32 %v2853, 16
        %v2885 = vmul.u32 %v2881, %v2883
        %v2886 = vmul.u32 %v2881, %v2884
        %v2887 = vmul.u32 %v2882, %v2883
        %v2888 = vmul.u32 %v2882, %v2884
        %v2889 = vshll.u32 %v2886, 16
        %v2890 = vshrl.u32 %v2886, 16
        %v2891 = vshll.u32 %v2887, 16
        %v2892 = vshrl.u32 %v2887, 16
        %vm2893 = vc.u32 %v2885, %v2889
        %v2894 = vsel %vm2893, 1, 0
        %v2895 = vadd.s32 %v2885, %v2889
        %v2896 = vadd.s32 %v2888, %v2894
        %vm2897 = vc.u32 %v2895, %v2891
        %v2898 = vsel %vm2897, 1, 0
        %v2899 = vadd.s32 %v2895, %v2891
        %v2900 = vadd.s32 %v2896, %v2898
        %v2901 = vadd.s32 %v2900, %v2890
        %v2902 = vadd.s32 %v2901, %v2892
        %v2903 = vmul.u32 %v2858, %v2849
        %v2904 = vadd.s32 %v2880, %v2899
        %vm2905 = vc.u32 %v2880, %v2899
        %v2906 = vadd.s32 %v2902, 1
        %v2907 = vsel %vm2905, %v2906, %v2902
        %v2908 = vadd.s32 %v2903, %v2907
        %v2909 = vadd.s32 %v2908, 536870912
        %v2910 = vshrl.u32 %v2909, 30
        %v2911 = vshll.u32 %v2910, 30
        %v2912 = vsub.s32 %v2908, %v2911
        %vm2913 = vcmp.lt.s32.totalorder %v2912, 0
        %v2914 = vsub.s32 0, %v2912
        %v2915 = vsel %vm2913, %v2914, %v2912
        %v2916 = vclz %v2915
        %v2917 = vsub.s32 %v2916, 2
        %vm2918 = vcmp.gt.s32.totalorder 0, %v2917
        %v2919 = vsel %vm2918, 0, %v2917
        %v2920 = vsub.s32 32, %v2919
        %v2921 = vshll.u32 %v2912, %v2919
        %v2922 = vshrl.u32 %v2904, %v2920
        %v2923 = vor.u32 %v2921, %v2922
        %v2924 = vsub.s32 4294967266, %v2919
        %v2925 = vadd.s32 %v2924, 127
        %v2926 = vshll.u32 %v2925, 23
        %v2927 = vor.u32 4788187, %v2926
        %v2928 = vand.u32 2147483647, %v2927
        %v2930 = vcvt.s32.f32 %v2923
        %v2931 = vmul.f32 %v2930, %v2928
        %v2932 = vxor.u32 %v2931, 2147483648
        %v2933 = vsel %vm2812, %v2932, %v2931
        %v2934 = vsub.s32 4, %v2910
        %v2935 = vsel %vm2812, %v2934, %v2910
        %v2936 = vsel %vm2811, %v483, %v2933
        %v2937 = vsel %vm2811, 0, %v2935
        %v2938 = vmul.f32 %v2936, %v2936
        %v2939 = vmul.f32 %v2938, -0.001358992
        %v2940 = vadd.f32 %v2939, 0.041655596
        %v2941 = vmul.f32 %v2938, %v2940
        %v2942 = vadd.f32 %v2941, -0.4999988
        %v2943 = vmul.f32 %v2938, %v2942
        %v2944 = vadd.f32 1.0, %v2943
        %v2945 = vmul.f32 %v2936, %v2936
        %v2946 = vmul.f32 %v2945, -0.00019511016
        %v2947 = vadd.f32 %v2946, 0.008332121
        %v2948 = vmul.f32 %v2945, %v2947
        %v2949 = vadd.f32 %v2948, -0.16666654
        %v2950 = vmul.f32 %v2945, %v2949
        %v2951 = vadd.f32 %v2950, 1.0
        %v2952 = vmul.f32 %v2951, %v2936
        %vm2953 = vweird.f32 %v483
        %v2954 = vand.u32 %v2937, 3
        %vm2955 = vcmp.lt.s32.totalorder %v2954, 2
        %vm2956 = vcmp.eq.s32.totalorder %v2954, 0
        %v2957 = vxor.u32 %v2952, 2147483648
        %v2958 = vsel %vm2956, %v2944, %v2957
        %vm2959 = vcmp.eq.s32.totalorder %v2954, 2
        %v2960 = vxor.u32 %v2944, 2147483648
        %v2961 = vsel %vm2959, %v2960, %v2952
        %v2962 = vsel %vm2955, %v2958, %v2961
        %v2963 = vsel %vm2953, nan, %v2962
        %v2964 = vand.u32 2147483647, %v484
        %vm2965 = vcmp.le.f32.partialorder %v2964, 0.7853982
        %vm2966 = vcmp.lt.s32.totalorder %v484, 0
        %v2967 = vand.u32 %v484, 2139095040
        %v2968 = vshrl.u32 %v2967, 23
        %v2969 = vsub.s32 %v2968, 127
        %v2970 = vand.u32 2147483647, %v484
        %v2971 = vand.u32 %v2970, 8388607
        %v2972 = vor.u32 %v2971, 8388608
        %v2973 = vsub.s32 0, %v2972
        %v2974 = vadd.s32 %v2969, 1
        %vm2975 = vcmp.gt.s32.totalorder %v2974, 0
        %v2976 = vsel %vm2975, %v2974, 0
        %v2977 = vshrl.u32 %v2976, 5
        %v2978 = vand.u32 %v2976, 31
        %v2979 = vsub.s32 32, %v2978
        %v2980 = vshrl.u32 683565275, %v2979
        %v2981 = vshll.u32 683565275, %v2978
        %v2982 = vshrl.u32 2475754826, %v2979
        %v2983 = vor.u32 %v2981, %v2982
        %v2984 = vshll.u32 2475754826, %v2978
        %v2985 = vshrl.u32 2131351028, %v2979
        %v2986 = vor.u32 %v2984, %v2985
        %v2987 = vshll.u32 2131351028, %v2978
        %v2988 = vshrl.u32 2102212464, %v2979
        %v2989 = vor.u32 %v2987, %v2988
        %v2990 = vshll.u32 2102212464, %v2978
        %v2991 = vshrl.u32 920167782, %v2979
        %v2992 = vor.u32 %v2990, %v2991
        %v2993 = vshll.u32 920167782, %v2978
        %v2994 = vshrl.u32 1326507024, %v2979
        %v2995 = vor.u32 %v2993, %v2994
        %vm2996 = vcmp.lt.s32.totalorder %v2977, 1
        %vm2997 = vcmp.lt.s32.totalorder %v2977, 2
        %vm2998 = vcmp.lt.s32.totalorder %v2977, 3
        %vm2999 = vcmp.lt.s32.totalorder %v2977, 4
        %v3000 = vsel %vm2996, %v2980, %v2983
        %v3001 = vsel %vm2999, %v2989, 2102212464
        %v3002 = vsel %vm2998, %v2986, %v3001
        %v3003 = vsel %vm2997, %v3000, %v3002
        %v3004 = vsel %vm2996, %v2983, %v2986
        %v3005 = vsel %vm2999, %v2992, 920167782
        %v3006 = vsel %vm2998, %v2989, %v3005
        %v3007 = vsel %vm2997, %v3004, %v3006
        %v3008 = vsel %vm2996, %v2986, %v2989
        %v3009 = vsel %vm2999, %v2995, 1326507024
        %v3010 = vsel %vm2998, %v2992, %v3009
        %v3011 = vsel %vm2997, %v3008, %v3010
        %v3012 = vshll.u32 %v2972, 8
        %v3013 = vand.u32 %v3012, 65535
        %v3014 = vshrl.u32 %v3012, 16
        %v3015 = vand.u32 %v3011, 65535
        %v3016 = vshrl.u32 %v3011, 16
        %v3017 = vmul.u32 %v3013, %v3015
        %v3018 = vmul.u32 %v3013, %v3016
        %v3019 = vmul.u32 %v3014, %v3015
        %v3020 = vmul.u32 %v3014, %v3016
        %v3021 = vshll.u32 %v3018, 16
        %v3022 = vshrl.u32 %v3018, 16
        %v3023 = vshll.u32 %v3019, 16
        %v3024 = vshrl.u32 %v3019, 16
        %vm3025 = vc.u32 %v3017, %v3021
        %v3026 = vsel %vm3025, 1, 0
        %v3027 = vadd.s32 %v3017, %v3021
        %v3028 = vadd.s32 %v3020, %v3026
        %vm3029 = vc.u32 %v3027, %v3023
        %v3030 = vsel %vm3029, 1, 0
        %v3031 = vadd.s32 %v3027, %v3023
        %v3032 = vadd.s32 %v3028, %v3030
        %v3033 = vadd.s32 %v3032, %v3022
        %v3034 = vadd.s32 %v3033, %v3024
        %v3035 = vand.u32 %v3012, 65535
        %v3036 = vshrl.u32 %v3012, 16
        %v3037 = vand.u32 %v3007, 65535
        %v3038 = vshrl.u32 %v3007, 16
        %v3039 = vmul.u32 %v3035, %v3037
        %v3040 = vmul.u32 %v3035, %v3038
        %v3041 = vmul.u32 %v3036, %v3037
        %v3042 = vmul.u32 %v3036, %v3038
        %v3043 = vshll.u32 %v3040, 16
        %v3044 = vshrl.u32 %v3040, 16
        %v3045 = vshll.u32 %v3041, 16
        %v3046 = vshrl.u32 %v3041, 16
        %vm3047 = vc.u32 %v3039, %v3043
        %v3048 = vsel %vm3047, 1, 0
        %v3049 = vadd.s32 %v3039, %v3043
        %v3050 = vadd.s32 %v3042, %v3048
        %vm3051 = vc.u32 %v3049, %v3045
        %v3052 = vsel %vm3051, 1, 0
        %v3053 = vadd.s32 %v3049, %v3045
        %v3054 = vadd.s32 %v3050, %v3052
        %v3055 = vadd.s32 %v3054, %v3044
        %v3056 = vadd.s32 %v3055, %v3046
        %v3057 = vmul.u32 %v3012, %v3003
        %v3058 = vadd.s32 %v3034, %v3053
        %vm3059 = vc.u32 %v3034, %v3053
        %v3060 = vadd.s32 %v3056, 1
        %v3061 = vsel %vm3059, %v3060, %v3056
        %v3062 = vadd.s32 %v3057, %v3061
        %v3063 = vadd.s32 %v3062, 536870912
        %v3064 = vshrl.u32 %v3063, 30
        %v3065 = vshll.u32 %v3064, 30
        %v3066 = vsub.s32 %v3062, %v3065
        %vm3067 = vcmp.lt.s32.totalorder %v3066, 0
        %v3068 = vsub.s32 0, %v3066
        %v3069 = vsel %vm3067, %v3068, %v3066
        %v3070 = vclz %v3069
        %v3071 = vsub.s32 %v3070, 2
        %vm3072 = vcmp.gt.s32.totalorder 0, %v3071
        %v3073 = vsel %vm3072, 0, %v3071
        %v3074 = vsub.s32 32, %v3073
        %v3075 = vshll.u32 %v3066, %v3073
        %v3076 = vshrl.u32 %v3058, %v3074
        %v3077 = vor.u32 %v3075, %v3076
        %v3078 = vsub.s32 4294967266, %v3073
        %v3079 = vadd.s32 %v3078, 127
        %v3080 = vshll.u32 %v3079, 23
        %v3081 = vor.u32 4788187, %v3080
        %v3082 = vand.u32 2147483647, %v3081
        %v3084 = vcvt.s32.f32 %v3077
        %v3085 = vmul.f32 %v3084, %v3082
        %v3086 = vxor.u32 %v3085, 2147483648
        %v3087 = vsel %vm2966, %v3086, %v3085
        %v3088 = vsub.s32 4, %v3064
        %v3089 = vsel %vm2966, %v3088, %v3064
        %v3090 = vsel %vm2965, %v484, %v3087
        %v3091 = vsel %vm2965, 0, %v3089
        %v3092 = vmul.f32 %v3090, %v3090
        %v3093 = vmul.f32 %v3092, -0.001358992
        %v3094 = vadd.f32 %v3093, 0.041655596
        %v3095 = vmul.f32 %v3092, %v3094
        %v3096 = vadd.f32 %v3095, -0.4999988
        %v3097 = vmul.f32 %v3092, %v3096
        %v3098 = vadd.f32 1.0, %v3097
        %v3099 = vmul.f32 %v3090, %v3090
        %v3100 = vmul.f32 %v3099, -0.00019511016
        %v3101 = vadd.f32 %v3100, 0.008332121
        %v3102 = vmul.f32 %v3099, %v3101
        %v3103 = vadd.f32 %v3102, -0.16666654
        %v3104 = vmul.f32 %v3099, %v3103
        %v3105 = vadd.f32 %v3104, 1.0
        %v3106 = vmul.f32 %v3105, %v3090
        %vm3107 = vweird.f32 %v484
        %v3108 = vand.u32 %v3091, 3
        %vm3109 = vcmp.lt.s32.totalorder %v3108, 2
        %vm3110 = vcmp.eq.s32.totalorder %v3108, 0
        %v3111 = vxor.u32 %v3106, 2147483648
        %v3112 = vsel %vm3110, %v3098, %v3111
        %vm3113 = vcmp.eq.s32.totalorder %v3108, 2
        %v3114 = vxor.u32 %v3098, 2147483648
        %v3115 = vsel %vm3113, %v3114, %v3106
        %v3116 = vsel %vm3109, %v3112, %v3115
        %v3117 = vsel %vm3107, nan, %v3116
        %v3118 = vand.u32 2147483647, %v485
        %vm3119 = vcmp.le.f32.partialorder %v3118, 0.7853982
        %vm3120 = vcmp.lt.s32.totalorder %v485, 0
        %v3121 = vand.u32 %v485, 2139095040
        %v3122 = vshrl.u32 %v3121, 23
        %v3123 = vsub.s32 %v3122, 127
        %v3124 = vand.u32 2147483647, %v485
        %v3125 = vand.u32 %v3124, 8388607
        %v3126 = vor.u32 %v3125, 8388608
        %v3127 = vsub.s32 0, %v3126
        %v3128 = vadd.s32 %v3123, 1
        %vm3129 = vcmp.gt.s32.totalorder %v3128, 0
        %v3130 = vsel %vm3129, %v3128, 0
        %v3131 = vshrl.u32 %v3130, 5
        %v3132 = vand.u32 %v3130, 31
        %v3133 = vsub.s32 32, %v3132
        %v3134 = vshrl.u32 683565275, %v3133
        %v3135 = vshll.u32 683565275, %v3132
        %v3136 = vshrl.u32 2475754826, %v3133
        %v3137 = vor.u32 %v3135, %v3136
        %v3138 = vshll.u32 2475754826, %v3132
        %v3139 = vshrl.u32 2131351028, %v3133
        %v3140 = vor.u32 %v3138, %v3139
        %v3141 = vshll.u32 2131351028, %v3132
        %v3142 = vshrl.u32 2102212464, %v3133
        %v3143 = vor.u32 %v3141, %v3142
        %v3144 = vshll.u32 2102212464, %v3132
        %v3145 = vshrl.u32 920167782, %v3133
        %v3146 = vor.u32 %v3144, %v3145
        %v3147 = vshll.u32 920167782, %v3132
        %v3148 = vshrl.u32 1326507024, %v3133
        %v3149 = vor.u32 %v3147, %v3148
        %vm3150 = vcmp.lt.s32.totalorder %v3131, 1
        %vm3151 = vcmp.lt.s32.totalorder %v3131, 2
        %vm3152 = vcmp.lt.s32.totalorder %v3131, 3
        %vm3153 = vcmp.lt.s32.totalorder %v3131, 4
        %v3154 = vsel %vm3150, %v3134, %v3137
        %v3155 = vsel %vm3153, %v3143, 2102212464
        %v3156 = vsel %vm3152, %v3140, %v3155
        %v3157 = vsel %vm3151, %v3154, %v3156
        %v3158 = vsel %vm3150, %v3137, %v3140
        %v3159 = vsel %vm3153, %v3146, 920167782
        %v3160 = vsel %vm3152, %v3143, %v3159
        %v3161 = vsel %vm3151, %v3158, %v3160
        %v3162 = vsel %vm3150, %v3140, %v3143
        %v3163 = vsel %vm3153, %v3149, 1326507024
        %v3164 = vsel %vm3152, %v3146, %v3163
        %v3165 = vsel %vm3151, %v3162, %v3164
        %v3166 = vshll.u32 %v3126, 8
        %v3167 = vand.u32 %v3166, 65535
        %v3168 = vshrl.u32 %v3166, 16
        %v3169 = vand.u32 %v3165, 65535
        %v3170 = vshrl.u32 %v3165, 16
        %v3171 = vmul.u32 %v3167, %v3169
        %v3172 = vmul.u32 %v3167, %v3170
        %v3173 = vmul.u32 %v3168, %v3169
        %v3174 = vmul.u32 %v3168, %v3170
        %v3175 = vshll.u32 %v3172, 16
        %v3176 = vshrl.u32 %v3172, 16
        %v3177 = vshll.u32 %v3173, 16
        %v3178 = vshrl.u32 %v3173, 16
        %vm3179 = vc.u32 %v3171, %v3175
        %v3180 = vsel %vm3179, 1, 0
        %v3181 = vadd.s32 %v3171, %v3175
        %v3182 = vadd.s32 %v3174, %v3180
        %vm3183 = vc.u32 %v3181, %v3177
        %v3184 = vsel %vm3183, 1, 0
        %v3185 = vadd.s32 %v3181, %v3177
        %v3186 = vadd.s32 %v3182, %v3184
        %v3187 = vadd.s32 %v3186, %v3176
        %v3188 = vadd.s32 %v3187, %v3178
        %v3189 = vand.u32 %v3166, 65535
        %v3190 = vshrl.u32 %v3166, 16
        %v3191 = vand.u32 %v3161, 65535
        %v3192 = vshrl.u32 %v3161, 16
        %v3193 = vmul.u32 %v3189, %v3191
        %v3194 = vmul.u32 %v3189, %v3192
        %v3195 = vmul.u32 %v3190, %v3191
        %v3196 = vmul.u32 %v3190, %v3192
        %v3197 = vshll.u32 %v3194, 16
        %v3198 = vshrl.u32 %v3194, 16
        %v3199 = vshll.u32 %v3195, 16
        %v3200 = vshrl.u32 %v3195, 16
        %vm3201 = vc.u32 %v3193, %v3197
        %v3202 = vsel %vm3201, 1, 0
        %v3203 = vadd.s32 %v3193, %v3197
        %v3204 = vadd.s32 %v3196, %v3202
        %vm3205 = vc.u32 %v3203, %v3199
        %v3206 = vsel %vm3205, 1, 0
        %v3207 = vadd.s32 %v3203, %v3199
        %v3208 = vadd.s32 %v3204, %v3206
        %v3209 = vadd.s32 %v3208, %v3198
        %v3210 = vadd.s32 %v3209, %v3200
        %v3211 = vmul.u32 %v3166, %v3157
        %v3212 = vadd.s32 %v3188, %v3207
        %vm3213 = vc.u32 %v3188, %v3207
        %v3214 = vadd.s32 %v3210, 1
        %v3215 = vsel %vm3213, %v3214, %v3210
        %v3216 = vadd.s32 %v3211, %v3215
        %v3217 = vadd.s32 %v3216, 536870912
        %v3218 = vshrl.u32 %v3217, 30
        %v3219 = vshll.u32 %v3218, 30
        %v3220 = vsub.s32 %v3216, %v3219
        %vm3221 = vcmp.lt.s32.totalorder %v3220, 0
        %v3222 = vsub.s32 0, %v3220
        %v3223 = vsel %vm3221, %v3222, %v3220
        %v3224 = vclz %v3223
        %v3225 = vsub.s32 %v3224, 2
        %vm3226 = vcmp.gt.s32.totalorder 0, %v3225
        %v3227 = vsel %vm3226, 0, %v3225
        %v3228 = vsub.s32 32, %v3227
        %v3229 = vshll.u32 %v3220, %v3227
        %v3230 = vshrl.u32 %v3212, %v3228
        %v3231 = vor.u32 %v3229, %v3230
        %v3232 = vsub.s32 4294967266, %v3227
        %v3233 = vadd.s32 %v3232, 127
        %v3234 = vshll.u32 %v3233, 23
        %v3235 = vor.u32 4788187, %v3234
        %v3236 = vand.u32 2147483647, %v3235
        %v3238 = vcvt.s32.f32 %v3231
        %v3239 = vmul.f32 %v3238, %v3236
        %v3240 = vxor.u32 %v3239, 2147483648
        %v3241 = vsel %vm3120, %v3240, %v3239
        %v3242 = vsub.s32 4, %v3218
        %v3243 = vsel %vm3120, %v3242, %v3218
        %v3244 = vsel %vm3119, %v485, %v3241
        %v3245 = vsel %vm3119, 0, %v3243
        %v3246 = vmul.f32 %v3244, %v3244
        %v3247 = vmul.f32 %v3246, -0.001358992
        %v3248 = vadd.f32 %v3247, 0.041655596
        %v3249 = vmul.f32 %v3246, %v3248
        %v3250 = vadd.f32 %v3249, -0.4999988
        %v3251 = vmul.f32 %v3246, %v3250
        %v3252 = vadd.f32 1.0, %v3251
        %v3253 = vmul.f32 %v3244, %v3244
        %v3254 = vmul.f32 %v3253, -0.00019511016
        %v3255 = vadd.f32 %v3254, 0.008332121
        %v3256 = vmul.f32 %v3253, %v3255
        %v3257 = vadd.f32 %v3256, -0.16666654
        %v3258 = vmul.f32 %v3253, %v3257
        %v3259 = vadd.f32 %v3258, 1.0
        %v3260 = vmul.f32 %v3259, %v3244
        %vm3261 = vweird.f32 %v485
        %v3262 = vand.u32 %v3245, 3
        %vm3263 = vcmp.lt.s32.totalorder %v3262, 2
        %vm3264 = vcmp.eq.s32.totalorder %v3262, 0
        %v3265 = vxor.u32 %v3260, 2147483648
        %v3266 = vsel %vm3264, %v3252, %v3265
        %vm3267 = vcmp.eq.s32.totalorder %v3262, 2
        %v3268 = vxor.u32 %v3252, 2147483648
        %v3269 = vsel %vm3267, %v3268, %v3260
        %v3270 = vsel %vm3263, %v3266, %v3269
        %v3271 = vsel %vm3261, nan, %v3270
        %v3272 = vand.u32 2147483647, %v486
        %vm3273 = vcmp.le.f32.partialorder %v3272, 0.7853982
        %vm3274 = vcmp.lt.s32.totalorder %v486, 0
        %v3275 = vand.u32 %v486, 2139095040
        %v3276 = vshrl.u32 %v3275, 23
        %v3277 = vsub.s32 %v3276, 127
        %v3278 = vand.u32 2147483647, %v486
        %v3279 = vand.u32 %v3278, 8388607
        %v3280 = vor.u32 %v3279, 8388608
        %v3281 = vsub.s32 0, %v3280
        %v3282 = vadd.s32 %v3277, 1
        %vm3283 = vcmp.gt.s32.totalorder %v3282, 0
        %v3284 = vsel %vm3283, %v3282, 0
        %v3285 = vshrl.u32 %v3284, 5
        %v3286 = vand.u32 %v3284, 31
        %v3287 = vsub.s32 32, %v3286
        %v3288 = vshrl.u32 683565275, %v3287
        %v3289 = vshll.u32 683565275, %v3286
        %v3290 = vshrl.u32 2475754826, %v3287
        %v3291 = vor.u32 %v3289, %v3290
        %v3292 = vshll.u32 2475754826, %v3286
        %v3293 = vshrl.u32 2131351028, %v3287
        %v3294 = vor.u32 %v3292, %v3293
        %v3295 = vshll.u32 2131351028, %v3286
        %v3296 = vshrl.u32 2102212464, %v3287
        %v3297 = vor.u32 %v3295, %v3296
        %v3298 = vshll.u32 2102212464, %v3286
        %v3299 = vshrl.u32 920167782, %v3287
        %v3300 = vor.u32 %v3298, %v3299
        %v3301 = vshll.u32 920167782, %v3286
        %v3302 = vshrl.u32 1326507024, %v3287
        %v3303 = vor.u32 %v3301, %v3302
        %vm3304 = vcmp.lt.s32.totalorder %v3285, 1
        %vm3305 = vcmp.lt.s32.totalorder %v3285, 2
        %vm3306 = vcmp.lt.s32.totalorder %v3285, 3
        %vm3307 = vcmp.lt.s32.totalorder %v3285, 4
        %v3308 = vsel %vm3304, %v3288, %v3291
        %v3309 = vsel %vm3307, %v3297, 2102212464
        %v3310 = vsel %vm3306, %v3294, %v3309
        %v3311 = vsel %vm3305, %v3308, %v3310
        %v3312 = vsel %vm3304, %v3291, %v3294
        %v3313 = vsel %vm3307, %v3300, 920167782
        %v3314 = vsel %vm3306, %v3297, %v3313
        %v3315 = vsel %vm3305, %v3312, %v3314
        %v3316 = vsel %vm3304, %v3294, %v3297
        %v3317 = vsel %vm3307, %v3303, 1326507024
        %v3318 = vsel %vm3306, %v3300, %v3317
        %v3319 = vsel %vm3305, %v3316, %v3318
        %v3320 = vshll.u32 %v3280, 8
        %v3321 = vand.u32 %v3320, 65535
        %v3322 = vshrl.u32 %v3320, 16
        %v3323 = vand.u32 %v3319, 65535
        %v3324 = vshrl.u32 %v3319, 16
        %v3325 = vmul.u32 %v3321, %v3323
        %v3326 = vmul.u32 %v3321, %v3324
        %v3327 = vmul.u32 %v3322, %v3323
        %v3328 = vmul.u32 %v3322, %v3324
        %v3329 = vshll.u32 %v3326, 16
        %v3330 = vshrl.u32 %v3326, 16
        %v3331 = vshll.u32 %v3327, 16
        %v3332 = vshrl.u32 %v3327, 16
        %vm3333 = vc.u32 %v3325, %v3329
        %v3334 = vsel %vm3333, 1, 0
        %v3335 = vadd.s32 %v3325, %v3329
        %v3336 = vadd.s32 %v3328, %v3334
        %vm3337 = vc.u32 %v3335, %v3331
        %v3338 = vsel %vm3337, 1, 0
        %v3339 = vadd.s32 %v3335, %v3331
        %v3340 = vadd.s32 %v3336, %v3338
        %v3341 = vadd.s32 %v3340, %v3330
        %v3342 = vadd.s32 %v3341, %v3332
        %v3343 = vand.u32 %v3320, 65535
        %v3344 = vshrl.u32 %v3320, 16
        %v3345 = vand.u32 %v3315, 65535
        %v3346 = vshrl.u32 %v3315, 16
        %v3347 = vmul.u32 %v3343, %v3345
        %v3348 = vmul.u32 %v3343, %v3346
        %v3349 = vmul.u32 %v3344, %v3345
        %v3350 = vmul.u32 %v3344, %v3346
        %v3351 = vshll.u32 %v3348, 16
        %v3352 = vshrl.u32 %v3348, 16
        %v3353 = vshll.u32 %v3349, 16
        %v3354 = vshrl.u32 %v3349, 16
        %vm3355 = vc.u32 %v3347, %v3351
        %v3356 = vsel %vm3355, 1, 0
        %v3357 = vadd.s32 %v3347, %v3351
        %v3358 = vadd.s32 %v3350, %v3356
        %vm3359 = vc.u32 %v3357, %v3353
        %v3360 = vsel %vm3359, 1, 0
        %v3361 = vadd.s32 %v3357, %v3353
        %v3362 = vadd.s32 %v3358, %v3360
        %v3363 = vadd.s32 %v3362, %v3352
        %v3364 = vadd.s32 %v3363, %v3354
        %v3365 = vmul.u32 %v3320, %v3311
        %v3366 = vadd.s32 %v3342, %v3361
        %vm3367 = vc.u32 %v3342, %v3361
        %v3368 = vadd.s32 %v3364, 1
        %v3369 = vsel %vm3367, %v3368, %v3364
        %v3370 = vadd.s32 %v3365, %v3369
        %v3371 = vadd.s32 %v3370, 536870912
        %v3372 = vshrl.u32 %v3371, 30
        %v3373 = vshll.u32 %v3372, 30
        %v3374 = vsub.s32 %v3370, %v3373
        %vm3375 = vcmp.lt.s32.totalorder %v3374, 0
        %v3376 = vsub.s32 0, %v3374
        %v3377 = vsel %vm3375, %v3376, %v3374
        %v3378 = vclz %v3377
        %v3379 = vsub.s32 %v3378, 2
        %vm3380 = vcmp.gt.s32.totalorder 0, %v3379
        %v3381 = vsel %vm3380, 0, %v3379
        %v3382 = vsub.s32 32, %v3381
        %v3383 = vshll.u32 %v3374, %v3381
        %v3384 = vshrl.u32 %v3366, %v3382
        %v3385 = vor.u32 %v3383, %v3384
        %v3386 = vsub.s32 4294967266, %v3381
        %v3387 = vadd.s32 %v3386, 127
        %v3388 = vshll.u32 %v3387, 23
        %v3389 = vor.u32 4788187, %v3388
        %v3390 = vand.u32 2147483647, %v3389
        %v3392 = vcvt.s32.f32 %v3385
        %v3393 = vmul.f32 %v3392, %v3390
        %v3394 = vxor.u32 %v3393, 2147483648
        %v3395 = vsel %vm3274, %v3394, %v3393
        %v3396 = vsub.s32 4, %v3372
        %v3397 = vsel %vm3274, %v3396, %v3372
        %v3398 = vsel %vm3273, %v486, %v3395
        %v3399 = vsel %vm3273, 0, %v3397
        %v3400 = vmul.f32 %v3398, %v3398
        %v3401 = vmul.f32 %v3400, -0.001358992
        %v3402 = vadd.f32 %v3401, 0.041655596
        %v3403 = vmul.f32 %v3400, %v3402
        %v3404 = vadd.f32 %v3403, -0.4999988
        %v3405 = vmul.f32 %v3400, %v3404
        %v3406 = vadd.f32 1.0, %v3405
        %v3407 = vmul.f32 %v3398, %v3398
        %v3408 = vmul.f32 %v3407, -0.00019511016
        %v3409 = vadd.f32 %v3408, 0.008332121
        %v3410 = vmul.f32 %v3407, %v3409
        %v3411 = vadd.f32 %v3410, -0.16666654
        %v3412 = vmul.f32 %v3407, %v3411
        %v3413 = vadd.f32 %v3412, 1.0
        %v3414 = vmul.f32 %v3413, %v3398
        %vm3415 = vweird.f32 %v486
        %v3416 = vand.u32 %v3399, 3
        %vm3417 = vcmp.lt.s32.totalorder %v3416, 2
        %vm3418 = vcmp.eq.s32.totalorder %v3416, 0
        %v3419 = vxor.u32 %v3414, 2147483648
        %v3420 = vsel %vm3418, %v3406, %v3419
        %vm3421 = vcmp.eq.s32.totalorder %v3416, 2
        %v3422 = vxor.u32 %v3406, 2147483648
        %v3423 = vsel %vm3421, %v3422, %v3414
        %v3424 = vsel %vm3417, %v3420, %v3423
        %v3425 = vsel %vm3415, nan, %v3424
        %v3426 = vand.u32 2147483647, %v487
        %vm3427 = vcmp.le.f32.partialorder %v3426, 0.7853982
        %vm3428 = vcmp.lt.s32.totalorder %v487, 0
        %v3429 = vand.u32 %v487, 2139095040
        %v3430 = vshrl.u32 %v3429, 23
        %v3431 = vsub.s32 %v3430, 127
        %v3432 = vand.u32 2147483647, %v487
        %v3433 = vand.u32 %v3432, 8388607
        %v3434 = vor.u32 %v3433, 8388608
        %v3435 = vsub.s32 0, %v3434
        %v3436 = vadd.s32 %v3431, 1
        %vm3437 = vcmp.gt.s32.totalorder %v3436, 0
        %v3438 = vsel %vm3437, %v3436, 0
        %v3439 = vshrl.u32 %v3438, 5
        %v3440 = vand.u32 %v3438, 31
        %v3441 = vsub.s32 32, %v3440
        %v3442 = vshrl.u32 683565275, %v3441
        %v3443 = vshll.u32 683565275, %v3440
        %v3444 = vshrl.u32 2475754826, %v3441
        %v3445 = vor.u32 %v3443, %v3444
        %v3446 = vshll.u32 2475754826, %v3440
        %v3447 = vshrl.u32 2131351028, %v3441
        %v3448 = vor.u32 %v3446, %v3447
        %v3449 = vshll.u32 2131351028, %v3440
        %v3450 = vshrl.u32 2102212464, %v3441
        %v3451 = vor.u32 %v3449, %v3450
        %v3452 = vshll.u32 2102212464, %v3440
        %v3453 = vshrl.u32 920167782, %v3441
        %v3454 = vor.u32 %v3452, %v3453
        %v3455 = vshll.u32 920167782, %v3440
        %v3456 = vshrl.u32 1326507024, %v3441
        %v3457 = vor.u32 %v3455, %v3456
        %vm3458 = vcmp.lt.s32.totalorder %v3439, 1
        %vm3459 = vcmp.lt.s32.totalorder %v3439, 2
        %vm3460 = vcmp.lt.s32.totalorder %v3439, 3
        %vm3461 = vcmp.lt.s32.totalorder %v3439, 4
        %v3462 = vsel %vm3458, %v3442, %v3445
        %v3463 = vsel %vm3461, %v3451, 2102212464
        %v3464 = vsel %vm3460, %v3448, %v3463
        %v3465 = vsel %vm3459, %v3462, %v3464
        %v3466 = vsel %vm3458, %v3445, %v3448
        %v3467 = vsel %vm3461, %v3454, 920167782
        %v3468 = vsel %vm3460, %v3451, %v3467
        %v3469 = vsel %vm3459, %v3466, %v3468
        %v3470 = vsel %vm3458, %v3448, %v3451
        %v3471 = vsel %vm3461, %v3457, 1326507024
        %v3472 = vsel %vm3460, %v3454, %v3471
        %v3473 = vsel %vm3459, %v3470, %v3472
        %v3474 = vshll.u32 %v3434, 8
        %v3475 = vand.u32 %v3474, 65535
        %v3476 = vshrl.u32 %v3474, 16
        %v3477 = vand.u32 %v3473, 65535
        %v3478 = vshrl.u32 %v3473, 16
        %v3479 = vmul.u32 %v3475, %v3477
        %v3480 = vmul.u32 %v3475, %v3478
        %v3481 = vmul.u32 %v3476, %v3477
        %v3482 = vmul.u32 %v3476, %v3478
        %v3483 = vshll.u32 %v3480, 16
        %v3484 = vshrl.u32 %v3480, 16
        %v3485 = vshll.u32 %v3481, 16
        %v3486 = vshrl.u32 %v3481, 16
        %vm3487 = vc.u32 %v3479, %v3483
        %v3488 = vsel %vm3487, 1, 0
        %v3489 = vadd.s32 %v3479, %v3483
        %v3490 = vadd.s32 %v3482, %v3488
        %vm3491 = vc.u32 %v3489, %v3485
        %v3492 = vsel %vm3491, 1, 0
        %v3493 = vadd.s32 %v3489, %v3485
        %v3494 = vadd.s32 %v3490, %v3492
        %v3495 = vadd.s32 %v3494, %v3484
        %v3496 = vadd.s32 %v3495, %v3486
        %v3497 = vand.u32 %v3474, 65535
        %v3498 = vshrl.u32 %v3474, 16
        %v3499 = vand.u32 %v3469, 65535
        %v3500 = vshrl.u32 %v3469, 16
        %v3501 = vmul.u32 %v3497, %v3499
        %v3502 = vmul.u32 %v3497, %v3500
        %v3503 = vmul.u32 %v3498, %v3499
        %v3504 = vmul.u32 %v3498, %v3500
        %v3505 = vshll.u32 %v3502, 16
        %v3506 = vshrl.u32 %v3502, 16
        %v3507 = vshll.u32 %v3503, 16
        %v3508 = vshrl.u32 %v3503, 16
        %vm3509 = vc.u32 %v3501, %v3505
        %v3510 = vsel %vm3509, 1, 0
        %v3511 = vadd.s32 %v3501, %v3505
        %v3512 = vadd.s32 %v3504, %v3510
        %vm3513 = vc.u32 %v3511, %v3507
        %v3514 = vsel %vm3513, 1, 0
        %v3515 = vadd.s32 %v3511, %v3507
        %v3516 = vadd.s32 %v3512, %v3514
        %v3517 = vadd.s32 %v3516, %v3506
        %v3518 = vadd.s32 %v3517, %v3508
        %v3519 = vmul.u32 %v3474, %v3465
        %v3520 = vadd.s32 %v3496, %v3515
        %vm3521 = vc.u32 %v3496, %v3515
        %v3522 = vadd.s32 %v3518, 1
        %v3523 = vsel %vm3521, %v3522, %v3518
        %v3524 = vadd.s32 %v3519, %v3523
        %v3525 = vadd.s32 %v3524, 536870912
        %v3526 = vshrl.u32 %v3525, 30
        %v3527 = vshll.u32 %v3526, 30
        %v3528 = vsub.s32 %v3524, %v3527
        %vm3529 = vcmp.lt.s32.totalorder %v3528, 0
        %v3530 = vsub.s32 0, %v3528
        %v3531 = vsel %vm3529, %v3530, %v3528
        %v3532 = vclz %v3531
        %v3533 = vsub.s32 %v3532, 2
        %vm3534 = vcmp.gt.s32.totalorder 0, %v3533
        %v3535 = vsel %vm3534, 0, %v3533
        %v3536 = vsub.s32 32, %v3535
        %v3537 = vshll.u32 %v3528, %v3535
        %v3538 = vshrl.u32 %v3520, %v3536
        %v3539 = vor.u32 %v3537, %v3538
        %v3540 = vsub.s32 4294967266, %v3535
        %v3541 = vadd.s32 %v3540, 127
        %v3542 = vshll.u32 %v3541, 23
        %v3543 = vor.u32 4788187, %v3542
        %v3544 = vand.u32 2147483647, %v3543
        %v3546 = vcvt.s32.f32 %v3539
        %v3547 = vmul.f32 %v3546, %v3544
        %v3548 = vxor.u32 %v3547, 2147483648
        %v3549 = vsel %vm3428, %v3548, %v3547
        %v3550 = vsub.s32 4, %v3526
        %v3551 = vsel %vm3428, %v3550, %v3526
        %v3552 = vsel %vm3427, %v487, %v3549
        %v3553 = vsel %vm3427, 0, %v3551
        %v3554 = vmul.f32 %v3552, %v3552
        %v3555 = vmul.f32 %v3554, -0.001358992
        %v3556 = vadd.f32 %v3555, 0.041655596
        %v3557 = vmul.f32 %v3554, %v3556
        %v3558 = vadd.f32 %v3557, -0.4999988
        %v3559 = vmul.f32 %v3554, %v3558
        %v3560 = vadd.f32 1.0, %v3559
        %v3561 = vmul.f32 %v3552, %v3552
        %v3562 = vmul.f32 %v3561, -0.00019511016
        %v3563 = vadd.f32 %v3562, 0.008332121
        %v3564 = vmul.f32 %v3561, %v3563
        %v3565 = vadd.f32 %v3564, -0.16666654
        %v3566 = vmul.f32 %v3561, %v3565
        %v3567 = vadd.f32 %v3566, 1.0
        %v3568 = vmul.f32 %v3567, %v3552
        %vm3569 = vweird.f32 %v487
        %v3570 = vand.u32 %v3553, 3
        %vm3571 = vcmp.lt.s32.totalorder %v3570, 2
        %vm3572 = vcmp.eq.s32.totalorder %v3570, 0
        %v3573 = vxor.u32 %v3568, 2147483648
        %v3574 = vsel %vm3572, %v3560, %v3573
        %vm3575 = vcmp.eq.s32.totalorder %v3570, 2
        %v3576 = vxor.u32 %v3560, 2147483648
        %v3577 = vsel %vm3575, %v3576, %v3568
        %v3578 = vsel %vm3571, %v3574, %v3577
        %v3579 = vsel %vm3569, nan, %v3578
        %v3580 = vand.u32 2147483647, %v488
        %vm3581 = vcmp.le.f32.partialorder %v3580, 0.7853982
        %vm3582 = vcmp.lt.s32.totalorder %v488, 0
        %v3583 = vand.u32 %v488, 2139095040
        %v3584 = vshrl.u32 %v3583, 23
        %v3585 = vsub.s32 %v3584, 127
        %v3586 = vand.u32 2147483647, %v488
        %v3587 = vand.u32 %v3586, 8388607
        %v3588 = vor.u32 %v3587, 8388608
        %v3589 = vsub.s32 0, %v3588
        %v3590 = vadd.s32 %v3585, 1
        %vm3591 = vcmp.gt.s32.totalorder %v3590, 0
        %v3592 = vsel %vm3591, %v3590, 0
        %v3593 = vshrl.u32 %v3592, 5
        %v3594 = vand.u32 %v3592, 31
        %v3595 = vsub.s32 32, %v3594
        %v3596 = vshrl.u32 683565275, %v3595
        %v3597 = vshll.u32 683565275, %v3594
        %v3598 = vshrl.u32 2475754826, %v3595
        %v3599 = vor.u32 %v3597, %v3598
        %v3600 = vshll.u32 2475754826, %v3594
        %v3601 = vshrl.u32 2131351028, %v3595
        %v3602 = vor.u32 %v3600, %v3601
        %v3603 = vshll.u32 2131351028, %v3594
        %v3604 = vshrl.u32 2102212464, %v3595
        %v3605 = vor.u32 %v3603, %v3604
        %v3606 = vshll.u32 2102212464, %v3594
        %v3607 = vshrl.u32 920167782, %v3595
        %v3608 = vor.u32 %v3606, %v3607
        %v3609 = vshll.u32 920167782, %v3594
        %v3610 = vshrl.u32 1326507024, %v3595
        %v3611 = vor.u32 %v3609, %v3610
        %vm3612 = vcmp.lt.s32.totalorder %v3593, 1
        %vm3613 = vcmp.lt.s32.totalorder %v3593, 2
        %vm3614 = vcmp.lt.s32.totalorder %v3593, 3
        %vm3615 = vcmp.lt.s32.totalorder %v3593, 4
        %v3616 = vsel %vm3612, %v3596, %v3599
        %v3617 = vsel %vm3615, %v3605, 2102212464
        %v3618 = vsel %vm3614, %v3602, %v3617
        %v3619 = vsel %vm3613, %v3616, %v3618
        %v3620 = vsel %vm3612, %v3599, %v3602
        %v3621 = vsel %vm3615, %v3608, 920167782
        %v3622 = vsel %vm3614, %v3605, %v3621
        %v3623 = vsel %vm3613, %v3620, %v3622
        %v3624 = vsel %vm3612, %v3602, %v3605
        %v3625 = vsel %vm3615, %v3611, 1326507024
        %v3626 = vsel %vm3614, %v3608, %v3625
        %v3627 = vsel %vm3613, %v3624, %v3626
        %v3628 = vshll.u32 %v3588, 8
        %v3629 = vand.u32 %v3628, 65535
        %v3630 = vshrl.u32 %v3628, 16
        %v3631 = vand.u32 %v3627, 65535
        %v3632 = vshrl.u32 %v3627, 16
        %v3633 = vmul.u32 %v3629, %v3631
        %v3634 = vmul.u32 %v3629, %v3632
        %v3635 = vmul.u32 %v3630, %v3631
        %v3636 = vmul.u32 %v3630, %v3632
        %v3637 = vshll.u32 %v3634, 16
        %v3638 = vshrl.u32 %v3634, 16
        %v3639 = vshll.u32 %v3635, 16
        %v3640 = vshrl.u32 %v3635, 16
        %vm3641 = vc.u32 %v3633, %v3637
        %v3642 = vsel %vm3641, 1, 0
        %v3643 = vadd.s32 %v3633, %v3637
        %v3644 = vadd.s32 %v3636, %v3642
        %vm3645 = vc.u32 %v3643, %v3639
        %v3646 = vsel %vm3645, 1, 0
        %v3647 = vadd.s32 %v3643, %v3639
        %v3648 = vadd.s32 %v3644, %v3646
        %v3649 = vadd.s32 %v3648, %v3638
        %v3650 = vadd.s32 %v3649, %v3640
        %v3651 = vand.u32 %v3628, 65535
        %v3652 = vshrl.u32 %v3628, 16
        %v3653 = vand.u32 %v3623, 65535
        %v3654 = vshrl.u32 %v3623, 16
        %v3655 = vmul.u32 %v3651, %v3653
        %v3656 = vmul.u32 %v3651, %v3654
        %v3657 = vmul.u32 %v3652, %v3653
        %v3658 = vmul.u32 %v3652, %v3654
        %v3659 = vshll.u32 %v3656, 16
        %v3660 = vshrl.u32 %v3656, 16
        %v3661 = vshll.u32 %v3657, 16
        %v3662 = vshrl.u32 %v3657, 16
        %vm3663 = vc.u32 %v3655, %v3659
        %v3664 = vsel %vm3663, 1, 0
        %v3665 = vadd.s32 %v3655, %v3659
        %v3666 = vadd.s32 %v3658, %v3664
        %vm3667 = vc.u32 %v3665, %v3661
        %v3668 = vsel %vm3667, 1, 0
        %v3669 = vadd.s32 %v3665, %v3661
        %v3670 = vadd.s32 %v3666, %v3668
        %v3671 = vadd.s32 %v3670, %v3660
        %v3672 = vadd.s32 %v3671, %v3662
        %v3673 = vmul.u32 %v3628, %v3619
        %v3674 = vadd.s32 %v3650, %v3669
        %vm3675 = vc.u32 %v3650, %v3669
        %v3676 = vadd.s32 %v3672, 1
        %v3677 = vsel %vm3675, %v3676, %v3672
        %v3678 = vadd.s32 %v3673, %v3677
        %v3679 = vadd.s32 %v3678, 536870912
        %v3680 = vshrl.u32 %v3679, 30
        %v3681 = vshll.u32 %v3680, 30
        %v3682 = vsub.s32 %v3678, %v3681
        %vm3683 = vcmp.lt.s32.totalorder %v3682, 0
        %v3684 = vsub.s32 0, %v3682
        %v3685 = vsel %vm3683, %v3684, %v3682
        %v3686 = vclz %v3685
        %v3687 = vsub.s32 %v3686, 2
        %vm3688 = vcmp.gt.s32.totalorder 0, %v3687
        %v3689 = vsel %vm3688, 0, %v3687
        %v3690 = vsub.s32 32, %v3689
        %v3691 = vshll.u32 %v3682, %v3689
        %v3692 = vshrl.u32 %v3674, %v3690
        %v3693 = vor.u32 %v3691, %v3692
        %v3694 = vsub.s32 4294967266, %v3689
        %v3695 = vadd.s32 %v3694, 127
        %v3696 = vshll.u32 %v3695, 23
        %v3697 = vor.u32 4788187, %v3696
        %v3698 = vand.u32 2147483647, %v3697
        %v3700 = vcvt.s32.f32 %v3693
        %v3701 = vmul.f32 %v3700, %v3698
        %v3702 = vxor.u32 %v3701, 2147483648
        %v3703 = vsel %vm3582, %v3702, %v3701
        %v3704 = vsub.s32 4, %v3680
        %v3705 = vsel %vm3582, %v3704, %v3680
        %v3706 = vsel %vm3581, %v488, %v3703
        %v3707 = vsel %vm3581, 0, %v3705
        %v3708 = vmul.f32 %v3706, %v3706
        %v3709 = vmul.f32 %v3708, -0.001358992
        %v3710 = vadd.f32 %v3709, 0.041655596
        %v3711 = vmul.f32 %v3708, %v3710
        %v3712 = vadd.f32 %v3711, -0.4999988
        %v3713 = vmul.f32 %v3708, %v3712
        %v3714 = vadd.f32 1.0, %v3713
        %v3715 = vmul.f32 %v3706, %v3706
        %v3716 = vmul.f32 %v3715, -0.00019511016
        %v3717 = vadd.f32 %v3716, 0.008332121
        %v3718 = vmul.f32 %v3715, %v3717
        %v3719 = vadd.f32 %v3718, -0.16666654
        %v3720 = vmul.f32 %v3715, %v3719
        %v3721 = vadd.f32 %v3720, 1.0
        %v3722 = vmul.f32 %v3721, %v3706
        %vm3723 = vweird.f32 %v488
        %v3724 = vand.u32 %v3707, 3
        %vm3725 = vcmp.lt.s32.totalorder %v3724, 2
        %vm3726 = vcmp.eq.s32.totalorder %v3724, 0
        %v3727 = vxor.u32 %v3722, 2147483648
        %v3728 = vsel %vm3726, %v3714, %v3727
        %vm3729 = vcmp.eq.s32.totalorder %v3724, 2
        %v3730 = vxor.u32 %v3714, 2147483648
        %v3731 = vsel %vm3729, %v3730, %v3722
        %v3732 = vsel %vm3725, %v3728, %v3731
        %v3733 = vsel %vm3723, nan, %v3732
        %v3734 = vand.u32 2147483647, %v489
        %vm3735 = vcmp.le.f32.partialorder %v3734, 0.7853982
        %vm3736 = vcmp.lt.s32.totalorder %v489, 0
        %v3737 = vand.u32 %v489, 2139095040
        %v3738 = vshrl.u32 %v3737, 23
        %v3739 = vsub.s32 %v3738, 127
        %v3740 = vand.u32 2147483647, %v489
        %v3741 = vand.u32 %v3740, 8388607
        %v3742 = vor.u32 %v3741, 8388608
        %v3743 = vsub.s32 0, %v3742
        %v3744 = vadd.s32 %v3739, 1
        %vm3745 = vcmp.gt.s32.totalorder %v3744, 0
        %v3746 = vsel %vm3745, %v3744, 0
        %v3747 = vshrl.u32 %v3746, 5
        %v3748 = vand.u32 %v3746, 31
        %v3749 = vsub.s32 32, %v3748
        %v3750 = vshrl.u32 683565275, %v3749
        %v3751 = vshll.u32 683565275, %v3748
        %v3752 = vshrl.u32 2475754826, %v3749
        %v3753 = vor.u32 %v3751, %v3752
        %v3754 = vshll.u32 2475754826, %v3748
        %v3755 = vshrl.u32 2131351028, %v3749
        %v3756 = vor.u32 %v3754, %v3755
        %v3757 = vshll.u32 2131351028, %v3748
        %v3758 = vshrl.u32 2102212464, %v3749
        %v3759 = vor.u32 %v3757, %v3758
        %v3760 = vshll.u32 2102212464, %v3748
        %v3761 = vshrl.u32 920167782, %v3749
        %v3762 = vor.u32 %v3760, %v3761
        %v3763 = vshll.u32 920167782, %v3748
        %v3764 = vshrl.u32 1326507024, %v3749
        %v3765 = vor.u32 %v3763, %v3764
        %vm3766 = vcmp.lt.s32.totalorder %v3747, 1
        %vm3767 = vcmp.lt.s32.totalorder %v3747, 2
        %vm3768 = vcmp.lt.s32.totalorder %v3747, 3
        %vm3769 = vcmp.lt.s32.totalorder %v3747, 4
        %v3770 = vsel %vm3766, %v3750, %v3753
        %v3771 = vsel %vm3769, %v3759, 2102212464
        %v3772 = vsel %vm3768, %v3756, %v3771
        %v3773 = vsel %vm3767, %v3770, %v3772
        %v3774 = vsel %vm3766, %v3753, %v3756
        %v3775 = vsel %vm3769, %v3762, 920167782
        %v3776 = vsel %vm3768, %v3759, %v3775
        %v3777 = vsel %vm3767, %v3774, %v3776
        %v3778 = vsel %vm3766, %v3756, %v3759
        %v3779 = vsel %vm3769, %v3765, 1326507024
        %v3780 = vsel %vm3768, %v3762, %v3779
        %v3781 = vsel %vm3767, %v3778, %v3780
        %v3782 = vshll.u32 %v3742, 8
        %v3783 = vand.u32 %v3782, 65535
        %v3784 = vshrl.u32 %v3782, 16
        %v3785 = vand.u32 %v3781, 65535
        %v3786 = vshrl.u32 %v3781, 16
        %v3787 = vmul.u32 %v3783, %v3785
        %v3788 = vmul.u32 %v3783, %v3786
        %v3789 = vmul.u32 %v3784, %v3785
        %v3790 = vmul.u32 %v3784, %v3786
        %v3791 = vshll.u32 %v3788, 16
        %v3792 = vshrl.u32 %v3788, 16
        %v3793 = vshll.u32 %v3789, 16
        %v3794 = vshrl.u32 %v3789, 16
        %vm3795 = vc.u32 %v3787, %v3791
        %v3796 = vsel %vm3795, 1, 0
        %v3797 = vadd.s32 %v3787, %v3791
        %v3798 = vadd.s32 %v3790, %v3796
        %vm3799 = vc.u32 %v3797, %v3793
        %v3800 = vsel %vm3799, 1, 0
        %v3801 = vadd.s32 %v3797, %v3793
        %v3802 = vadd.s32 %v3798, %v3800
        %v3803 = vadd.s32 %v3802, %v3792
        %v3804 = vadd.s32 %v3803, %v3794
        %v3805 = vand.u32 %v3782, 65535
        %v3806 = vshrl.u32 %v3782, 16
        %v3807 = vand.u32 %v3777, 65535
        %v3808 = vshrl.u32 %v3777, 16
        %v3809 = vmul.u32 %v3805, %v3807
        %v3810 = vmul.u32 %v3805, %v3808
        %v3811 = vmul.u32 %v3806, %v3807
        %v3812 = vmul.u32 %v3806, %v3808
        %v3813 = vshll.u32 %v3810, 16
        %v3814 = vshrl.u32 %v3810, 16
        %v3815 = vshll.u32 %v3811, 16
        %v3816 = vshrl.u32 %v3811, 16
        %vm3817 = vc.u32 %v3809, %v3813
        %v3818 = vsel %vm3817, 1, 0
        %v3819 = vadd.s32 %v3809, %v3813
        %v3820 = vadd.s32 %v3812, %v3818
        %vm3821 = vc.u32 %v3819, %v3815
        %v3822 = vsel %vm3821, 1, 0
        %v3823 = vadd.s32 %v3819, %v3815
        %v3824 = vadd.s32 %v3820, %v3822
        %v3825 = vadd.s32 %v3824, %v3814
        %v3826 = vadd.s32 %v3825, %v3816
        %v3827 = vmul.u32 %v3782, %v3773
        %v3828 = vadd.s32 %v3804, %v3823
        %vm3829 = vc.u32 %v3804, %v3823
        %v3830 = vadd.s32 %v3826, 1
        %v3831 = vsel %vm3829, %v3830, %v3826
        %v3832 = vadd.s32 %v3827, %v3831
        %v3833 = vadd.s32 %v3832, 536870912
        %v3834 = vshrl.u32 %v3833, 30
        %v3835 = vshll.u32 %v3834, 30
        %v3836 = vsub.s32 %v3832, %v3835
        %vm3837 = vcmp.lt.s32.totalorder %v3836, 0
        %v3838 = vsub.s32 0, %v3836
        %v3839 = vsel %vm3837, %v3838, %v3836
        %v3840 = vclz %v3839
        %v3841 = vsub.s32 %v3840, 2
        %vm3842 = vcmp.gt.s32.totalorder 0, %v3841
        %v3843 = vsel %vm3842, 0, %v3841
        %v3844 = vsub.s32 32, %v3843
        %v3845 = vshll.u32 %v3836, %v3843
        %v3846 = vshrl.u32 %v3828, %v3844
        %v3847 = vor.u32 %v3845, %v3846
        %v3848 = vsub.s32 4294967266, %v3843
        %v3849 = vadd.s32 %v3848, 127
        %v3850 = vshll.u32 %v3849, 23
        %v3851 = vor.u32 4788187, %v3850
        %v3852 = vand.u32 2147483647, %v3851
        %v3854 = vcvt.s32.f32 %v3847
        %v3855 = vmul.f32 %v3854, %v3852
        %v3856 = vxor.u32 %v3855, 2147483648
        %v3857 = vsel %vm3736, %v3856, %v3855
        %v3858 = vsub.s32 4, %v3834
        %v3859 = vsel %vm3736, %v3858, %v3834
        %v3860 = vsel %vm3735, %v489, %v3857
        %v3861 = vsel %vm3735, 0, %v3859
        %v3862 = vmul.f32 %v3860, %v3860
        %v3863 = vmul.f32 %v3862, -0.001358992
        %v3864 = vadd.f32 %v3863, 0.041655596
        %v3865 = vmul.f32 %v3862, %v3864
        %v3866 = vadd.f32 %v3865, -0.4999988
        %v3867 = vmul.f32 %v3862, %v3866
        %v3868 = vadd.f32 1.0, %v3867
        %v3869 = vmul.f32 %v3860, %v3860
        %v3870 = vmul.f32 %v3869, -0.00019511016
        %v3871 = vadd.f32 %v3870, 0.008332121
        %v3872 = vmul.f32 %v3869, %v3871
        %v3873 = vadd.f32 %v3872, -0.16666654
        %v3874 = vmul.f32 %v3869, %v3873
        %v3875 = vadd.f32 %v3874, 1.0
        %v3876 = vmul.f32 %v3875, %v3860
        %vm3877 = vweird.f32 %v489
        %v3878 = vand.u32 %v3861, 3
        %vm3879 = vcmp.lt.s32.totalorder %v3878, 2
        %vm3880 = vcmp.eq.s32.totalorder %v3878, 0
        %v3881 = vxor.u32 %v3876, 2147483648
        %v3882 = vsel %vm3880, %v3868, %v3881
        %vm3883 = vcmp.eq.s32.totalorder %v3878, 2
        %v3884 = vxor.u32 %v3868, 2147483648
        %v3885 = vsel %vm3883, %v3884, %v3876
        %v3886 = vsel %vm3879, %v3882, %v3885
        %v3887 = vsel %vm3877, nan, %v3886
        %v3888 = vand.u32 2147483647, %v490
        %vm3889 = vcmp.le.f32.partialorder %v3888, 0.7853982
        %vm3890 = vcmp.lt.s32.totalorder %v490, 0
        %v3891 = vand.u32 %v490, 2139095040
        %v3892 = vshrl.u32 %v3891, 23
        %v3893 = vsub.s32 %v3892, 127
        %v3894 = vand.u32 2147483647, %v490
        %v3895 = vand.u32 %v3894, 8388607
        %v3896 = vor.u32 %v3895, 8388608
        %v3897 = vsub.s32 0, %v3896
        %v3898 = vadd.s32 %v3893, 1
        %vm3899 = vcmp.gt.s32.totalorder %v3898, 0
        %v3900 = vsel %vm3899, %v3898, 0
        %v3901 = vshrl.u32 %v3900, 5
        %v3902 = vand.u32 %v3900, 31
        %v3903 = vsub.s32 32, %v3902
        %v3904 = vshrl.u32 683565275, %v3903
        %v3905 = vshll.u32 683565275, %v3902
        %v3906 = vshrl.u32 2475754826, %v3903
        %v3907 = vor.u32 %v3905, %v3906
        %v3908 = vshll.u32 2475754826, %v3902
        %v3909 = vshrl.u32 2131351028, %v3903
        %v3910 = vor.u32 %v3908, %v3909
        %v3911 = vshll.u32 2131351028, %v3902
        %v3912 = vshrl.u32 2102212464, %v3903
        %v3913 = vor.u32 %v3911, %v3912
        %v3914 = vshll.u32 2102212464, %v3902
        %v3915 = vshrl.u32 920167782, %v3903
        %v3916 = vor.u32 %v3914, %v3915
        %v3917 = vshll.u32 920167782, %v3902
        %v3918 = vshrl.u32 1326507024, %v3903
        %v3919 = vor.u32 %v3917, %v3918
        %vm3920 = vcmp.lt.s32.totalorder %v3901, 1
        %vm3921 = vcmp.lt.s32.totalorder %v3901, 2
        %vm3922 = vcmp.lt.s32.totalorder %v3901, 3
        %vm3923 = vcmp.lt.s32.totalorder %v3901, 4
        %v3924 = vsel %vm3920, %v3904, %v3907
        %v3925 = vsel %vm3923, %v3913, 2102212464
        %v3926 = vsel %vm3922, %v3910, %v3925
        %v3927 = vsel %vm3921, %v3924, %v3926
        %v3928 = vsel %vm3920, %v3907, %v3910
        %v3929 = vsel %vm3923, %v3916, 920167782
        %v3930 = vsel %vm3922, %v3913, %v3929
        %v3931 = vsel %vm3921, %v3928, %v3930
        %v3932 = vsel %vm3920, %v3910, %v3913
        %v3933 = vsel %vm3923, %v3919, 1326507024
        %v3934 = vsel %vm3922, %v3916, %v3933
        %v3935 = vsel %vm3921, %v3932, %v3934
        %v3936 = vshll.u32 %v3896, 8
        %v3937 = vand.u32 %v3936, 65535
        %v3938 = vshrl.u32 %v3936, 16
        %v3939 = vand.u32 %v3935, 65535
        %v3940 = vshrl.u32 %v3935, 16
        %v3941 = vmul.u32 %v3937, %v3939
        %v3942 = vmul.u32 %v3937, %v3940
        %v3943 = vmul.u32 %v3938, %v3939
        %v3944 = vmul.u32 %v3938, %v3940
        %v3945 = vshll.u32 %v3942, 16
        %v3946 = vshrl.u32 %v3942, 16
        %v3947 = vshll.u32 %v3943, 16
        %v3948 = vshrl.u32 %v3943, 16
        %vm3949 = vc.u32 %v3941, %v3945
        %v3950 = vsel %vm3949, 1, 0
        %v3951 = vadd.s32 %v3941, %v3945
        %v3952 = vadd.s32 %v3944, %v3950
        %vm3953 = vc.u32 %v3951, %v3947
        %v3954 = vsel %vm3953, 1, 0
        %v3955 = vadd.s32 %v3951, %v3947
        %v3956 = vadd.s32 %v3952, %v3954
        %v3957 = vadd.s32 %v3956, %v3946
        %v3958 = vadd.s32 %v3957, %v3948
        %v3959 = vand.u32 %v3936, 65535
        %v3960 = vshrl.u32 %v3936, 16
        %v3961 = vand.u32 %v3931, 65535
        %v3962 = vshrl.u32 %v3931, 16
        %v3963 = vmul.u32 %v3959, %v3961
        %v3964 = vmul.u32 %v3959, %v3962
        %v3965 = vmul.u32 %v3960, %v3961
        %v3966 = vmul.u32 %v3960, %v3962
        %v3967 = vshll.u32 %v3964, 16
        %v3968 = vshrl.u32 %v3964, 16
        %v3969 = vshll.u32 %v3965, 16
        %v3970 = vshrl.u32 %v3965, 16
        %vm3971 = vc.u32 %v3963, %v3967
        %v3972 = vsel %vm3971, 1, 0
        %v3973 = vadd.s32 %v3963, %v3967
        %v3974 = vadd.s32 %v3966, %v3972
        %vm3975 = vc.u32 %v3973, %v3969
        %v3976 = vsel %vm3975, 1, 0
        %v3977 = vadd.s32 %v3973, %v3969
        %v3978 = vadd.s32 %v3974, %v3976
        %v3979 = vadd.s32 %v3978, %v3968
        %v3980 = vadd.s32 %v3979, %v3970
        %v3981 = vmul.u32 %v3936, %v3927
        %v3982 = vadd.s32 %v3958, %v3977
        %vm3983 = vc.u32 %v3958, %v3977
        %v3984 = vadd.s32 %v3980, 1
        %v3985 = vsel %vm3983, %v3984, %v3980
        %v3986 = vadd.s32 %v3981, %v3985
        %v3987 = vadd.s32 %v3986, 536870912
        %v3988 = vshrl.u32 %v3987, 30
        %v3989 = vshll.u32 %v3988, 30
        %v3990 = vsub.s32 %v3986, %v3989
        %vm3991 = vcmp.lt.s32.totalorder %v3990, 0
        %v3992 = vsub.s32 0, %v3990
        %v3993 = vsel %vm3991, %v3992, %v3990
        %v3994 = vclz %v3993
        %v3995 = vsub.s32 %v3994, 2
        %vm3996 = vcmp.gt.s32.totalorder 0, %v3995
        %v3997 = vsel %vm3996, 0, %v3995
        %v3998 = vsub.s32 32, %v3997
        %v3999 = vshll.u32 %v3990, %v3997
        %v4000 = vshrl.u32 %v3982, %v3998
        %v4001 = vor.u32 %v3999, %v4000
        %v4002 = vsub.s32 4294967266, %v3997
        %v4003 = vadd.s32 %v4002, 127
        %v4004 = vshll.u32 %v4003, 23
        %v4005 = vor.u32 4788187, %v4004
        %v4006 = vand.u32 2147483647, %v4005
        %v4008 = vcvt.s32.f32 %v4001
        %v4009 = vmul.f32 %v4008, %v4006
        %v4010 = vxor.u32 %v4009, 2147483648
        %v4011 = vsel %vm3890, %v4010, %v4009
        %v4012 = vsub.s32 4, %v3988
        %v4013 = vsel %vm3890, %v4012, %v3988
        %v4014 = vsel %vm3889, %v490, %v4011
        %v4015 = vsel %vm3889, 0, %v4013
        %v4016 = vmul.f32 %v4014, %v4014
        %v4017 = vmul.f32 %v4016, -0.001358992
        %v4018 = vadd.f32 %v4017, 0.041655596
        %v4019 = vmul.f32 %v4016, %v4018
        %v4020 = vadd.f32 %v4019, -0.4999988
        %v4021 = vmul.f32 %v4016, %v4020
        %v4022 = vadd.f32 1.0, %v4021
        %v4023 = vmul.f32 %v4014, %v4014
        %v4024 = vmul.f32 %v4023, -0.00019511016
        %v4025 = vadd.f32 %v4024, 0.008332121
        %v4026 = vmul.f32 %v4023, %v4025
        %v4027 = vadd.f32 %v4026, -0.16666654
        %v4028 = vmul.f32 %v4023, %v4027
        %v4029 = vadd.f32 %v4028, 1.0
        %v4030 = vmul.f32 %v4029, %v4014
        %vm4031 = vweird.f32 %v490
        %v4032 = vand.u32 %v4015, 3
        %vm4033 = vcmp.lt.s32.totalorder %v4032, 2
        %vm4034 = vcmp.eq.s32.totalorder %v4032, 0
        %v4035 = vxor.u32 %v4030, 2147483648
        %v4036 = vsel %vm4034, %v4022, %v4035
        %vm4037 = vcmp.eq.s32.totalorder %v4032, 2
        %v4038 = vxor.u32 %v4022, 2147483648
        %v4039 = vsel %vm4037, %v4038, %v4030
        %v4040 = vsel %vm4033, %v4036, %v4039
        %v4041 = vsel %vm4031, nan, %v4040
        %v4042 = vand.u32 2147483647, %v491
        %vm4043 = vcmp.le.f32.partialorder %v4042, 0.7853982
        %vm4044 = vcmp.lt.s32.totalorder %v491, 0
        %v4045 = vand.u32 %v491, 2139095040
        %v4046 = vshrl.u32 %v4045, 23
        %v4047 = vsub.s32 %v4046, 127
        %v4048 = vand.u32 2147483647, %v491
        %v4049 = vand.u32 %v4048, 8388607
        %v4050 = vor.u32 %v4049, 8388608
        %v4051 = vsub.s32 0, %v4050
        %v4052 = vadd.s32 %v4047, 1
        %vm4053 = vcmp.gt.s32.totalorder %v4052, 0
        %v4054 = vsel %vm4053, %v4052, 0
        %v4055 = vshrl.u32 %v4054, 5
        %v4056 = vand.u32 %v4054, 31
        %v4057 = vsub.s32 32, %v4056
        %v4058 = vshrl.u32 683565275, %v4057
        %v4059 = vshll.u32 683565275, %v4056
        %v4060 = vshrl.u32 2475754826, %v4057
        %v4061 = vor.u32 %v4059, %v4060
        %v4062 = vshll.u32 2475754826, %v4056
        %v4063 = vshrl.u32 2131351028, %v4057
        %v4064 = vor.u32 %v4062, %v4063
        %v4065 = vshll.u32 2131351028, %v4056
        %v4066 = vshrl.u32 2102212464, %v4057
        %v4067 = vor.u32 %v4065, %v4066
        %v4068 = vshll.u32 2102212464, %v4056
        %v4069 = vshrl.u32 920167782, %v4057
        %v4070 = vor.u32 %v4068, %v4069
        %v4071 = vshll.u32 920167782, %v4056
        %v4072 = vshrl.u32 1326507024, %v4057
        %v4073 = vor.u32 %v4071, %v4072
        %vm4074 = vcmp.lt.s32.totalorder %v4055, 1
        %vm4075 = vcmp.lt.s32.totalorder %v4055, 2
        %vm4076 = vcmp.lt.s32.totalorder %v4055, 3
        %vm4077 = vcmp.lt.s32.totalorder %v4055, 4
        %v4078 = vsel %vm4074, %v4058, %v4061
        %v4079 = vsel %vm4077, %v4067, 2102212464
        %v4080 = vsel %vm4076, %v4064, %v4079
        %v4081 = vsel %vm4075, %v4078, %v4080
        %v4082 = vsel %vm4074, %v4061, %v4064
        %v4083 = vsel %vm4077, %v4070, 920167782
        %v4084 = vsel %vm4076, %v4067, %v4083
        %v4085 = vsel %vm4075, %v4082, %v4084
        %v4086 = vsel %vm4074, %v4064, %v4067
        %v4087 = vsel %vm4077, %v4073, 1326507024
        %v4088 = vsel %vm4076, %v4070, %v4087
        %v4089 = vsel %vm4075, %v4086, %v4088
        %v4090 = vshll.u32 %v4050, 8
        %v4091 = vand.u32 %v4090, 65535
        %v4092 = vshrl.u32 %v4090, 16
        %v4093 = vand.u32 %v4089, 65535
        %v4094 = vshrl.u32 %v4089, 16
        %v4095 = vmul.u32 %v4091, %v4093
        %v4096 = vmul.u32 %v4091, %v4094
        %v4097 = vmul.u32 %v4092, %v4093
        %v4098 = vmul.u32 %v4092, %v4094
        %v4099 = vshll.u32 %v4096, 16
        %v4100 = vshrl.u32 %v4096, 16
        %v4101 = vshll.u32 %v4097, 16
        %v4102 = vshrl.u32 %v4097, 16
        %vm4103 = vc.u32 %v4095, %v4099
        %v4104 = vsel %vm4103, 1, 0
        %v4105 = vadd.s32 %v4095, %v4099
        %v4106 = vadd.s32 %v4098, %v4104
        %vm4107 = vc.u32 %v4105, %v4101
        %v4108 = vsel %vm4107, 1, 0
        %v4109 = vadd.s32 %v4105, %v4101
        %v4110 = vadd.s32 %v4106, %v4108
        %v4111 = vadd.s32 %v4110, %v4100
        %v4112 = vadd.s32 %v4111, %v4102
        %v4113 = vand.u32 %v4090, 65535
        %v4114 = vshrl.u32 %v4090, 16
        %v4115 = vand.u32 %v4085, 65535
        %v4116 = vshrl.u32 %v4085, 16
        %v4117 = vmul.u32 %v4113, %v4115
        %v4118 = vmul.u32 %v4113, %v4116
        %v4119 = vmul.u32 %v4114, %v4115
        %v4120 = vmul.u32 %v4114, %v4116
        %v4121 = vshll.u32 %v4118, 16
        %v4122 = vshrl.u32 %v4118, 16
        %v4123 = vshll.u32 %v4119, 16
        %v4124 = vshrl.u32 %v4119, 16
        %vm4125 = vc.u32 %v4117, %v4121
        %v4126 = vsel %vm4125, 1, 0
        %v4127 = vadd.s32 %v4117, %v4121
        %v4128 = vadd.s32 %v4120, %v4126
        %vm4129 = vc.u32 %v4127, %v4123
        %v4130 = vsel %vm4129, 1, 0
        %v4131 = vadd.s32 %v4127, %v4123
        %v4132 = vadd.s32 %v4128, %v4130
        %v4133 = vadd.s32 %v4132, %v4122
        %v4134 = vadd.s32 %v4133, %v4124
        %v4135 = vmul.u32 %v4090, %v4081
        %v4136 = vadd.s32 %v4112, %v4131
        %vm4137 = vc.u32 %v4112, %v4131
        %v4138 = vadd.s32 %v4134, 1
        %v4139 = vsel %vm4137, %v4138, %v4134
        %v4140 = vadd.s32 %v4135, %v4139
        %v4141 = vadd.s32 %v4140, 536870912
        %v4142 = vshrl.u32 %v4141, 30
        %v4143 = vshll.u32 %v4142, 30
        %v4144 = vsub.s32 %v4140, %v4143
        %vm4145 = vcmp.lt.s32.totalorder %v4144, 0
        %v4146 = vsub.s32 0, %v4144
        %v4147 = vsel %vm4145, %v4146, %v4144
        %v4148 = vclz %v4147
        %v4149 = vsub.s32 %v4148, 2
        %vm4150 = vcmp.gt.s32.totalorder 0, %v4149
        %v4151 = vsel %vm4150, 0, %v4149
        %v4152 = vsub.s32 32, %v4151
        %v4153 = vshll.u32 %v4144, %v4151
        %v4154 = vshrl.u32 %v4136, %v4152
        %v4155 = vor.u32 %v4153, %v4154
        %v4156 = vsub.s32 4294967266, %v4151
        %v4157 = vadd.s32 %v4156, 127
        %v4158 = vshll.u32 %v4157, 23
        %v4159 = vor.u32 4788187, %v4158
        %v4160 = vand.u32 2147483647, %v4159
        %v4162 = vcvt.s32.f32 %v4155
        %v4163 = vmul.f32 %v4162, %v4160
        %v4164 = vxor.u32 %v4163, 2147483648
        %v4165 = vsel %vm4044, %v4164, %v4163
        %v4166 = vsub.s32 4, %v4142
        %v4167 = vsel %vm4044, %v4166, %v4142
        %v4168 = vsel %vm4043, %v491, %v4165
        %v4169 = vsel %vm4043, 0, %v4167
        %v4170 = vmul.f32 %v4168, %v4168
        %v4171 = vmul.f32 %v4170, -0.001358992
        %v4172 = vadd.f32 %v4171, 0.041655596
        %v4173 = vmul.f32 %v4170, %v4172
        %v4174 = vadd.f32 %v4173, -0.4999988
        %v4175 = vmul.f32 %v4170, %v4174
        %v4176 = vadd.f32 1.0, %v4175
        %v4177 = vmul.f32 %v4168, %v4168
        %v4178 = vmul.f32 %v4177, -0.00019511016
        %v4179 = vadd.f32 %v4178, 0.008332121
        %v4180 = vmul.f32 %v4177, %v4179
        %v4181 = vadd.f32 %v4180, -0.16666654
        %v4182 = vmul.f32 %v4177, %v4181
        %v4183 = vadd.f32 %v4182, 1.0
        %v4184 = vmul.f32 %v4183, %v4168
        %vm4185 = vweird.f32 %v491
        %v4186 = vand.u32 %v4169, 3
        %vm4187 = vcmp.lt.s32.totalorder %v4186, 2
        %vm4188 = vcmp.eq.s32.totalorder %v4186, 0
        %v4189 = vxor.u32 %v4184, 2147483648
        %v4190 = vsel %vm4188, %v4176, %v4189
        %vm4191 = vcmp.eq.s32.totalorder %v4186, 2
        %v4192 = vxor.u32 %v4176, 2147483648
        %v4193 = vsel %vm4191, %v4192, %v4184
        %v4194 = vsel %vm4187, %v4190, %v4193
        %v4195 = vsel %vm4185, nan, %v4194
        %v4196 = vand.u32 2147483647, %v492
        %vm4197 = vcmp.le.f32.partialorder %v4196, 0.7853982
        %vm4198 = vcmp.lt.s32.totalorder %v492, 0
        %v4199 = vand.u32 %v492, 2139095040
        %v4200 = vshrl.u32 %v4199, 23
        %v4201 = vsub.s32 %v4200, 127
        %v4202 = vand.u32 2147483647, %v492
        %v4203 = vand.u32 %v4202, 8388607
        %v4204 = vor.u32 %v4203, 8388608
        %v4205 = vsub.s32 0, %v4204
        %v4206 = vadd.s32 %v4201, 1
        %vm4207 = vcmp.gt.s32.totalorder %v4206, 0
        %v4208 = vsel %vm4207, %v4206, 0
        %v4209 = vshrl.u32 %v4208, 5
        %v4210 = vand.u32 %v4208, 31
        %v4211 = vsub.s32 32, %v4210
        %v4212 = vshrl.u32 683565275, %v4211
        %v4213 = vshll.u32 683565275, %v4210
        %v4214 = vshrl.u32 2475754826, %v4211
        %v4215 = vor.u32 %v4213, %v4214
        %v4216 = vshll.u32 2475754826, %v4210
        %v4217 = vshrl.u32 2131351028, %v4211
        %v4218 = vor.u32 %v4216, %v4217
        %v4219 = vshll.u32 2131351028, %v4210
        %v4220 = vshrl.u32 2102212464, %v4211
        %v4221 = vor.u32 %v4219, %v4220
        %v4222 = vshll.u32 2102212464, %v4210
        %v4223 = vshrl.u32 920167782, %v4211
        %v4224 = vor.u32 %v4222, %v4223
        %v4225 = vshll.u32 920167782, %v4210
        %v4226 = vshrl.u32 1326507024, %v4211
        %v4227 = vor.u32 %v4225, %v4226
        %vm4228 = vcmp.lt.s32.totalorder %v4209, 1
        %vm4229 = vcmp.lt.s32.totalorder %v4209, 2
        %vm4230 = vcmp.lt.s32.totalorder %v4209, 3
        %vm4231 = vcmp.lt.s32.totalorder %v4209, 4
        %v4232 = vsel %vm4228, %v4212, %v4215
        %v4233 = vsel %vm4231, %v4221, 2102212464
        %v4234 = vsel %vm4230, %v4218, %v4233
        %v4235 = vsel %vm4229, %v4232, %v4234
        %v4236 = vsel %vm4228, %v4215, %v4218
        %v4237 = vsel %vm4231, %v4224, 920167782
        %v4238 = vsel %vm4230, %v4221, %v4237
        %v4239 = vsel %vm4229, %v4236, %v4238
        %v4240 = vsel %vm4228, %v4218, %v4221
        %v4241 = vsel %vm4231, %v4227, 1326507024
        %v4242 = vsel %vm4230, %v4224, %v4241
        %v4243 = vsel %vm4229, %v4240, %v4242
        %v4244 = vshll.u32 %v4204, 8
        %v4245 = vand.u32 %v4244, 65535
        %v4246 = vshrl.u32 %v4244, 16
        %v4247 = vand.u32 %v4243, 65535
        %v4248 = vshrl.u32 %v4243, 16
        %v4249 = vmul.u32 %v4245, %v4247
        %v4250 = vmul.u32 %v4245, %v4248
        %v4251 = vmul.u32 %v4246, %v4247
        %v4252 = vmul.u32 %v4246, %v4248
        %v4253 = vshll.u32 %v4250, 16
        %v4254 = vshrl.u32 %v4250, 16
        %v4255 = vshll.u32 %v4251, 16
        %v4256 = vshrl.u32 %v4251, 16
        %vm4257 = vc.u32 %v4249, %v4253
        %v4258 = vsel %vm4257, 1, 0
        %v4259 = vadd.s32 %v4249, %v4253
        %v4260 = vadd.s32 %v4252, %v4258
        %vm4261 = vc.u32 %v4259, %v4255
        %v4262 = vsel %vm4261, 1, 0
        %v4263 = vadd.s32 %v4259, %v4255
        %v4264 = vadd.s32 %v4260, %v4262
        %v4265 = vadd.s32 %v4264, %v4254
        %v4266 = vadd.s32 %v4265, %v4256
        %v4267 = vand.u32 %v4244, 65535
        %v4268 = vshrl.u32 %v4244, 16
        %v4269 = vand.u32 %v4239, 65535
        %v4270 = vshrl.u32 %v4239, 16
        %v4271 = vmul.u32 %v4267, %v4269
        %v4272 = vmul.u32 %v4267, %v4270
        %v4273 = vmul.u32 %v4268, %v4269
        %v4274 = vmul.u32 %v4268, %v4270
        %v4275 = vshll.u32 %v4272, 16
        %v4276 = vshrl.u32 %v4272, 16
        %v4277 = vshll.u32 %v4273, 16
        %v4278 = vshrl.u32 %v4273, 16
        %vm4279 = vc.u32 %v4271, %v4275
        %v4280 = vsel %vm4279, 1, 0
        %v4281 = vadd.s32 %v4271, %v4275
        %v4282 = vadd.s32 %v4274, %v4280
        %vm4283 = vc.u32 %v4281, %v4277
        %v4284 = vsel %vm4283, 1, 0
        %v4285 = vadd.s32 %v4281, %v4277
        %v4286 = vadd.s32 %v4282, %v4284
        %v4287 = vadd.s32 %v4286, %v4276
        %v4288 = vadd.s32 %v4287, %v4278
        %v4289 = vmul.u32 %v4244, %v4235
        %v4290 = vadd.s32 %v4266, %v4285
        %vm4291 = vc.u32 %v4266, %v4285
        %v4292 = vadd.s32 %v4288, 1
        %v4293 = vsel %vm4291, %v4292, %v4288
        %v4294 = vadd.s32 %v4289, %v4293
        %v4295 = vadd.s32 %v4294, 536870912
        %v4296 = vshrl.u32 %v4295, 30
        %v4297 = vshll.u32 %v4296, 30
        %v4298 = vsub.s32 %v4294, %v4297
        %vm4299 = vcmp.lt.s32.totalorder %v4298, 0
        %v4300 = vsub.s32 0, %v4298
        %v4301 = vsel %vm4299, %v4300, %v4298
        %v4302 = vclz %v4301
        %v4303 = vsub.s32 %v4302, 2
        %vm4304 = vcmp.gt.s32.totalorder 0, %v4303
        %v4305 = vsel %vm4304, 0, %v4303
        %v4306 = vsub.s32 32, %v4305
        %v4307 = vshll.u32 %v4298, %v4305
        %v4308 = vshrl.u32 %v4290, %v4306
        %v4309 = vor.u32 %v4307, %v4308
        %v4310 = vsub.s32 4294967266, %v4305
        %v4311 = vadd.s32 %v4310, 127
        %v4312 = vshll.u32 %v4311, 23
        %v4313 = vor.u32 4788187, %v4312
        %v4314 = vand.u32 2147483647, %v4313
        %v4316 = vcvt.s32.f32 %v4309
        %v4317 = vmul.f32 %v4316, %v4314
        %v4318 = vxor.u32 %v4317, 2147483648
        %v4319 = vsel %vm4198, %v4318, %v4317
        %v4320 = vsub.s32 4, %v4296
        %v4321 = vsel %vm4198, %v4320, %v4296
        %v4322 = vsel %vm4197, %v492, %v4319
        %v4323 = vsel %vm4197, 0, %v4321
        %v4324 = vmul.f32 %v4322, %v4322
        %v4325 = vmul.f32 %v4324, -0.001358992
        %v4326 = vadd.f32 %v4325, 0.041655596
        %v4327 = vmul.f32 %v4324, %v4326
        %v4328 = vadd.f32 %v4327, -0.4999988
        %v4329 = vmul.f32 %v4324, %v4328
        %v4330 = vadd.f32 1.0, %v4329
        %v4331 = vmul.f32 %v4322, %v4322
        %v4332 = vmul.f32 %v4331, -0.00019511016
        %v4333 = vadd.f32 %v4332, 0.008332121
        %v4334 = vmul.f32 %v4331, %v4333
        %v4335 = vadd.f32 %v4334, -0.16666654
        %v4336 = vmul.f32 %v4331, %v4335
        %v4337 = vadd.f32 %v4336, 1.0
        %v4338 = vmul.f32 %v4337, %v4322
        %vm4339 = vweird.f32 %v492
        %v4340 = vand.u32 %v4323, 3
        %vm4341 = vcmp.lt.s32.totalorder %v4340, 2
        %vm4342 = vcmp.eq.s32.totalorder %v4340, 0
        %v4343 = vxor.u32 %v4338, 2147483648
        %v4344 = vsel %vm4342, %v4330, %v4343
        %vm4345 = vcmp.eq.s32.totalorder %v4340, 2
        %v4346 = vxor.u32 %v4330, 2147483648
        %v4347 = vsel %vm4345, %v4346, %v4338
        %v4348 = vsel %vm4341, %v4344, %v4347
        %v4349 = vsel %vm4339, nan, %v4348
        %v4350 = vand.u32 2147483647, %v493
        %vm4351 = vcmp.le.f32.partialorder %v4350, 0.7853982
        %vm4352 = vcmp.lt.s32.totalorder %v493, 0
        %v4353 = vand.u32 %v493, 2139095040
        %v4354 = vshrl.u32 %v4353, 23
        %v4355 = vsub.s32 %v4354, 127
        %v4356 = vand.u32 2147483647, %v493
        %v4357 = vand.u32 %v4356, 8388607
        %v4358 = vor.u32 %v4357, 8388608
        %v4359 = vsub.s32 0, %v4358
        %v4360 = vadd.s32 %v4355, 1
        %vm4361 = vcmp.gt.s32.totalorder %v4360, 0
        %v4362 = vsel %vm4361, %v4360, 0
        %v4363 = vshrl.u32 %v4362, 5
        %v4364 = vand.u32 %v4362, 31
        %v4365 = vsub.s32 32, %v4364
        %v4366 = vshrl.u32 683565275, %v4365
        %v4367 = vshll.u32 683565275, %v4364
        %v4368 = vshrl.u32 2475754826, %v4365
        %v4369 = vor.u32 %v4367, %v4368
        %v4370 = vshll.u32 2475754826, %v4364
        %v4371 = vshrl.u32 2131351028, %v4365
        %v4372 = vor.u32 %v4370, %v4371
        %v4373 = vshll.u32 2131351028, %v4364
        %v4374 = vshrl.u32 2102212464, %v4365
        %v4375 = vor.u32 %v4373, %v4374
        %v4376 = vshll.u32 2102212464, %v4364
        %v4377 = vshrl.u32 920167782, %v4365
        %v4378 = vor.u32 %v4376, %v4377
        %v4379 = vshll.u32 920167782, %v4364
        %v4380 = vshrl.u32 1326507024, %v4365
        %v4381 = vor.u32 %v4379, %v4380
        %vm4382 = vcmp.lt.s32.totalorder %v4363, 1
        %vm4383 = vcmp.lt.s32.totalorder %v4363, 2
        %vm4384 = vcmp.lt.s32.totalorder %v4363, 3
        %vm4385 = vcmp.lt.s32.totalorder %v4363, 4
        %v4386 = vsel %vm4382, %v4366, %v4369
        %v4387 = vsel %vm4385, %v4375, 2102212464
        %v4388 = vsel %vm4384, %v4372, %v4387
        %v4389 = vsel %vm4383, %v4386, %v4388
        %v4390 = vsel %vm4382, %v4369, %v4372
        %v4391 = vsel %vm4385, %v4378, 920167782
        %v4392 = vsel %vm4384, %v4375, %v4391
        %v4393 = vsel %vm4383, %v4390, %v4392
        %v4394 = vsel %vm4382, %v4372, %v4375
        %v4395 = vsel %vm4385, %v4381, 1326507024
        %v4396 = vsel %vm4384, %v4378, %v4395
        %v4397 = vsel %vm4383, %v4394, %v4396
        %v4398 = vshll.u32 %v4358, 8
        %v4399 = vand.u32 %v4398, 65535
        %v4400 = vshrl.u32 %v4398, 16
        %v4401 = vand.u32 %v4397, 65535
        %v4402 = vshrl.u32 %v4397, 16
        %v4403 = vmul.u32 %v4399, %v4401
        %v4404 = vmul.u32 %v4399, %v4402
        %v4405 = vmul.u32 %v4400, %v4401
        %v4406 = vmul.u32 %v4400, %v4402
        %v4407 = vshll.u32 %v4404, 16
        %v4408 = vshrl.u32 %v4404, 16
        %v4409 = vshll.u32 %v4405, 16
        %v4410 = vshrl.u32 %v4405, 16
        %vm4411 = vc.u32 %v4403, %v4407
        %v4412 = vsel %vm4411, 1, 0
        %v4413 = vadd.s32 %v4403, %v4407
        %v4414 = vadd.s32 %v4406, %v4412
        %vm4415 = vc.u32 %v4413, %v4409
        %v4416 = vsel %vm4415, 1, 0
        %v4417 = vadd.s32 %v4413, %v4409
        %v4418 = vadd.s32 %v4414, %v4416
        %v4419 = vadd.s32 %v4418, %v4408
        %v4420 = vadd.s32 %v4419, %v4410
        %v4421 = vand.u32 %v4398, 65535
        %v4422 = vshrl.u32 %v4398, 16
        %v4423 = vand.u32 %v4393, 65535
        %v4424 = vshrl.u32 %v4393, 16
        %v4425 = vmul.u32 %v4421, %v4423
        %v4426 = vmul.u32 %v4421, %v4424
        %v4427 = vmul.u32 %v4422, %v4423
        %v4428 = vmul.u32 %v4422, %v4424
        %v4429 = vshll.u32 %v4426, 16
        %v4430 = vshrl.u32 %v4426, 16
        %v4431 = vshll.u32 %v4427, 16
        %v4432 = vshrl.u32 %v4427, 16
        %vm4433 = vc.u32 %v4425, %v4429
        %v4434 = vsel %vm4433, 1, 0
        %v4435 = vadd.s32 %v4425, %v4429
        %v4436 = vadd.s32 %v4428, %v4434
        %vm4437 = vc.u32 %v4435, %v4431
        %v4438 = vsel %vm4437, 1, 0
        %v4439 = vadd.s32 %v4435, %v4431
        %v4440 = vadd.s32 %v4436, %v4438
        %v4441 = vadd.s32 %v4440, %v4430
        %v4442 = vadd.s32 %v4441, %v4432
        %v4443 = vmul.u32 %v4398, %v4389
        %v4444 = vadd.s32 %v4420, %v4439
        %vm4445 = vc.u32 %v4420, %v4439
        %v4446 = vadd.s32 %v4442, 1
        %v4447 = vsel %vm4445, %v4446, %v4442
        %v4448 = vadd.s32 %v4443, %v4447
        %v4449 = vadd.s32 %v4448, 536870912
        %v4450 = vshrl.u32 %v4449, 30
        %v4451 = vshll.u32 %v4450, 30
        %v4452 = vsub.s32 %v4448, %v4451
        %vm4453 = vcmp.lt.s32.totalorder %v4452, 0
        %v4454 = vsub.s32 0, %v4452
        %v4455 = vsel %vm4453, %v4454, %v4452
        %v4456 = vclz %v4455
        %v4457 = vsub.s32 %v4456, 2
        %vm4458 = vcmp.gt.s32.totalorder 0, %v4457
        %v4459 = vsel %vm4458, 0, %v4457
        %v4460 = vsub.s32 32, %v4459
        %v4461 = vshll.u32 %v4452, %v4459
        %v4462 = vshrl.u32 %v4444, %v4460
        %v4463 = vor.u32 %v4461, %v4462
        %v4464 = vsub.s32 4294967266, %v4459
        %v4465 = vadd.s32 %v4464, 127
        %v4466 = vshll.u32 %v4465, 23
        %v4467 = vor.u32 4788187, %v4466
        %v4468 = vand.u32 2147483647, %v4467
        %v4470 = vcvt.s32.f32 %v4463
        %v4471 = vmul.f32 %v4470, %v4468
        %v4472 = vxor.u32 %v4471, 2147483648
        %v4473 = vsel %vm4352, %v4472, %v4471
        %v4474 = vsub.s32 4, %v4450
        %v4475 = vsel %vm4352, %v4474, %v4450
        %v4476 = vsel %vm4351, %v493, %v4473
        %v4477 = vsel %vm4351, 0, %v4475
        %v4478 = vmul.f32 %v4476, %v4476
        %v4479 = vmul.f32 %v4478, -0.001358992
        %v4480 = vadd.f32 %v4479, 0.041655596
        %v4481 = vmul.f32 %v4478, %v4480
        %v4482 = vadd.f32 %v4481, -0.4999988
        %v4483 = vmul.f32 %v4478, %v4482
        %v4484 = vadd.f32 1.0, %v4483
        %v4485 = vmul.f32 %v4476, %v4476
        %v4486 = vmul.f32 %v4485, -0.00019511016
        %v4487 = vadd.f32 %v4486, 0.008332121
        %v4488 = vmul.f32 %v4485, %v4487
        %v4489 = vadd.f32 %v4488, -0.16666654
        %v4490 = vmul.f32 %v4485, %v4489
        %v4491 = vadd.f32 %v4490, 1.0
        %v4492 = vmul.f32 %v4491, %v4476
        %vm4493 = vweird.f32 %v493
        %v4494 = vand.u32 %v4477, 3
        %vm4495 = vcmp.lt.s32.totalorder %v4494, 2
        %vm4496 = vcmp.eq.s32.totalorder %v4494, 0
        %v4497 = vxor.u32 %v4492, 2147483648
        %v4498 = vsel %vm4496, %v4484, %v4497
        %vm4499 = vcmp.eq.s32.totalorder %v4494, 2
        %v4500 = vxor.u32 %v4484, 2147483648
        %v4501 = vsel %vm4499, %v4500, %v4492
        %v4502 = vsel %vm4495, %v4498, %v4501
        %v4503 = vsel %vm4493, nan, %v4502
        %v4504 = vand.u32 2147483647, %v494
        %vm4505 = vcmp.le.f32.partialorder %v4504, 0.7853982
        %vm4506 = vcmp.lt.s32.totalorder %v494, 0
        %v4507 = vand.u32 %v494, 2139095040
        %v4508 = vshrl.u32 %v4507, 23
        %v4509 = vsub.s32 %v4508, 127
        %v4510 = vand.u32 2147483647, %v494
        %v4511 = vand.u32 %v4510, 8388607
        %v4512 = vor.u32 %v4511, 8388608
        %v4513 = vsub.s32 0, %v4512
        %v4514 = vadd.s32 %v4509, 1
        %vm4515 = vcmp.gt.s32.totalorder %v4514, 0
        %v4516 = vsel %vm4515, %v4514, 0
        %v4517 = vshrl.u32 %v4516, 5
        %v4518 = vand.u32 %v4516, 31
        %v4519 = vsub.s32 32, %v4518
        %v4520 = vshrl.u32 683565275, %v4519
        %v4521 = vshll.u32 683565275, %v4518
        %v4522 = vshrl.u32 2475754826, %v4519
        %v4523 = vor.u32 %v4521, %v4522
        %v4524 = vshll.u32 2475754826, %v4518
        %v4525 = vshrl.u32 2131351028, %v4519
        %v4526 = vor.u32 %v4524, %v4525
        %v4527 = vshll.u32 2131351028, %v4518
        %v4528 = vshrl.u32 2102212464, %v4519
        %v4529 = vor.u32 %v4527, %v4528
        %v4530 = vshll.u32 2102212464, %v4518
        %v4531 = vshrl.u32 920167782, %v4519
        %v4532 = vor.u32 %v4530, %v4531
        %v4533 = vshll.u32 920167782, %v4518
        %v4534 = vshrl.u32 1326507024, %v4519
        %v4535 = vor.u32 %v4533, %v4534
        %vm4536 = vcmp.lt.s32.totalorder %v4517, 1
        %vm4537 = vcmp.lt.s32.totalorder %v4517, 2
        %vm4538 = vcmp.lt.s32.totalorder %v4517, 3
        %vm4539 = vcmp.lt.s32.totalorder %v4517, 4
        %v4540 = vsel %vm4536, %v4520, %v4523
        %v4541 = vsel %vm4539, %v4529, 2102212464
        %v4542 = vsel %vm4538, %v4526, %v4541
        %v4543 = vsel %vm4537, %v4540, %v4542
        %v4544 = vsel %vm4536, %v4523, %v4526
        %v4545 = vsel %vm4539, %v4532, 920167782
        %v4546 = vsel %vm4538, %v4529, %v4545
        %v4547 = vsel %vm4537, %v4544, %v4546
        %v4548 = vsel %vm4536, %v4526, %v4529
        %v4549 = vsel %vm4539, %v4535, 1326507024
        %v4550 = vsel %vm4538, %v4532, %v4549
        %v4551 = vsel %vm4537, %v4548, %v4550
        %v4552 = vshll.u32 %v4512, 8
        %v4553 = vand.u32 %v4552, 65535
        %v4554 = vshrl.u32 %v4552, 16
        %v4555 = vand.u32 %v4551, 65535
        %v4556 = vshrl.u32 %v4551, 16
        %v4557 = vmul.u32 %v4553, %v4555
        %v4558 = vmul.u32 %v4553, %v4556
        %v4559 = vmul.u32 %v4554, %v4555
        %v4560 = vmul.u32 %v4554, %v4556
        %v4561 = vshll.u32 %v4558, 16
        %v4562 = vshrl.u32 %v4558, 16
        %v4563 = vshll.u32 %v4559, 16
        %v4564 = vshrl.u32 %v4559, 16
        %vm4565 = vc.u32 %v4557, %v4561
        %v4566 = vsel %vm4565, 1, 0
        %v4567 = vadd.s32 %v4557, %v4561
        %v4568 = vadd.s32 %v4560, %v4566
        %vm4569 = vc.u32 %v4567, %v4563
        %v4570 = vsel %vm4569, 1, 0
        %v4571 = vadd.s32 %v4567, %v4563
        %v4572 = vadd.s32 %v4568, %v4570
        %v4573 = vadd.s32 %v4572, %v4562
        %v4574 = vadd.s32 %v4573, %v4564
        %v4575 = vand.u32 %v4552, 65535
        %v4576 = vshrl.u32 %v4552, 16
        %v4577 = vand.u32 %v4547, 65535
        %v4578 = vshrl.u32 %v4547, 16
        %v4579 = vmul.u32 %v4575, %v4577
        %v4580 = vmul.u32 %v4575, %v4578
        %v4581 = vmul.u32 %v4576, %v4577
        %v4582 = vmul.u32 %v4576, %v4578
        %v4583 = vshll.u32 %v4580, 16
        %v4584 = vshrl.u32 %v4580, 16
        %v4585 = vshll.u32 %v4581, 16
        %v4586 = vshrl.u32 %v4581, 16
        %vm4587 = vc.u32 %v4579, %v4583
        %v4588 = vsel %vm4587, 1, 0
        %v4589 = vadd.s32 %v4579, %v4583
        %v4590 = vadd.s32 %v4582, %v4588
        %vm4591 = vc.u32 %v4589, %v4585
        %v4592 = vsel %vm4591, 1, 0
        %v4593 = vadd.s32 %v4589, %v4585
        %v4594 = vadd.s32 %v4590, %v4592
        %v4595 = vadd.s32 %v4594, %v4584
        %v4596 = vadd.s32 %v4595, %v4586
        %v4597 = vmul.u32 %v4552, %v4543
        %v4598 = vadd.s32 %v4574, %v4593
        %vm4599 = vc.u32 %v4574, %v4593
        %v4600 = vadd.s32 %v4596, 1
        %v4601 = vsel %vm4599, %v4600, %v4596
        %v4602 = vadd.s32 %v4597, %v4601
        %v4603 = vadd.s32 %v4602, 536870912
        %v4604 = vshrl.u32 %v4603, 30
        %v4605 = vshll.u32 %v4604, 30
        %v4606 = vsub.s32 %v4602, %v4605
        %vm4607 = vcmp.lt.s32.totalorder %v4606, 0
        %v4608 = vsub.s32 0, %v4606
        %v4609 = vsel %vm4607, %v4608, %v4606
        %v4610 = vclz %v4609
        %v4611 = vsub.s32 %v4610, 2
        %vm4612 = vcmp.gt.s32.totalorder 0, %v4611
        %v4613 = vsel %vm4612, 0, %v4611
        %v4614 = vsub.s32 32, %v4613
        %v4615 = vshll.u32 %v4606, %v4613
        %v4616 = vshrl.u32 %v4598, %v4614
        %v4617 = vor.u32 %v4615, %v4616
        %v4618 = vsub.s32 4294967266, %v4613
        %v4619 = vadd.s32 %v4618, 127
        %v4620 = vshll.u32 %v4619, 23
        %v4621 = vor.u32 4788187, %v4620
        %v4622 = vand.u32 2147483647, %v4621
        %v4624 = vcvt.s32.f32 %v4617
        %v4625 = vmul.f32 %v4624, %v4622
        %v4626 = vxor.u32 %v4625, 2147483648
        %v4627 = vsel %vm4506, %v4626, %v4625
        %v4628 = vsub.s32 4, %v4604
        %v4629 = vsel %vm4506, %v4628, %v4604
        %v4630 = vsel %vm4505, %v494, %v4627
        %v4631 = vsel %vm4505, 0, %v4629
        %v4632 = vmul.f32 %v4630, %v4630
        %v4633 = vmul.f32 %v4632, -0.001358992
        %v4634 = vadd.f32 %v4633, 0.041655596
        %v4635 = vmul.f32 %v4632, %v4634
        %v4636 = vadd.f32 %v4635, -0.4999988
        %v4637 = vmul.f32 %v4632, %v4636
        %v4638 = vadd.f32 1.0, %v4637
        %v4639 = vmul.f32 %v4630, %v4630
        %v4640 = vmul.f32 %v4639, -0.00019511016
        %v4641 = vadd.f32 %v4640, 0.008332121
        %v4642 = vmul.f32 %v4639, %v4641
        %v4643 = vadd.f32 %v4642, -0.16666654
        %v4644 = vmul.f32 %v4639, %v4643
        %v4645 = vadd.f32 %v4644, 1.0
        %v4646 = vmul.f32 %v4645, %v4630
        %vm4647 = vweird.f32 %v494
        %v4648 = vand.u32 %v4631, 3
        %vm4649 = vcmp.lt.s32.totalorder %v4648, 2
        %vm4650 = vcmp.eq.s32.totalorder %v4648, 0
        %v4651 = vxor.u32 %v4646, 2147483648
        %v4652 = vsel %vm4650, %v4638, %v4651
        %vm4653 = vcmp.eq.s32.totalorder %v4648, 2
        %v4654 = vxor.u32 %v4638, 2147483648
        %v4655 = vsel %vm4653, %v4654, %v4646
        %v4656 = vsel %vm4649, %v4652, %v4655
        %v4657 = vsel %vm4647, nan, %v4656
        %v4658 = vand.u32 2147483647, %v495
        %vm4659 = vcmp.le.f32.partialorder %v4658, 0.7853982
        %vm4660 = vcmp.lt.s32.totalorder %v495, 0
        %v4661 = vand.u32 %v495, 2139095040
        %v4662 = vshrl.u32 %v4661, 23
        %v4663 = vsub.s32 %v4662, 127
        %v4664 = vand.u32 2147483647, %v495
        %v4665 = vand.u32 %v4664, 8388607
        %v4666 = vor.u32 %v4665, 8388608
        %v4667 = vsub.s32 0, %v4666
        %v4668 = vadd.s32 %v4663, 1
        %vm4669 = vcmp.gt.s32.totalorder %v4668, 0
        %v4670 = vsel %vm4669, %v4668, 0
        %v4671 = vshrl.u32 %v4670, 5
        %v4672 = vand.u32 %v4670, 31
        %v4673 = vsub.s32 32, %v4672
        %v4674 = vshrl.u32 683565275, %v4673
        %v4675 = vshll.u32 683565275, %v4672
        %v4676 = vshrl.u32 2475754826, %v4673
        %v4677 = vor.u32 %v4675, %v4676
        %v4678 = vshll.u32 2475754826, %v4672
        %v4679 = vshrl.u32 2131351028, %v4673
        %v4680 = vor.u32 %v4678, %v4679
        %v4681 = vshll.u32 2131351028, %v4672
        %v4682 = vshrl.u32 2102212464, %v4673
        %v4683 = vor.u32 %v4681, %v4682
        %v4684 = vshll.u32 2102212464, %v4672
        %v4685 = vshrl.u32 920167782, %v4673
        %v4686 = vor.u32 %v4684, %v4685
        %v4687 = vshll.u32 920167782, %v4672
        %v4688 = vshrl.u32 1326507024, %v4673
        %v4689 = vor.u32 %v4687, %v4688
        %vm4690 = vcmp.lt.s32.totalorder %v4671, 1
        %vm4691 = vcmp.lt.s32.totalorder %v4671, 2
        %vm4692 = vcmp.lt.s32.totalorder %v4671, 3
        %vm4693 = vcmp.lt.s32.totalorder %v4671, 4
        %v4694 = vsel %vm4690, %v4674, %v4677
        %v4695 = vsel %vm4693, %v4683, 2102212464
        %v4696 = vsel %vm4692, %v4680, %v4695
        %v4697 = vsel %vm4691, %v4694, %v4696
        %v4698 = vsel %vm4690, %v4677, %v4680
        %v4699 = vsel %vm4693, %v4686, 920167782
        %v4700 = vsel %vm4692, %v4683, %v4699
        %v4701 = vsel %vm4691, %v4698, %v4700
        %v4702 = vsel %vm4690, %v4680, %v4683
        %v4703 = vsel %vm4693, %v4689, 1326507024
        %v4704 = vsel %vm4692, %v4686, %v4703
        %v4705 = vsel %vm4691, %v4702, %v4704
        %v4706 = vshll.u32 %v4666, 8
        %v4707 = vand.u32 %v4706, 65535
        %v4708 = vshrl.u32 %v4706, 16
        %v4709 = vand.u32 %v4705, 65535
        %v4710 = vshrl.u32 %v4705, 16
        %v4711 = vmul.u32 %v4707, %v4709
        %v4712 = vmul.u32 %v4707, %v4710
        %v4713 = vmul.u32 %v4708, %v4709
        %v4714 = vmul.u32 %v4708, %v4710
        %v4715 = vshll.u32 %v4712, 16
        %v4716 = vshrl.u32 %v4712, 16
        %v4717 = vshll.u32 %v4713, 16
        %v4718 = vshrl.u32 %v4713, 16
        %vm4719 = vc.u32 %v4711, %v4715
        %v4720 = vsel %vm4719, 1, 0
        %v4721 = vadd.s32 %v4711, %v4715
        %v4722 = vadd.s32 %v4714, %v4720
        %vm4723 = vc.u32 %v4721, %v4717
        %v4724 = vsel %vm4723, 1, 0
        %v4725 = vadd.s32 %v4721, %v4717
        %v4726 = vadd.s32 %v4722, %v4724
        %v4727 = vadd.s32 %v4726, %v4716
        %v4728 = vadd.s32 %v4727, %v4718
        %v4729 = vand.u32 %v4706, 65535
        %v4730 = vshrl.u32 %v4706, 16
        %v4731 = vand.u32 %v4701, 65535
        %v4732 = vshrl.u32 %v4701, 16
        %v4733 = vmul.u32 %v4729, %v4731
        %v4734 = vmul.u32 %v4729, %v4732
        %v4735 = vmul.u32 %v4730, %v4731
        %v4736 = vmul.u32 %v4730, %v4732
        %v4737 = vshll.u32 %v4734, 16
        %v4738 = vshrl.u32 %v4734, 16
        %v4739 = vshll.u32 %v4735, 16
        %v4740 = vshrl.u32 %v4735, 16
        %vm4741 = vc.u32 %v4733, %v4737
        %v4742 = vsel %vm4741, 1, 0
        %v4743 = vadd.s32 %v4733, %v4737
        %v4744 = vadd.s32 %v4736, %v4742
        %vm4745 = vc.u32 %v4743, %v4739
        %v4746 = vsel %vm4745, 1, 0
        %v4747 = vadd.s32 %v4743, %v4739
        %v4748 = vadd.s32 %v4744, %v4746
        %v4749 = vadd.s32 %v4748, %v4738
        %v4750 = vadd.s32 %v4749, %v4740
        %v4751 = vmul.u32 %v4706, %v4697
        %v4752 = vadd.s32 %v4728, %v4747
        %vm4753 = vc.u32 %v4728, %v4747
        %v4754 = vadd.s32 %v4750, 1
        %v4755 = vsel %vm4753, %v4754, %v4750
        %v4756 = vadd.s32 %v4751, %v4755
        %v4757 = vadd.s32 %v4756, 536870912
        %v4758 = vshrl.u32 %v4757, 30
        %v4759 = vshll.u32 %v4758, 30
        %v4760 = vsub.s32 %v4756, %v4759
        %vm4761 = vcmp.lt.s32.totalorder %v4760, 0
        %v4762 = vsub.s32 0, %v4760
        %v4763 = vsel %vm4761, %v4762, %v4760
        %v4764 = vclz %v4763
        %v4765 = vsub.s32 %v4764, 2
        %vm4766 = vcmp.gt.s32.totalorder 0, %v4765
        %v4767 = vsel %vm4766, 0, %v4765
        %v4768 = vsub.s32 32, %v4767
        %v4769 = vshll.u32 %v4760, %v4767
        %v4770 = vshrl.u32 %v4752, %v4768
        %v4771 = vor.u32 %v4769, %v4770
        %v4772 = vsub.s32 4294967266, %v4767
        %v4773 = vadd.s32 %v4772, 127
        %v4774 = vshll.u32 %v4773, 23
        %v4775 = vor.u32 4788187, %v4774
        %v4776 = vand.u32 2147483647, %v4775
        %v4778 = vcvt.s32.f32 %v4771
        %v4779 = vmul.f32 %v4778, %v4776
        %v4780 = vxor.u32 %v4779, 2147483648
        %v4781 = vsel %vm4660, %v4780, %v4779
        %v4782 = vsub.s32 4, %v4758
        %v4783 = vsel %vm4660, %v4782, %v4758
        %v4784 = vsel %vm4659, %v495, %v4781
        %v4785 = vsel %vm4659, 0, %v4783
        %v4786 = vmul.f32 %v4784, %v4784
        %v4787 = vmul.f32 %v4786, -0.001358992
        %v4788 = vadd.f32 %v4787, 0.041655596
        %v4789 = vmul.f32 %v4786, %v4788
        %v4790 = vadd.f32 %v4789, -0.4999988
        %v4791 = vmul.f32 %v4786, %v4790
        %v4792 = vadd.f32 1.0, %v4791
        %v4793 = vmul.f32 %v4784, %v4784
        %v4794 = vmul.f32 %v4793, -0.00019511016
        %v4795 = vadd.f32 %v4794, 0.008332121
        %v4796 = vmul.f32 %v4793, %v4795
        %v4797 = vadd.f32 %v4796, -0.16666654
        %v4798 = vmul.f32 %v4793, %v4797
        %v4799 = vadd.f32 %v4798, 1.0
        %v4800 = vmul.f32 %v4799, %v4784
        %vm4801 = vweird.f32 %v495
        %v4802 = vand.u32 %v4785, 3
        %vm4803 = vcmp.lt.s32.totalorder %v4802, 2
        %vm4804 = vcmp.eq.s32.totalorder %v4802, 0
        %v4805 = vxor.u32 %v4800, 2147483648
        %v4806 = vsel %vm4804, %v4792, %v4805
        %vm4807 = vcmp.eq.s32.totalorder %v4802, 2
        %v4808 = vxor.u32 %v4792, 2147483648
        %v4809 = vsel %vm4807, %v4808, %v4800
        %v4810 = vsel %vm4803, %v4806, %v4809
        %v4811 = vsel %vm4801, nan, %v4810
        %v4812 = vand.u32 2147483647, %v496
        %vm4813 = vcmp.le.f32.partialorder %v4812, 0.7853982
        %vm4814 = vcmp.lt.s32.totalorder %v496, 0
        %v4815 = vand.u32 %v496, 2139095040
        %v4816 = vshrl.u32 %v4815, 23
        %v4817 = vsub.s32 %v4816, 127
        %v4818 = vand.u32 2147483647, %v496
        %v4819 = vand.u32 %v4818, 8388607
        %v4820 = vor.u32 %v4819, 8388608
        %v4821 = vsub.s32 0, %v4820
        %v4822 = vadd.s32 %v4817, 1
        %vm4823 = vcmp.gt.s32.totalorder %v4822, 0
        %v4824 = vsel %vm4823, %v4822, 0
        %v4825 = vshrl.u32 %v4824, 5
        %v4826 = vand.u32 %v4824, 31
        %v4827 = vsub.s32 32, %v4826
        %v4828 = vshrl.u32 683565275, %v4827
        %v4829 = vshll.u32 683565275, %v4826
        %v4830 = vshrl.u32 2475754826, %v4827
        %v4831 = vor.u32 %v4829, %v4830
        %v4832 = vshll.u32 2475754826, %v4826
        %v4833 = vshrl.u32 2131351028, %v4827
        %v4834 = vor.u32 %v4832, %v4833
        %v4835 = vshll.u32 2131351028, %v4826
        %v4836 = vshrl.u32 2102212464, %v4827
        %v4837 = vor.u32 %v4835, %v4836
        %v4838 = vshll.u32 2102212464, %v4826
        %v4839 = vshrl.u32 920167782, %v4827
        %v4840 = vor.u32 %v4838, %v4839
        %v4841 = vshll.u32 920167782, %v4826
        %v4842 = vshrl.u32 1326507024, %v4827
        %v4843 = vor.u32 %v4841, %v4842
        %vm4844 = vcmp.lt.s32.totalorder %v4825, 1
        %vm4845 = vcmp.lt.s32.totalorder %v4825, 2
        %vm4846 = vcmp.lt.s32.totalorder %v4825, 3
        %vm4847 = vcmp.lt.s32.totalorder %v4825, 4
        %v4848 = vsel %vm4844, %v4828, %v4831
        %v4849 = vsel %vm4847, %v4837, 2102212464
        %v4850 = vsel %vm4846, %v4834, %v4849
        %v4851 = vsel %vm4845, %v4848, %v4850
        %v4852 = vsel %vm4844, %v4831, %v4834
        %v4853 = vsel %vm4847, %v4840, 920167782
        %v4854 = vsel %vm4846, %v4837, %v4853
        %v4855 = vsel %vm4845, %v4852, %v4854
        %v4856 = vsel %vm4844, %v4834, %v4837
        %v4857 = vsel %vm4847, %v4843, 1326507024
        %v4858 = vsel %vm4846, %v4840, %v4857
        %v4859 = vsel %vm4845, %v4856, %v4858
        %v4860 = vshll.u32 %v4820, 8
        %v4861 = vand.u32 %v4860, 65535
        %v4862 = vshrl.u32 %v4860, 16
        %v4863 = vand.u32 %v4859, 65535
        %v4864 = vshrl.u32 %v4859, 16
        %v4865 = vmul.u32 %v4861, %v4863
        %v4866 = vmul.u32 %v4861, %v4864
        %v4867 = vmul.u32 %v4862, %v4863
        %v4868 = vmul.u32 %v4862, %v4864
        %v4869 = vshll.u32 %v4866, 16
        %v4870 = vshrl.u32 %v4866, 16
        %v4871 = vshll.u32 %v4867, 16
        %v4872 = vshrl.u32 %v4867, 16
        %vm4873 = vc.u32 %v4865, %v4869
        %v4874 = vsel %vm4873, 1, 0
        %v4875 = vadd.s32 %v4865, %v4869
        %v4876 = vadd.s32 %v4868, %v4874
        %vm4877 = vc.u32 %v4875, %v4871
        %v4878 = vsel %vm4877, 1, 0
        %v4879 = vadd.s32 %v4875, %v4871
        %v4880 = vadd.s32 %v4876, %v4878
        %v4881 = vadd.s32 %v4880, %v4870
        %v4882 = vadd.s32 %v4881, %v4872
        %v4883 = vand.u32 %v4860, 65535
        %v4884 = vshrl.u32 %v4860, 16
        %v4885 = vand.u32 %v4855, 65535
        %v4886 = vshrl.u32 %v4855, 16
        %v4887 = vmul.u32 %v4883, %v4885
        %v4888 = vmul.u32 %v4883, %v4886
        %v4889 = vmul.u32 %v4884, %v4885
        %v4890 = vmul.u32 %v4884, %v4886
        %v4891 = vshll.u32 %v4888, 16
        %v4892 = vshrl.u32 %v4888, 16
        %v4893 = vshll.u32 %v4889, 16
        %v4894 = vshrl.u32 %v4889, 16
        %vm4895 = vc.u32 %v4887, %v4891
        %v4896 = vsel %vm4895, 1, 0
        %v4897 = vadd.s32 %v4887, %v4891
        %v4898 = vadd.s32 %v4890, %v4896
        %vm4899 = vc.u32 %v4897, %v4893
        %v4900 = vsel %vm4899, 1, 0
        %v4901 = vadd.s32 %v4897, %v4893
        %v4902 = vadd.s32 %v4898, %v4900
        %v4903 = vadd.s32 %v4902, %v4892
        %v4904 = vadd.s32 %v4903, %v4894
        %v4905 = vmul.u32 %v4860, %v4851
        %v4906 = vadd.s32 %v4882, %v4901
        %vm4907 = vc.u32 %v4882, %v4901
        %v4908 = vadd.s32 %v4904, 1
        %v4909 = vsel %vm4907, %v4908, %v4904
        %v4910 = vadd.s32 %v4905, %v4909
        %v4911 = vadd.s32 %v4910, 536870912
        %v4912 = vshrl.u32 %v4911, 30
        %v4913 = vshll.u32 %v4912, 30
        %v4914 = vsub.s32 %v4910, %v4913
        %vm4915 = vcmp.lt.s32.totalorder %v4914, 0
        %v4916 = vsub.s32 0, %v4914
        %v4917 = vsel %vm4915, %v4916, %v4914
        %v4918 = vclz %v4917
        %v4919 = vsub.s32 %v4918, 2
        %vm4920 = vcmp.gt.s32.totalorder 0, %v4919
        %v4921 = vsel %vm4920, 0, %v4919
        %v4922 = vsub.s32 32, %v4921
        %v4923 = vshll.u32 %v4914, %v4921
        %v4924 = vshrl.u32 %v4906, %v4922
        %v4925 = vor.u32 %v4923, %v4924
        %v4926 = vsub.s32 4294967266, %v4921
        %v4927 = vadd.s32 %v4926, 127
        %v4928 = vshll.u32 %v4927, 23
        %v4929 = vor.u32 4788187, %v4928
        %v4930 = vand.u32 2147483647, %v4929
        %v4932 = vcvt.s32.f32 %v4925
        %v4933 = vmul.f32 %v4932, %v4930
        %v4934 = vxor.u32 %v4933, 2147483648
        %v4935 = vsel %vm4814, %v4934, %v4933
        %v4936 = vsub.s32 4, %v4912
        %v4937 = vsel %vm4814, %v4936, %v4912
        %v4938 = vsel %vm4813, %v496, %v4935
        %v4939 = vsel %vm4813, 0, %v4937
        %v4940 = vmul.f32 %v4938, %v4938
        %v4941 = vmul.f32 %v4940, -0.001358992
        %v4942 = vadd.f32 %v4941, 0.041655596
        %v4943 = vmul.f32 %v4940, %v4942
        %v4944 = vadd.f32 %v4943, -0.4999988
        %v4945 = vmul.f32 %v4940, %v4944
        %v4946 = vadd.f32 1.0, %v4945
        %v4947 = vmul.f32 %v4938, %v4938
        %v4948 = vmul.f32 %v4947, -0.00019511016
        %v4949 = vadd.f32 %v4948, 0.008332121
        %v4950 = vmul.f32 %v4947, %v4949
        %v4951 = vadd.f32 %v4950, -0.16666654
        %v4952 = vmul.f32 %v4947, %v4951
        %v4953 = vadd.f32 %v4952, 1.0
        %v4954 = vmul.f32 %v4953, %v4938
        %vm4955 = vweird.f32 %v496
        %v4956 = vand.u32 %v4939, 3
        %vm4957 = vcmp.lt.s32.totalorder %v4956, 2
        %vm4958 = vcmp.eq.s32.totalorder %v4956, 0
        %v4959 = vxor.u32 %v4954, 2147483648
        %v4960 = vsel %vm4958, %v4946, %v4959
        %vm4961 = vcmp.eq.s32.totalorder %v4956, 2
        %v4962 = vxor.u32 %v4946, 2147483648
        %v4963 = vsel %vm4961, %v4962, %v4954
        %v4964 = vsel %vm4957, %v4960, %v4963
        %v4965 = vsel %vm4955, nan, %v4964
        %v4966 = vand.u32 2147483647, %v497
        %vm4967 = vcmp.le.f32.partialorder %v4966, 0.7853982
        %vm4968 = vcmp.lt.s32.totalorder %v497, 0
        %v4969 = vand.u32 %v497, 2139095040
        %v4970 = vshrl.u32 %v4969, 23
        %v4971 = vsub.s32 %v4970, 127
        %v4972 = vand.u32 2147483647, %v497
        %v4973 = vand.u32 %v4972, 8388607
        %v4974 = vor.u32 %v4973, 8388608
        %v4975 = vsub.s32 0, %v4974
        %v4976 = vadd.s32 %v4971, 1
        %vm4977 = vcmp.gt.s32.totalorder %v4976, 0
        %v4978 = vsel %vm4977, %v4976, 0
        %v4979 = vshrl.u32 %v4978, 5
        %v4980 = vand.u32 %v4978, 31
        %v4981 = vsub.s32 32, %v4980
        %v4982 = vshrl.u32 683565275, %v4981
        %v4983 = vshll.u32 683565275, %v4980
        %v4984 = vshrl.u32 2475754826, %v4981
        %v4985 = vor.u32 %v4983, %v4984
        %v4986 = vshll.u32 2475754826, %v4980
        %v4987 = vshrl.u32 2131351028, %v4981
        %v4988 = vor.u32 %v4986, %v4987
        %v4989 = vshll.u32 2131351028, %v4980
        %v4990 = vshrl.u32 2102212464, %v4981
        %v4991 = vor.u32 %v4989, %v4990
        %v4992 = vshll.u32 2102212464, %v4980
        %v4993 = vshrl.u32 920167782, %v4981
        %v4994 = vor.u32 %v4992, %v4993
        %v4995 = vshll.u32 920167782, %v4980
        %v4996 = vshrl.u32 1326507024, %v4981
        %v4997 = vor.u32 %v4995, %v4996
        %vm4998 = vcmp.lt.s32.totalorder %v4979, 1
        %vm4999 = vcmp.lt.s32.totalorder %v4979, 2
        %vm5000 = vcmp.lt.s32.totalorder %v4979, 3
        %vm5001 = vcmp.lt.s32.totalorder %v4979, 4
        %v5002 = vsel %vm4998, %v4982, %v4985
        %v5003 = vsel %vm5001, %v4991, 2102212464
        %v5004 = vsel %vm5000, %v4988, %v5003
        %v5005 = vsel %vm4999, %v5002, %v5004
        %v5006 = vsel %vm4998, %v4985, %v4988
        %v5007 = vsel %vm5001, %v4994, 920167782
        %v5008 = vsel %vm5000, %v4991, %v5007
        %v5009 = vsel %vm4999, %v5006, %v5008
        %v5010 = vsel %vm4998, %v4988, %v4991
        %v5011 = vsel %vm5001, %v4997, 1326507024
        %v5012 = vsel %vm5000, %v4994, %v5011
        %v5013 = vsel %vm4999, %v5010, %v5012
        %v5014 = vshll.u32 %v4974, 8
        %v5015 = vand.u32 %v5014, 65535
        %v5016 = vshrl.u32 %v5014, 16
        %v5017 = vand.u32 %v5013, 65535
        %v5018 = vshrl.u32 %v5013, 16
        %v5019 = vmul.u32 %v5015, %v5017
        %v5020 = vmul.u32 %v5015, %v5018
        %v5021 = vmul.u32 %v5016, %v5017
        %v5022 = vmul.u32 %v5016, %v5018
        %v5023 = vshll.u32 %v5020, 16
        %v5024 = vshrl.u32 %v5020, 16
        %v5025 = vshll.u32 %v5021, 16
        %v5026 = vshrl.u32 %v5021, 16
        %vm5027 = vc.u32 %v5019, %v5023
        %v5028 = vsel %vm5027, 1, 0
        %v5029 = vadd.s32 %v5019, %v5023
        %v5030 = vadd.s32 %v5022, %v5028
        %vm5031 = vc.u32 %v5029, %v5025
        %v5032 = vsel %vm5031, 1, 0
        %v5033 = vadd.s32 %v5029, %v5025
        %v5034 = vadd.s32 %v5030, %v5032
        %v5035 = vadd.s32 %v5034, %v5024
        %v5036 = vadd.s32 %v5035, %v5026
        %v5037 = vand.u32 %v5014, 65535
        %v5038 = vshrl.u32 %v5014, 16
        %v5039 = vand.u32 %v5009, 65535
        %v5040 = vshrl.u32 %v5009, 16
        %v5041 = vmul.u32 %v5037, %v5039
        %v5042 = vmul.u32 %v5037, %v5040
        %v5043 = vmul.u32 %v5038, %v5039
        %v5044 = vmul.u32 %v5038, %v5040
        %v5045 = vshll.u32 %v5042, 16
        %v5046 = vshrl.u32 %v5042, 16
        %v5047 = vshll.u32 %v5043, 16
        %v5048 = vshrl.u32 %v5043, 16
        %vm5049 = vc.u32 %v5041, %v5045
        %v5050 = vsel %vm5049, 1, 0
        %v5051 = vadd.s32 %v5041, %v5045
        %v5052 = vadd.s32 %v5044, %v5050
        %vm5053 = vc.u32 %v5051, %v5047
        %v5054 = vsel %vm5053, 1, 0
        %v5055 = vadd.s32 %v5051, %v5047
        %v5056 = vadd.s32 %v5052, %v5054
        %v5057 = vadd.s32 %v5056, %v5046
        %v5058 = vadd.s32 %v5057, %v5048
        %v5059 = vmul.u32 %v5014, %v5005
        %v5060 = vadd.s32 %v5036, %v5055
        %vm5061 = vc.u32 %v5036, %v5055
        %v5062 = vadd.s32 %v5058, 1
        %v5063 = vsel %vm5061, %v5062, %v5058
        %v5064 = vadd.s32 %v5059, %v5063
        %v5065 = vadd.s32 %v5064, 536870912
        %v5066 = vshrl.u32 %v5065, 30
        %v5067 = vshll.u32 %v5066, 30
        %v5068 = vsub.s32 %v5064, %v5067
        %vm5069 = vcmp.lt.s32.totalorder %v5068, 0
        %v5070 = vsub.s32 0, %v5068
        %v5071 = vsel %vm5069, %v5070, %v5068
        %v5072 = vclz %v5071
        %v5073 = vsub.s32 %v5072, 2
        %vm5074 = vcmp.gt.s32.totalorder 0, %v5073
        %v5075 = vsel %vm5074, 0, %v5073
        %v5076 = vsub.s32 32, %v5075
        %v5077 = vshll.u32 %v5068, %v5075
        %v5078 = vshrl.u32 %v5060, %v5076
        %v5079 = vor.u32 %v5077, %v5078
        %v5080 = vsub.s32 4294967266, %v5075
        %v5081 = vadd.s32 %v5080, 127
        %v5082 = vshll.u32 %v5081, 23
        %v5083 = vor.u32 4788187, %v5082
        %v5084 = vand.u32 2147483647, %v5083
        %v5086 = vcvt.s32.f32 %v5079
        %v5087 = vmul.f32 %v5086, %v5084
        %v5088 = vxor.u32 %v5087, 2147483648
        %v5089 = vsel %vm4968, %v5088, %v5087
        %v5090 = vsub.s32 4, %v5066
        %v5091 = vsel %vm4968, %v5090, %v5066
        %v5092 = vsel %vm4967, %v497, %v5089
        %v5093 = vsel %vm4967, 0, %v5091
        %v5094 = vmul.f32 %v5092, %v5092
        %v5095 = vmul.f32 %v5094, -0.001358992
        %v5096 = vadd.f32 %v5095, 0.041655596
        %v5097 = vmul.f32 %v5094, %v5096
        %v5098 = vadd.f32 %v5097, -0.4999988
        %v5099 = vmul.f32 %v5094, %v5098
        %v5100 = vadd.f32 1.0, %v5099
        %v5101 = vmul.f32 %v5092, %v5092
        %v5102 = vmul.f32 %v5101, -0.00019511016
        %v5103 = vadd.f32 %v5102, 0.008332121
        %v5104 = vmul.f32 %v5101, %v5103
        %v5105 = vadd.f32 %v5104, -0.16666654
        %v5106 = vmul.f32 %v5101, %v5105
        %v5107 = vadd.f32 %v5106, 1.0
        %v5108 = vmul.f32 %v5107, %v5092
        %vm5109 = vweird.f32 %v497
        %v5110 = vand.u32 %v5093, 3
        %vm5111 = vcmp.lt.s32.totalorder %v5110, 2
        %vm5112 = vcmp.eq.s32.totalorder %v5110, 0
        %v5113 = vxor.u32 %v5108, 2147483648
        %v5114 = vsel %vm5112, %v5100, %v5113
        %vm5115 = vcmp.eq.s32.totalorder %v5110, 2
        %v5116 = vxor.u32 %v5100, 2147483648
        %v5117 = vsel %vm5115, %v5116, %v5108
        %v5118 = vsel %vm5111, %v5114, %v5117
        %v5119 = vsel %vm5109, nan, %v5118
        %v5120 = vand.u32 2147483647, %v498
        %vm5121 = vcmp.le.f32.partialorder %v5120, 0.7853982
        %vm5122 = vcmp.lt.s32.totalorder %v498, 0
        %v5123 = vand.u32 %v498, 2139095040
        %v5124 = vshrl.u32 %v5123, 23
        %v5125 = vsub.s32 %v5124, 127
        %v5126 = vand.u32 2147483647, %v498
        %v5127 = vand.u32 %v5126, 8388607
        %v5128 = vor.u32 %v5127, 8388608
        %v5129 = vsub.s32 0, %v5128
        %v5130 = vadd.s32 %v5125, 1
        %vm5131 = vcmp.gt.s32.totalorder %v5130, 0
        %v5132 = vsel %vm5131, %v5130, 0
        %v5133 = vshrl.u32 %v5132, 5
        %v5134 = vand.u32 %v5132, 31
        %v5135 = vsub.s32 32, %v5134
        %v5136 = vshrl.u32 683565275, %v5135
        %v5137 = vshll.u32 683565275, %v5134
        %v5138 = vshrl.u32 2475754826, %v5135
        %v5139 = vor.u32 %v5137, %v5138
        %v5140 = vshll.u32 2475754826, %v5134
        %v5141 = vshrl.u32 2131351028, %v5135
        %v5142 = vor.u32 %v5140, %v5141
        %v5143 = vshll.u32 2131351028, %v5134
        %v5144 = vshrl.u32 2102212464, %v5135
        %v5145 = vor.u32 %v5143, %v5144
        %v5146 = vshll.u32 2102212464, %v5134
        %v5147 = vshrl.u32 920167782, %v5135
        %v5148 = vor.u32 %v5146, %v5147
        %v5149 = vshll.u32 920167782, %v5134
        %v5150 = vshrl.u32 1326507024, %v5135
        %v5151 = vor.u32 %v5149, %v5150
        %vm5152 = vcmp.lt.s32.totalorder %v5133, 1
        %vm5153 = vcmp.lt.s32.totalorder %v5133, 2
        %vm5154 = vcmp.lt.s32.totalorder %v5133, 3
        %vm5155 = vcmp.lt.s32.totalorder %v5133, 4
        %v5156 = vsel %vm5152, %v5136, %v5139
        %v5157 = vsel %vm5155, %v5145, 2102212464
        %v5158 = vsel %vm5154, %v5142, %v5157
        %v5159 = vsel %vm5153, %v5156, %v5158
        %v5160 = vsel %vm5152, %v5139, %v5142
        %v5161 = vsel %vm5155, %v5148, 920167782
        %v5162 = vsel %vm5154, %v5145, %v5161
        %v5163 = vsel %vm5153, %v5160, %v5162
        %v5164 = vsel %vm5152, %v5142, %v5145
        %v5165 = vsel %vm5155, %v5151, 1326507024
        %v5166 = vsel %vm5154, %v5148, %v5165
        %v5167 = vsel %vm5153, %v5164, %v5166
        %v5168 = vshll.u32 %v5128, 8
        %v5169 = vand.u32 %v5168, 65535
        %v5170 = vshrl.u32 %v5168, 16
        %v5171 = vand.u32 %v5167, 65535
        %v5172 = vshrl.u32 %v5167, 16
        %v5173 = vmul.u32 %v5169, %v5171
        %v5174 = vmul.u32 %v5169, %v5172
        %v5175 = vmul.u32 %v5170, %v5171
        %v5176 = vmul.u32 %v5170, %v5172
        %v5177 = vshll.u32 %v5174, 16
        %v5178 = vshrl.u32 %v5174, 16
        %v5179 = vshll.u32 %v5175, 16
        %v5180 = vshrl.u32 %v5175, 16
        %vm5181 = vc.u32 %v5173, %v5177
        %v5182 = vsel %vm5181, 1, 0
        %v5183 = vadd.s32 %v5173, %v5177
        %v5184 = vadd.s32 %v5176, %v5182
        %vm5185 = vc.u32 %v5183, %v5179
        %v5186 = vsel %vm5185, 1, 0
        %v5187 = vadd.s32 %v5183, %v5179
        %v5188 = vadd.s32 %v5184, %v5186
        %v5189 = vadd.s32 %v5188, %v5178
        %v5190 = vadd.s32 %v5189, %v5180
        %v5191 = vand.u32 %v5168, 65535
        %v5192 = vshrl.u32 %v5168, 16
        %v5193 = vand.u32 %v5163, 65535
        %v5194 = vshrl.u32 %v5163, 16
        %v5195 = vmul.u32 %v5191, %v5193
        %v5196 = vmul.u32 %v5191, %v5194
        %v5197 = vmul.u32 %v5192, %v5193
        %v5198 = vmul.u32 %v5192, %v5194
        %v5199 = vshll.u32 %v5196, 16
        %v5200 = vshrl.u32 %v5196, 16
        %v5201 = vshll.u32 %v5197, 16
        %v5202 = vshrl.u32 %v5197, 16
        %vm5203 = vc.u32 %v5195, %v5199
        %v5204 = vsel %vm5203, 1, 0
        %v5205 = vadd.s32 %v5195, %v5199
        %v5206 = vadd.s32 %v5198, %v5204
        %vm5207 = vc.u32 %v5205, %v5201
        %v5208 = vsel %vm5207, 1, 0
        %v5209 = vadd.s32 %v5205, %v5201
        %v5210 = vadd.s32 %v5206, %v5208
        %v5211 = vadd.s32 %v5210, %v5200
        %v5212 = vadd.s32 %v5211, %v5202
        %v5213 = vmul.u32 %v5168, %v5159
        %v5214 = vadd.s32 %v5190, %v5209
        %vm5215 = vc.u32 %v5190, %v5209
        %v5216 = vadd.s32 %v5212, 1
        %v5217 = vsel %vm5215, %v5216, %v5212
        %v5218 = vadd.s32 %v5213, %v5217
        %v5219 = vadd.s32 %v5218, 536870912
        %v5220 = vshrl.u32 %v5219, 30
        %v5221 = vshll.u32 %v5220, 30
        %v5222 = vsub.s32 %v5218, %v5221
        %vm5223 = vcmp.lt.s32.totalorder %v5222, 0
        %v5224 = vsub.s32 0, %v5222
        %v5225 = vsel %vm5223, %v5224, %v5222
        %v5226 = vclz %v5225
        %v5227 = vsub.s32 %v5226, 2
        %vm5228 = vcmp.gt.s32.totalorder 0, %v5227
        %v5229 = vsel %vm5228, 0, %v5227
        %v5230 = vsub.s32 32, %v5229
        %v5231 = vshll.u32 %v5222, %v5229
        %v5232 = vshrl.u32 %v5214, %v5230
        %v5233 = vor.u32 %v5231, %v5232
        %v5234 = vsub.s32 4294967266, %v5229
        %v5235 = vadd.s32 %v5234, 127
        %v5236 = vshll.u32 %v5235, 23
        %v5237 = vor.u32 4788187, %v5236
        %v5238 = vand.u32 2147483647, %v5237
        %v5240 = vcvt.s32.f32 %v5233
        %v5241 = vmul.f32 %v5240, %v5238
        %v5242 = vxor.u32 %v5241, 2147483648
        %v5243 = vsel %vm5122, %v5242, %v5241
        %v5244 = vsub.s32 4, %v5220
        %v5245 = vsel %vm5122, %v5244, %v5220
        %v5246 = vsel %vm5121, %v498, %v5243
        %v5247 = vsel %vm5121, 0, %v5245
        %v5248 = vmul.f32 %v5246, %v5246
        %v5249 = vmul.f32 %v5248, -0.001358992
        %v5250 = vadd.f32 %v5249, 0.041655596
        %v5251 = vmul.f32 %v5248, %v5250
        %v5252 = vadd.f32 %v5251, -0.4999988
        %v5253 = vmul.f32 %v5248, %v5252
        %v5254 = vadd.f32 1.0, %v5253
        %v5255 = vmul.f32 %v5246, %v5246
        %v5256 = vmul.f32 %v5255, -0.00019511016
        %v5257 = vadd.f32 %v5256, 0.008332121
        %v5258 = vmul.f32 %v5255, %v5257
        %v5259 = vadd.f32 %v5258, -0.16666654
        %v5260 = vmul.f32 %v5255, %v5259
        %v5261 = vadd.f32 %v5260, 1.0
        %v5262 = vmul.f32 %v5261, %v5246
        %vm5263 = vweird.f32 %v498
        %v5264 = vand.u32 %v5247, 3
        %vm5265 = vcmp.lt.s32.totalorder %v5264, 2
        %vm5266 = vcmp.eq.s32.totalorder %v5264, 0
        %v5267 = vxor.u32 %v5262, 2147483648
        %v5268 = vsel %vm5266, %v5254, %v5267
        %vm5269 = vcmp.eq.s32.totalorder %v5264, 2
        %v5270 = vxor.u32 %v5254, 2147483648
        %v5271 = vsel %vm5269, %v5270, %v5262
        %v5272 = vsel %vm5265, %v5268, %v5271
        %v5273 = vsel %vm5263, nan, %v5272
        %v5274 = vand.u32 2147483647, %v499
        %vm5275 = vcmp.le.f32.partialorder %v5274, 0.7853982
        %vm5276 = vcmp.lt.s32.totalorder %v499, 0
        %v5277 = vand.u32 %v499, 2139095040
        %v5278 = vshrl.u32 %v5277, 23
        %v5279 = vsub.s32 %v5278, 127
        %v5280 = vand.u32 2147483647, %v499
        %v5281 = vand.u32 %v5280, 8388607
        %v5282 = vor.u32 %v5281, 8388608
        %v5283 = vsub.s32 0, %v5282
        %v5284 = vadd.s32 %v5279, 1
        %vm5285 = vcmp.gt.s32.totalorder %v5284, 0
        %v5286 = vsel %vm5285, %v5284, 0
        %v5287 = vshrl.u32 %v5286, 5
        %v5288 = vand.u32 %v5286, 31
        %v5289 = vsub.s32 32, %v5288
        %v5290 = vshrl.u32 683565275, %v5289
        %v5291 = vshll.u32 683565275, %v5288
        %v5292 = vshrl.u32 2475754826, %v5289
        %v5293 = vor.u32 %v5291, %v5292
        %v5294 = vshll.u32 2475754826, %v5288
        %v5295 = vshrl.u32 2131351028, %v5289
        %v5296 = vor.u32 %v5294, %v5295
        %v5297 = vshll.u32 2131351028, %v5288
        %v5298 = vshrl.u32 2102212464, %v5289
        %v5299 = vor.u32 %v5297, %v5298
        %v5300 = vshll.u32 2102212464, %v5288
        %v5301 = vshrl.u32 920167782, %v5289
        %v5302 = vor.u32 %v5300, %v5301
        %v5303 = vshll.u32 920167782, %v5288
        %v5304 = vshrl.u32 1326507024, %v5289
        %v5305 = vor.u32 %v5303, %v5304
        %vm5306 = vcmp.lt.s32.totalorder %v5287, 1
        %vm5307 = vcmp.lt.s32.totalorder %v5287, 2
        %vm5308 = vcmp.lt.s32.totalorder %v5287, 3
        %vm5309 = vcmp.lt.s32.totalorder %v5287, 4
        %v5310 = vsel %vm5306, %v5290, %v5293
        %v5311 = vsel %vm5309, %v5299, 2102212464
        %v5312 = vsel %vm5308, %v5296, %v5311
        %v5313 = vsel %vm5307, %v5310, %v5312
        %v5314 = vsel %vm5306, %v5293, %v5296
        %v5315 = vsel %vm5309, %v5302, 920167782
        %v5316 = vsel %vm5308, %v5299, %v5315
        %v5317 = vsel %vm5307, %v5314, %v5316
        %v5318 = vsel %vm5306, %v5296, %v5299
        %v5319 = vsel %vm5309, %v5305, 1326507024
        %v5320 = vsel %vm5308, %v5302, %v5319
        %v5321 = vsel %vm5307, %v5318, %v5320
        %v5322 = vshll.u32 %v5282, 8
        %v5323 = vand.u32 %v5322, 65535
        %v5324 = vshrl.u32 %v5322, 16
        %v5325 = vand.u32 %v5321, 65535
        %v5326 = vshrl.u32 %v5321, 16
        %v5327 = vmul.u32 %v5323, %v5325
        %v5328 = vmul.u32 %v5323, %v5326
        %v5329 = vmul.u32 %v5324, %v5325
        %v5330 = vmul.u32 %v5324, %v5326
        %v5331 = vshll.u32 %v5328, 16
        %v5332 = vshrl.u32 %v5328, 16
        %v5333 = vshll.u32 %v5329, 16
        %v5334 = vshrl.u32 %v5329, 16
        %vm5335 = vc.u32 %v5327, %v5331
        %v5336 = vsel %vm5335, 1, 0
        %v5337 = vadd.s32 %v5327, %v5331
        %v5338 = vadd.s32 %v5330, %v5336
        %vm5339 = vc.u32 %v5337, %v5333
        %v5340 = vsel %vm5339, 1, 0
        %v5341 = vadd.s32 %v5337, %v5333
        %v5342 = vadd.s32 %v5338, %v5340
        %v5343 = vadd.s32 %v5342, %v5332
        %v5344 = vadd.s32 %v5343, %v5334
        %v5345 = vand.u32 %v5322, 65535
        %v5346 = vshrl.u32 %v5322, 16
        %v5347 = vand.u32 %v5317, 65535
        %v5348 = vshrl.u32 %v5317, 16
        %v5349 = vmul.u32 %v5345, %v5347
        %v5350 = vmul.u32 %v5345, %v5348
        %v5351 = vmul.u32 %v5346, %v5347
        %v5352 = vmul.u32 %v5346, %v5348
        %v5353 = vshll.u32 %v5350, 16
        %v5354 = vshrl.u32 %v5350, 16
        %v5355 = vshll.u32 %v5351, 16
        %v5356 = vshrl.u32 %v5351, 16
        %vm5357 = vc.u32 %v5349, %v5353
        %v5358 = vsel %vm5357, 1, 0
        %v5359 = vadd.s32 %v5349, %v5353
        %v5360 = vadd.s32 %v5352, %v5358
        %vm5361 = vc.u32 %v5359, %v5355
        %v5362 = vsel %vm5361, 1, 0
        %v5363 = vadd.s32 %v5359, %v5355
        %v5364 = vadd.s32 %v5360, %v5362
        %v5365 = vadd.s32 %v5364, %v5354
        %v5366 = vadd.s32 %v5365, %v5356
        %v5367 = vmul.u32 %v5322, %v5313
        %v5368 = vadd.s32 %v5344, %v5363
        %vm5369 = vc.u32 %v5344, %v5363
        %v5370 = vadd.s32 %v5366, 1
        %v5371 = vsel %vm5369, %v5370, %v5366
        %v5372 = vadd.s32 %v5367, %v5371
        %v5373 = vadd.s32 %v5372, 536870912
        %v5374 = vshrl.u32 %v5373, 30
        %v5375 = vshll.u32 %v5374, 30
        %v5376 = vsub.s32 %v5372, %v5375
        %vm5377 = vcmp.lt.s32.totalorder %v5376, 0
        %v5378 = vsub.s32 0, %v5376
        %v5379 = vsel %vm5377, %v5378, %v5376
        %v5380 = vclz %v5379
        %v5381 = vsub.s32 %v5380, 2
        %vm5382 = vcmp.gt.s32.totalorder 0, %v5381
        %v5383 = vsel %vm5382, 0, %v5381
        %v5384 = vsub.s32 32, %v5383
        %v5385 = vshll.u32 %v5376, %v5383
        %v5386 = vshrl.u32 %v5368, %v5384
        %v5387 = vor.u32 %v5385, %v5386
        %v5388 = vsub.s32 4294967266, %v5383
        %v5389 = vadd.s32 %v5388, 127
        %v5390 = vshll.u32 %v5389, 23
        %v5391 = vor.u32 4788187, %v5390
        %v5392 = vand.u32 2147483647, %v5391
        %v5394 = vcvt.s32.f32 %v5387
        %v5395 = vmul.f32 %v5394, %v5392
        %v5396 = vxor.u32 %v5395, 2147483648
        %v5397 = vsel %vm5276, %v5396, %v5395
        %v5398 = vsub.s32 4, %v5374
        %v5399 = vsel %vm5276, %v5398, %v5374
        %v5400 = vsel %vm5275, %v499, %v5397
        %v5401 = vsel %vm5275, 0, %v5399
        %v5402 = vmul.f32 %v5400, %v5400
        %v5403 = vmul.f32 %v5402, -0.001358992
        %v5404 = vadd.f32 %v5403, 0.041655596
        %v5405 = vmul.f32 %v5402, %v5404
        %v5406 = vadd.f32 %v5405, -0.4999988
        %v5407 = vmul.f32 %v5402, %v5406
        %v5408 = vadd.f32 1.0, %v5407
        %v5409 = vmul.f32 %v5400, %v5400
        %v5410 = vmul.f32 %v5409, -0.00019511016
        %v5411 = vadd.f32 %v5410, 0.008332121
        %v5412 = vmul.f32 %v5409, %v5411
        %v5413 = vadd.f32 %v5412, -0.16666654
        %v5414 = vmul.f32 %v5409, %v5413
        %v5415 = vadd.f32 %v5414, 1.0
        %v5416 = vmul.f32 %v5415, %v5400
        %vm5417 = vweird.f32 %v499
        %v5418 = vand.u32 %v5401, 3
        %vm5419 = vcmp.lt.s32.totalorder %v5418, 2
        %vm5420 = vcmp.eq.s32.totalorder %v5418, 0
        %v5421 = vxor.u32 %v5416, 2147483648
        %v5422 = vsel %vm5420, %v5408, %v5421
        %vm5423 = vcmp.eq.s32.totalorder %v5418, 2
        %v5424 = vxor.u32 %v5408, 2147483648
        %v5425 = vsel %vm5423, %v5424, %v5416
        %v5426 = vsel %vm5419, %v5422, %v5425
        %v5427 = vsel %vm5417, nan, %v5426
        %v5428 = vstv %s464
        %v5429 = vmul.f32 %v5428, %v653
        %v5430 = vmul.f32 %v5428, %v807
        %v5431 = vmul.f32 %v5428, %v961
        %v5432 = vmul.f32 %v5428, %v1115
        %v5433 = vmul.f32 %v5428, %v1269
        %v5434 = vmul.f32 %v5428, %v1423
        %v5435 = vmul.f32 %v5428, %v1577
        %v5436 = vmul.f32 %v5428, %v1731
        %v5437 = vmul.f32 %v5428, %v1885
        %v5438 = vmul.f32 %v5428, %v2039
        %v5439 = vmul.f32 %v5428, %v2193
        %v5440 = vmul.f32 %v5428, %v2347
        %v5441 = vmul.f32 %v5428, %v2501
        %v5442 = vmul.f32 %v5428, %v2655
        %v5443 = vmul.f32 %v5428, %v2809
        %v5444 = vmul.f32 %v5428, %v2963
        %v5445 = vmul.f32 %v5428, %v3117
        %v5446 = vmul.f32 %v5428, %v3271
        %v5447 = vmul.f32 %v5428, %v3425
        %v5448 = vmul.f32 %v5428, %v3579
        %v5449 = vmul.f32 %v5428, %v3733
        %v5450 = vmul.f32 %v5428, %v3887
        %v5451 = vmul.f32 %v5428, %v4041
        %v5452 = vmul.f32 %v5428, %v4195
        %v5453 = vmul.f32 %v5428, %v4349
        %v5454 = vmul.f32 %v5428, %v4503
        %v5455 = vmul.f32 %v5428, %v4657
        %v5456 = vmul.f32 %v5428, %v4811
        %v5457 = vmul.f32 %v5428, %v4965
        %v5458 = vmul.f32 %v5428, %v5119
        %v5459 = vmul.f32 %v5428, %v5273
        %v5460 = vmul.f32 %v5428, %v5427
        %v5461 = vstv %s465
        %v5462 = vmul.f32 %v5461, %v431
        %v5463 = vmul.f32 %v5461, %v432
        %v5464 = vmul.f32 %v5461, %v433
        %v5465 = vmul.f32 %v5461, %v434
        %v5466 = vmul.f32 %v5461, %v435
        %v5467 = vmul.f32 %v5461, %v436
        %v5468 = vmul.f32 %v5461, %v437
        %v5469 = vmul.f32 %v5461, %v438
        %v5470 = vmul.f32 %v5461, %v439
        %v5471 = vmul.f32 %v5461, %v440
        %v5472 = vmul.f32 %v5461, %v441
        %v5473 = vmul.f32 %v5461, %v442
        %v5474 = vmul.f32 %v5461, %v443
        %v5475 = vmul.f32 %v5461, %v444
        %v5476 = vmul.f32 %v5461, %v445
        %v5477 = vmul.f32 %v5461, %v446
        %v5478 = vmul.f32 %v5461, %v447
        %v5479 = vmul.f32 %v5461, %v448
        %v5480 = vmul.f32 %v5461, %v449
        %v5481 = vmul.f32 %v5461, %v450
        %v5482 = vmul.f32 %v5461, %v451
        %v5483 = vmul.f32 %v5461, %v452
        %v5484 = vmul.f32 %v5461, %v453
        %v5485 = vmul.f32 %v5461, %v454
        %v5486 = vmul.f32 %v5461, %v455
        %v5487 = vmul.f32 %v5461, %v456
        %v5488 = vmul.f32 %v5461, %v457
        %v5489 = vmul.f32 %v5461, %v458
        %v5490 = vmul.f32 %v5461, %v459
        %v5491 = vmul.f32 %v5461, %v460
        %v5492 = vmul.f32 %v5461, %v461
        %v5493 = vmul.f32 %v5461, %v462
        %v5494 = vadd.f32 %v5429, %v5462
        %v5495 = vadd.f32 %v5430, %v5463
        %v5496 = vadd.f32 %v5431, %v5464
        %v5497 = vadd.f32 %v5432, %v5465
        %v5498 = vadd.f32 %v5433, %v5466
        %v5499 = vadd.f32 %v5434, %v5467
        %v5500 = vadd.f32 %v5435, %v5468
        %v5501 = vadd.f32 %v5436, %v5469
        %v5502 = vadd.f32 %v5437, %v5470
        %v5503 = vadd.f32 %v5438, %v5471
        %v5504 = vadd.f32 %v5439, %v5472
        %v5505 = vadd.f32 %v5440, %v5473
        %v5506 = vadd.f32 %v5441, %v5474
        %v5507 = vadd.f32 %v5442, %v5475
        %v5508 = vadd.f32 %v5443, %v5476
        %v5509 = vadd.f32 %v5444, %v5477
        %v5510 = vadd.f32 %v5445, %v5478
        %v5511 = vadd.f32 %v5446, %v5479
        %v5512 = vadd.f32 %v5447, %v5480
        %v5513 = vadd.f32 %v5448, %v5481
        %v5514 = vadd.f32 %v5449, %v5482
        %v5515 = vadd.f32 %v5450, %v5483
        %v5516 = vadd.f32 %v5451, %v5484
        %v5517 = vadd.f32 %v5452, %v5485
        %v5518 = vadd.f32 %v5453, %v5486
        %v5519 = vadd.f32 %v5454, %v5487
        %v5520 = vadd.f32 %v5455, %v5488
        %v5521 = vadd.f32 %v5456, %v5489
        %v5522 = vadd.f32 %v5457, %v5490
        %v5523 = vadd.f32 %v5458, %v5491
        %v5524 = vadd.f32 %v5459, %v5492
        %v5525 = vadd.f32 %v5460, %v5493
        %v5526 = vstv %s466
        %v5527 = vadd.f32 %v5494, %v5526
        %v5528 = vadd.f32 %v5495, %v5526
        %v5529 = vadd.f32 %v5496, %v5526
        %v5530 = vadd.f32 %v5497, %v5526
        %v5531 = vadd.f32 %v5498, %v5526
        %v5532 = vadd.f32 %v5499, %v5526
        %v5533 = vadd.f32 %v5500, %v5526
        %v5534 = vadd.f32 %v5501, %v5526
        %v5535 = vadd.f32 %v5502, %v5526
        %v5536 = vadd.f32 %v5503, %v5526
        %v5537 = vadd.f32 %v5504, %v5526
        %v5538 = vadd.f32 %v5505, %v5526
        %v5539 = vadd.f32 %v5506, %v5526
        %v5540 = vadd.f32 %v5507, %v5526
        %v5541 = vadd.f32 %v5508, %v5526
        %v5542 = vadd.f32 %v5509, %v5526
        %v5543 = vadd.f32 %v5510, %v5526
        %v5544 = vadd.f32 %v5511, %v5526
        %v5545 = vadd.f32 %v5512, %v5526
        %v5546 = vadd.f32 %v5513, %v5526
        %v5547 = vadd.f32 %v5514, %v5526
        %v5548 = vadd.f32 %v5515, %v5526
        %v5549 = vadd.f32 %v5516, %v5526
        %v5550 = vadd.f32 %v5517, %v5526
        %v5551 = vadd.f32 %v5518, %v5526
        %v5552 = vadd.f32 %v5519, %v5526
        %v5553 = vadd.f32 %v5520, %v5526
        %v5554 = vadd.f32 %v5521, %v5526
        %v5555 = vadd.f32 %v5522, %v5526
        %v5556 = vadd.f32 %v5523, %v5526
        %v5557 = vadd.f32 %v5524, %v5526
        %v5558 = vadd.f32 %v5525, %v5526
        %v5559 = vmul.f32 %v5527, 1.442695
        %v5560 = vpow.pop %v5559
        %v5561 = vmul.f32 %v5528, 1.442695
        %v5562 = vpow.pop %v5561
        %v5563 = vmul.f32 %v5529, 1.442695
        %v5564 = vpow.pop %v5563
        %v5565 = vmul.f32 %v5530, 1.442695
        %v5566 = vpow.pop %v5565
        %v5567 = vmul.f32 %v5531, 1.442695
        %v5568 = vpow.pop %v5567
        %v5569 = vmul.f32 %v5532, 1.442695
        %v5570 = vpow.pop %v5569
        %v5571 = vmul.f32 %v5533, 1.442695
        %v5572 = vpow.pop %v5571
        %v5573 = vmul.f32 %v5534, 1.442695
        %v5574 = vpow.pop %v5573
        %v5575 = vmul.f32 %v5535, 1.442695
        %v5576 = vpow.pop %v5575
        %v5577 = vmul.f32 %v5536, 1.442695
        %v5578 = vpow.pop %v5577
        %v5579 = vmul.f32 %v5537, 1.442695
        %v5580 = vpow.pop %v5579
        %v5581 = vmul.f32 %v5538, 1.442695
        %v5582 = vpow.pop %v5581
        %v5583 = vmul.f32 %v5539, 1.442695
        %v5584 = vpow.pop %v5583
        %v5585 = vmul.f32 %v5540, 1.442695
        %v5586 = vpow.pop %v5585
        %v5587 = vmul.f32 %v5541, 1.442695
        %v5588 = vpow.pop %v5587
        %v5589 = vmul.f32 %v5542, 1.442695
        %v5590 = vpow.pop %v5589
        %v5591 = vmul.f32 %v5543, 1.442695
        %v5592 = vpow.pop %v5591
        %v5593 = vmul.f32 %v5544, 1.442695
        %v5594 = vpow.pop %v5593
        %v5595 = vmul.f32 %v5545, 1.442695
        %v5596 = vpow.pop %v5595
        %v5597 = vmul.f32 %v5546, 1.442695
        %v5598 = vpow.pop %v5597
        %v5599 = vmul.f32 %v5547, 1.442695
        %v5600 = vpow.pop %v5599
        %v5601 = vmul.f32 %v5548, 1.442695
        %v5602 = vpow.pop %v5601
        %v5603 = vmul.f32 %v5549, 1.442695
        %v5604 = vpow.pop %v5603
        %v5605 = vmul.f32 %v5550, 1.442695
        %v5606 = vpow.pop %v5605
        %v5607 = vmul.f32 %v5551, 1.442695
        %v5608 = vpow.pop %v5607
        %v5609 = vmul.f32 %v5552, 1.442695
        %v5610 = vpow.pop %v5609
        %v5611 = vmul.f32 %v5553, 1.442695
        %v5612 = vpow.pop %v5611
        %v5613 = vmul.f32 %v5554, 1.442695
        %v5614 = vpow.pop %v5613
        %v5615 = vmul.f32 %v5555, 1.442695
        %v5616 = vpow.pop %v5615
        %v5617 = vmul.f32 %v5556, 1.442695
        %v5618 = vpow.pop %v5617
        %v5619 = vmul.f32 %v5557, 1.442695
        %v5620 = vpow.pop %v5619
        %v5621 = vmul.f32 %v5558, 1.442695
        %v5622 = vpow.pop %v5621
        %5623 = vst [vmem:[%s210] sm:$0xff] %v5560
        %5624 = vst [vmem:[%s210 + $0x8] sm:$0xff] %v5562
        %5625 = vst [vmem:[%s210 + $0x10] sm:$0xff] %v5564
        %5626 = vst [vmem:[%s210 + $0x18] sm:$0xff] %v5566
        %5627 = vst [vmem:[%s210 + $0x20] sm:$0xff] %v5568
        %5628 = vst [vmem:[%s210 + $0x28] sm:$0xff] %v5570
        %5629 = vst [vmem:[%s210 + $0x30] sm:$0xff] %v5572
        %5630 = vst [vmem:[%s210 + $0x38] sm:$0xff] %v5574
        %5631 = vst [vmem:[%s210 + $0x40] sm:$0xff] %v5576
        %5632 = vst [vmem:[%s210 + $0x48] sm:$0xff] %v5578
        %5633 = vst [vmem:[%s210 + $0x50] sm:$0xff] %v5580
        %5634 = vst [vmem:[%s210 + $0x58] sm:$0xff] %v5582
        %5635 = vst [vmem:[%s210 + $0x60] sm:$0xff] %v5584
        %5636 = vst [vmem:[%s210 + $0x68] sm:$0xff] %v5586
        %5637 = vst [vmem:[%s210 + $0x70] sm:$0xff] %v5588
        %5638 = vst [vmem:[%s210 + $0x78] sm:$0xff] %v5590
        %5639 = vst [vmem:[%s210 + $0x80] sm:$0xff] %v5592
        %5640 = vst [vmem:[%s210 + $0x88] sm:$0xff] %v5594
        %5641 = vst [vmem:[%s210 + $0x90] sm:$0xff] %v5596
        %5642 = vst [vmem:[%s210 + $0x98] sm:$0xff] %v5598
        %5643 = vst [vmem:[%s210 + $0xa0] sm:$0xff] %v5600
        %5644 = vst [vmem:[%s210 + $0xa8] sm:$0xff] %v5602
        %5645 = vst [vmem:[%s210 + $0xb0] sm:$0xff] %v5604
        %5646 = vst [vmem:[%s210 + $0xb8] sm:$0xff] %v5606
        %5647 = vst [vmem:[%s210 + $0xc0] sm:$0xff] %v5608
        %5648 = vst [vmem:[%s210 + $0xc8] sm:$0xff] %v5610
        %5649 = vst [vmem:[%s210 + $0xd0] sm:$0xff] %v5612
        %5650 = vst [vmem:[%s210 + $0xd8] sm:$0xff] %v5614
        %5651 = vst [vmem:[%s210 + $0xe0] sm:$0xff] %v5616
        %5652 = vst [vmem:[%s210 + $0xe8] sm:$0xff] %v5618
        %5653 = vst [vmem:[%s210 + $0xf0] sm:$0xff] %v5620
        %5654 = vst [vmem:[%s210 + $0xf8] sm:$0xff] %v5622
        %s5655 = sand.u32 %s103, 1
        %s5656 = scalar_lea.sflag [#allocation6], %s5655
        %s5657 = sand.u32 %s103, 1
        %s5658 = smul.addr %s5657, 256
        %s5659 = scalar_lea.vmem [#allocation9], %s5658
        // Predicated region
        $region37: #{tpu_custom_call.1} parent=27 // pred_check
          %p5660 = pneg %p113
        $region38: #{tpu_custom_call.1} parent=27 // pred_check_branch
          %5662 = sbr.rel (%p5660) target = $region40
        $region39: #{tpu_custom_call.1} parent=27 // pred_region
          %s5663 = smul.u32 16, %s33
          %s5664 = smul.u32 2, %s34
          %5666 = vsyncadd %s5656, 0
          %s5667 = smul.addr %s5663, 2
          %s5668 = sadd.s32 %s5664, %s5667
          %s5669 = smul.addr %s5668, 8
          %s5670 = scalar_lea.hbm %s3, %s5669
          %s5671 = sshll.u32 %s5659, 4
          %s5672 = int_to_ptr.vmem [resolvable:$true] %s5671
          %s5673 = sshll.u32 %s5670, 4
          %s5674 = int_to_ptr.hbm [resolvable:$true] %s5673
          %5679 = dma.vmem_to_hbm [thread:$0]  %s5672, 4096, %s5674, %s5656, 256, 256, 16
        $region40: #{tpu_custom_call.1} parent=27 // pred_fallthru
          _
      $region28: #{tpu_custom_call.1} parent=5 // pred_fallthru
        _
      %p5680 = scmp.le.s32.totalorder 2, %s24
      // Predicated region
      $region41: #{tpu_custom_call.1} parent=5 // pred_check
        %p5681 = pneg %p5680
      $region42: #{tpu_custom_call.1} parent=5 // pred_check_branch
        %5683 = sbr.rel (%p5681) target = $region44
      $region43: #{tpu_custom_call.1} parent=5 // pred_region
        %s5684 = ssub.s32 %s24, 2
        // Predicated region
        $region45: #{tpu_custom_call.1} parent=43 // pred_check
          %p5685 = pneg %p119
        $region46: #{tpu_custom_call.1} parent=43 // pred_check_branch
          %5687 = sbr.rel (%p5685) target = $region48
        $region47: #{tpu_custom_call.1} parent=43 // pred_region
          %s5688 = sand.u32 %s104, 1
          %s5689 = scalar_lea.sflag [#allocation6], %s5688
          %s5690 = sand.u32 %s104, 1
          %s5691 = smul.addr %s5690, 256
          %s5692 = scalar_lea.vmem [#allocation9], %s5691
          %5694 = dma.done %s5689, 4096
        $region48: #{tpu_custom_call.1} parent=43 // pred_fallthru
          _
      $region44: #{tpu_custom_call.1} parent=5 // pred_fallthru
        _
    $region6: #{tpu_custom_call.1} parent=1 // loop_footer
      %s28 = sadd.s32 1, %s24
    $region7: #{tpu_custom_call.1} parent=1 // loop_footer_branch
      %23 = sbr.rel target = $region3
    $region8: #{tpu_custom_call.1} parent=1 // loop_exit
      _
    %5695 = vsyncpa [#allocation5], 1
    %s5696 = scalar_lea.sflag [#allocation5], 1
    %5697 = vsyncpa %s5696, 1
    %5698 = vsyncpa [#allocation8], 1
    %5699 = vsyncpa [#allocation6], 1
    %s5700 = scalar_lea.sflag [#allocation6], 1
    %5701 = vsyncpa %s5700, 1

</llo_original>
